<compile_context>
chip_gen: v6e
topology: v6e:2x2x1
jax: 0.10.0
libtpu: 0.0.40
codegen_flags: <defaults>
</compile_context>

<pallas_src>
import jax
import jax.numpy as jnp
from jax import lax
from jax.experimental import pallas as pl
from jax.experimental.pallas import tpu as pltpu


# Flat-spatial geometry.  After conv1_1's 'same' padding the image is 40x40 and
# every later tensor lives in a flat domain with row stride _R = 40; "valid"
# pixels keep their flat position, boundary columns hold harmless garbage that
# is never read by a valid downstream position.
_R   = 40            # flat row stride (38 + 2*pad)
_NP  = 1600          # padded input length                    (40*40)
_N1  = 1518          # conv1_1 output span   (max flat idx 37*40+37, +1)
_N2  = 1436          # conv1_2 output span   (max flat idx 35*40+35, +1)
_LM1 = 1395          # pool1 span            (conv2_1 needs idx <= 1230+164)
_N3  = 1231          # conv2_1 output span   (max anchor 2*15*40+2*15, +1)
_LM2 = 1149          # pool2 span            (max anchor 4*7*40+4*7, +1)


# ----------------------------------------------------------------------------
# Fused kernel: conv1_1(+BN) -> conv1_2+ReLU+pool -> conv2_1+ReLU+pool ->
#               flatten -> fc1+ReLU -> (Dropout: eval identity) -> fc2 -> LogSoftmax
# ----------------------------------------------------------------------------
def _switchnet_kernel(x_ref, w1_ref, b1_ref, w2_ref, b2_ref, w3_ref, b3_ref,
                      sel_ref, wf1_ref, bf1_ref, wf2_ref, bf2_ref,
                      o_ref, feat_ref):
    tb = x_ref.shape[0]

    def conv(h, w_ref, b_ref, n_out, stride, relu):
        # h: (Cin, L) bf16 flat activations.  Build the im2col patch matrix by
        # concatenating the 9 shifted slices along the contraction axis and do a
        # single K = 9*Cin matmul (accumulation stays inside the MXU).
        taps = [h[:, stride * (dy * _R + dx): stride * (dy * _R + dx) + n_out]
                for dy in range(3) for dx in range(3)]
        p = jnp.concatenate(taps, axis=0)                       # (9*Cin, n_out)
        acc = jnp.dot(w_ref[...], p, preferred_element_type=jnp.float32)
        acc = acc + b_ref[...]                                  # (Cout, n_out) f32
        if relu:
            acc = jnp.maximum(acc, 0.0)
        return acc.astype(jnp.bfloat16)

    def pool(h, n_out, stride):
        # MaxPool2d(2, 2) as shift+max in the strided flat domain; the pooled
        # grid simply keeps living at stride 2*stride (no compaction needed).
        return jnp.maximum(
            jnp.maximum(h[:, 0:n_out], h[:, stride:stride + n_out]),
            jnp.maximum(h[:, stride * _R:stride * _R + n_out],
                        h[:, stride * _R + stride:stride * _R + stride + n_out]))

    def one_image(i, carry):
        xp = x_ref[i]                                           # (16, 1600) bf16
        h1 = conv(xp, w1_ref, b1_ref, _N1, 1, relu=False)       # conv1_1 (+BN folded)
        h2 = conv(h1, w2_ref, b2_ref, _N2, 1, relu=True)        # conv1_2 + ReLU
        m1 = pool(h2, _LM1, 1)                                  # 2x2 pool -> stride 2
        h3 = conv(m1, w3_ref, b3_ref, _N3, 2, relu=True)        # conv2_1 + ReLU
        m2 = pool(h3, _LM2, 2)                                  # 2x2 pool -> stride 4
        # Compact the 64 valid 8x8 anchors into a dense, lane-padded (32, 128)
        # feature tile with a 0/1 selection matmul (lane gather on the MXU).
        f = jnp.dot(m2, sel_ref[...], preferred_element_type=jnp.float32)
        feat_ref[i] = f.astype(jnp.bfloat16)
        return carry

    lax.fori_loop(0, tb, one_image, 0)

    # FC head over the whole batch tile.  (Garbage rows of a partial last block
    # flow through exp/log and are discarded by Pallas' partial-block masking.)
    feats = feat_ref[...].reshape(tb, 32 * 128)                 # (TB, 4096) bf16
    z = jnp.dot(feats, wf1_ref[...], preferred_element_type=jnp.float32)
    z = jnp.maximum(z + bf1_ref[...], 0.0)                      # fc1 + ReLU
    # TODO(synk): Dropout(p=0.2) uses PyTorch training-mode RNG; identity here (eval).
    z = jnp.dot(z.astype(jnp.bfloat16), wf2_ref[...],
                preferred_element_type=jnp.float32) + bf2_ref[...]   # fc2
    m = jnp.max(z, axis=-1, keepdims=True)                      # LogSoftmax(dim=1)
    z = (z - m) - jnp.log(jnp.sum(jnp.exp(z - m), axis=-1, keepdims=True))
    o_ref[...] = z


def _full_spec(arr):
    nd = arr.ndim
    return pl.BlockSpec(arr.shape, lambda i, _nd=nd: (0,) * _nd)


def switchnet_pallas(xp, q, tb):
    n = xp.shape[0]
    return pl.pallas_call(
        _switchnet_kernel,
        out_shape=jax.ShapeDtypeStruct((n, 2), jnp.float32),
        grid=(pl.cdiv(n, tb),),
        in_specs=[
            pl.BlockSpec((tb, 16, _NP), lambda i: (i, 0, 0)),
            _full_spec(q["w1"]), _full_spec(q["b1"]),
            _full_spec(q["w2"]), _full_spec(q["b2"]),
            _full_spec(q["w3"]), _full_spec(q["b3"]),
            _full_spec(q["sel"]),
            _full_spec(q["wfc1"]), _full_spec(q["bfc1"]),
            _full_spec(q["wfc2"]), _full_spec(q["bfc2"]),
        ],
        out_specs=pl.BlockSpec((tb, 2), lambda i: (i, 0)),
        scratch_shapes=[pltpu.VMEM((tb, 32, 128), jnp.bfloat16)],
        compiler_params=pltpu.CompilerParams(
            dimension_semantics=("parallel",),
            vmem_limit_bytes=32 * 1024 * 1024),
    )(xp, q["w1"], q["b1"], q["w2"], q["b2"], q["w3"], q["b3"],
      q["sel"], q["wfc1"], q["bfc1"], q["wfc2"], q["bfc2"])


# ----------------------------------------------------------------------------
# Parameter setup (plain JAX, init-time only)
# ----------------------------------------------------------------------------
def init_params(key):
    ks = jax.random.split(key, 14)

    def nrm(k, shape, std=0.1):
        return std * jax.random.normal(k, shape, dtype=jnp.float32)

    p = {}
    p["w_conv1_1"] = nrm(ks[0], (16, 3, 3, 3))        # OIHW
    p["b_conv1_1"] = nrm(ks[1], (16,))
    # BatchNorm2d(16) -- eval-mode (running) statistics
    p["bn_gamma"] = 1.0 + nrm(ks[2], (16,))
    p["bn_beta"] = nrm(ks[3], (16,))
    p["bn_mean"] = nrm(ks[4], (16,))
    p["bn_var"] = 1.0 + jnp.abs(nrm(ks[5], (16,)))
    p["w_conv1_2"] = nrm(ks[6], (16, 16, 3, 3))
    p["b_conv1_2"] = nrm(ks[7], (16,))
    p["w_conv2_1"] = nrm(ks[8], (32, 16, 3, 3))
    p["b_conv2_1"] = nrm(ks[9], (32,))
    p["w_fc1"] = nrm(ks[10], (64, 32 * 8 * 8))        # PyTorch (out, in)
    p["b_fc1"] = nrm(ks[11], (64,))
    p["w_fc2"] = nrm(ks[12], (2, 64))
    p["b_fc2"] = nrm(ks[13], (2,))
    return p


def _conv_to_mat(w_oihw, cin_pad=None):
    """(Cout, Cin, 3, 3) -> (Cout, 9*Cin) with column index (ky*3+kx)*Cin + ci."""
    cout, cin, kh, kw = w_oihw.shape
    if cin_pad is not None and cin_pad > cin:
        w_oihw = jnp.pad(w_oihw, ((0, 0), (0, cin_pad - cin), (0, 0), (0, 0)))
        cin = cin_pad
    return jnp.transpose(w_oihw, (0, 2, 3, 1)).reshape(cout, kh * kw * cin)


def prepare_params(p):
    """Fold eval-mode BN into conv1_1 and repack all weights for the kernel."""
    q = {}
    s = p["bn_gamma"] / jnp.sqrt(p["bn_var"] + 1e-5)                  # (16,)
    w1 = p["w_conv1_1"] * s[:, None, None, None]
    b1 = (p["b_conv1_1"] - p["bn_mean"]) * s + p["bn_beta"]
    q["w1"] = _conv_to_mat(w1, cin_pad=16).astype(jnp.bfloat16)       # (16, 144)
    q["b1"] = b1.reshape(16, 1).astype(jnp.float32)
    q["w2"] = _conv_to_mat(p["w_conv1_2"]).astype(jnp.bfloat16)       # (16, 144)
    q["b2"] = p["b_conv1_2"].reshape(16, 1).astype(jnp.float32)
    q["w3"] = _conv_to_mat(p["w_conv2_1"]).astype(jnp.bfloat16)       # (32, 144)
    q["b3"] = p["b_conv2_1"].reshape(32, 1).astype(jnp.float32)
    # 0/1 selection matrix: picks the 64 pooled anchors (stride-4 flat domain)
    # into a dense, lane-padded (.., 128) feature tile (columns 64..127 zero).
    anchors = (160 * jnp.arange(8)[:, None] + 4 * jnp.arange(8)[None, :]).reshape(64)
    sel = jnp.zeros((_LM2, 128), jnp.float32).at[anchors, jnp.arange(64)].set(1.0)
    q["sel"] = sel.astype(jnp.bfloat16)                               # (1149, 128)
    # fc1: PyTorch flatten order is (c, py, px) -> index c*64 + py*8 + px.
    # Repack rows as c*128 + (py*8+px) to match the kernel's (32,128) feature tile.
    wfc1 = p["w_fc1"].reshape(64, 32, 8, 8)
    wfc1 = jnp.transpose(wfc1, (1, 2, 3, 0)).reshape(32, 64, 64)      # (c, j, o)
    wfc1 = jnp.pad(wfc1, ((0, 0), (0, 64), (0, 0))).reshape(32 * 128, 64)
    q["wfc1"] = wfc1.astype(jnp.bfloat16)                             # (4096, 64)
    q["bfc1"] = p["b_fc1"].reshape(1, 64).astype(jnp.float32)
    q["wfc2"] = jnp.transpose(p["w_fc2"]).astype(jnp.bfloat16)        # (64, 2)
    q["bfc2"] = p["b_fc2"].reshape(1, 2).astype(jnp.float32)
    return q


# ----------------------------------------------------------------------------
# Forward pass
# ----------------------------------------------------------------------------
def switchnet_forward(x_nchw, q):
    n = x_nchw.shape[0]
    # Channels-first is the kernel's native layout (no NCHW->NHWC transpose).
    # One cheap fused prep op: real zeros for conv1_1's padding=1, channel pad
    # 3->16 (keeps every in-kernel tap concat sublane-tile aligned), flatten the
    # spatial dims, cast to bf16 (~51 KB/image).
    xp = jnp.pad(x_nchw, ((0, 0), (0, 13), (1, 1), (1, 1)))           # (N, 16, 40, 40)
    xp = xp.reshape(n, 16, _NP).astype(jnp.bfloat16)                  # (N, 16, 1600)
    tb = min(8, n)                                                    # batch tile
    return switchnet_pallas(xp, q, tb)                                # (N, 2) f32


if __name__ == "__main__":
    key = jax.random.PRNGKey(0)
    k_params, k_x = jax.random.split(key)
    params = prepare_params(init_params(k_params))
    # fc1 = Linear(32*8*8, 64) forces a 38x38 input; batch=2, channels=3.
    x = jax.random.normal(k_x, (2, 3, 38, 38), dtype=jnp.float32)
    out = jax.jit(switchnet_forward)(x, params)
    jax.block_until_ready(out)
    assert out.shape == (2, 2)
    print("KERNEL_OK")
</pallas_src>

<mosaic_0001>
module attributes {stable_mosaic.version = 11 : i64} {
  func.func @_switchnet_kernel(%arg0: i32, %arg1: memref<2x16x1600xbf16, #tpu.memory_space<vmem>>, %arg2: memref<16x144xbf16, #tpu.memory_space<vmem>>, %arg3: memref<16x1xf32, #tpu.memory_space<vmem>>, %arg4: memref<16x144xbf16, #tpu.memory_space<vmem>>, %arg5: memref<16x1xf32, #tpu.memory_space<vmem>>, %arg6: memref<32x144xbf16, #tpu.memory_space<vmem>>, %arg7: memref<32x1xf32, #tpu.memory_space<vmem>>, %arg8: memref<1149x128xbf16, #tpu.memory_space<vmem>>, %arg9: memref<4096x64xbf16, #tpu.memory_space<vmem>>, %arg10: memref<1x64xf32, #tpu.memory_space<vmem>>, %arg11: memref<64x2xbf16, #tpu.memory_space<vmem>>, %arg12: memref<1x2xf32, #tpu.memory_space<vmem>>, %arg13: memref<2x2xf32, #tpu.memory_space<vmem>>, %arg14: memref<2x32x128xbf16, #tpu.memory_space<vmem>>) attributes {dimension_semantics = [#tpu.dimension_semantics<parallel>], iteration_bounds = array<i64: 1>, scalar_prefetch = 0 : i64, scratch_operands = 1 : i64, tpu.core_type = #tpu.core_type<tc>, window_params = [{transform_indices = @transform_0, window_bounds = array<i64: 2, 16, 1600>}, {pipeline_mode = #tpu.pipeline_mode<synchronous>, transform_indices = @transform_1, window_bounds = array<i64: 16, 144>}, {pipeline_mode = #tpu.pipeline_mode<synchronous>, transform_indices = @transform_2, window_bounds = array<i64: 16, 1>}, {pipeline_mode = #tpu.pipeline_mode<synchronous>, transform_indices = @transform_3, window_bounds = array<i64: 16, 144>}, {pipeline_mode = #tpu.pipeline_mode<synchronous>, transform_indices = @transform_4, window_bounds = array<i64: 16, 1>}, {pipeline_mode = #tpu.pipeline_mode<synchronous>, transform_indices = @transform_5, window_bounds = array<i64: 32, 144>}, {pipeline_mode = #tpu.pipeline_mode<synchronous>, transform_indices = @transform_6, window_bounds = array<i64: 32, 1>}, {pipeline_mode = #tpu.pipeline_mode<synchronous>, transform_indices = @transform_7, window_bounds = array<i64: 1149, 128>}, {pipeline_mode = #tpu.pipeline_mode<synchronous>, transform_indices = @transform_8, window_bounds = array<i64: 4096, 64>}, {pipeline_mode = #tpu.pipeline_mode<synchronous>, transform_indices = @transform_9, window_bounds = array<i64: 1, 64>}, {pipeline_mode = #tpu.pipeline_mode<synchronous>, transform_indices = @transform_10, window_bounds = array<i64: 64, 2>}, {pipeline_mode = #tpu.pipeline_mode<synchronous>, transform_indices = @transform_11, window_bounds = array<i64: 1, 2>}, {transform_indices = @transform_12, window_bounds = array<i64: 2, 2>}]} {
    %c0_i32 = arith.constant 0 : i32
    %c2_i32 = arith.constant 2 : i32
    %0 = arith.addi %c0_i32, %c2_i32 : i32
    %c1_i32 = arith.constant 1 : i32
    scf.for %arg15 = %c0_i32 to %0 step %c1_i32  : i32 {
      %29 = arith.index_cast %arg15 : i32 to index
      %c0_17 = arith.constant 0 : index
      %c0_18 = arith.constant 0 : index
      %30 = vector.load %arg1[%29, %c0_17, %c0_18] : memref<2x16x1600xbf16, #tpu.memory_space<vmem>>, vector<1x16x1600xbf16>
      %31 = vector.shape_cast %30 : vector<1x16x1600xbf16> to vector<16x1600xbf16>
      %32 = vector.extract_strided_slice %31 {offsets = [0, 0], sizes = [16, 1518], strides = [1, 1]} : vector<16x1600xbf16> to vector<16x1518xbf16>
      %33 = vector.extract_strided_slice %31 {offsets = [0, 1], sizes = [16, 1518], strides = [1, 1]} : vector<16x1600xbf16> to vector<16x1518xbf16>
      %34 = vector.extract_strided_slice %31 {offsets = [0, 2], sizes = [16, 1518], strides = [1, 1]} : vector<16x1600xbf16> to vector<16x1518xbf16>
      %35 = vector.extract_strided_slice %31 {offsets = [0, 40], sizes = [16, 1518], strides = [1, 1]} : vector<16x1600xbf16> to vector<16x1518xbf16>
      %36 = vector.extract_strided_slice %31 {offsets = [0, 41], sizes = [16, 1518], strides = [1, 1]} : vector<16x1600xbf16> to vector<16x1518xbf16>
      %37 = vector.extract_strided_slice %31 {offsets = [0, 42], sizes = [16, 1518], strides = [1, 1]} : vector<16x1600xbf16> to vector<16x1518xbf16>
      %38 = vector.extract_strided_slice %31 {offsets = [0, 80], sizes = [16, 1518], strides = [1, 1]} : vector<16x1600xbf16> to vector<16x1518xbf16>
      %39 = vector.extract_strided_slice %31 {offsets = [0, 81], sizes = [16, 1518], strides = [1, 1]} : vector<16x1600xbf16> to vector<16x1518xbf16>
      %40 = vector.extract_strided_slice %31 {offsets = [0, 82], sizes = [16, 1518], strides = [1, 1]} : vector<16x1600xbf16> to vector<16x1518xbf16>
      %41 = tpu.concatenate %32, %33, %34, %35, %36, %37, %38, %39, %40 in 0 : vector<16x1518xbf16>, vector<16x1518xbf16>, vector<16x1518xbf16>, vector<16x1518xbf16>, vector<16x1518xbf16>, vector<16x1518xbf16>, vector<16x1518xbf16>, vector<16x1518xbf16>, vector<16x1518xbf16> -> vector<144x1518xbf16>
      %c0_19 = arith.constant 0 : index
      %c0_20 = arith.constant 0 : index
      %42 = vector.load %arg2[%c0_19, %c0_20] : memref<16x144xbf16, #tpu.memory_space<vmem>>, vector<16x144xbf16>
      %cst_21 = arith.constant dense<0.000000e+00> : vector<16x1518xf32>
      %43 = tpu.matmul %42, %41, %cst_21 {dimension_numbers = #tpu.dot_dimension_numbers<[1], [0], [0], [1], [0, 0, 1, 1], [], []>} : vector<16x144xbf16>, vector<144x1518xbf16>, vector<16x1518xf32> -> vector<16x1518xf32>
      %c0_22 = arith.constant 0 : index
      %c0_23 = arith.constant 0 : index
      %44 = vector.load %arg3[%c0_22, %c0_23] : memref<16x1xf32, #tpu.memory_space<vmem>>, vector<16x1xf32>
      %45 = vector.broadcast %44 : vector<16x1xf32> to vector<16x1518xf32>
      %46 = arith.addf %43, %45 : vector<16x1518xf32>
      %47 = arith.truncf %46 : vector<16x1518xf32> to vector<16x1518xbf16>
      %48 = vector.extract_strided_slice %47 {offsets = [0, 0], sizes = [16, 1436], strides = [1, 1]} : vector<16x1518xbf16> to vector<16x1436xbf16>
      %49 = vector.extract_strided_slice %47 {offsets = [0, 1], sizes = [16, 1436], strides = [1, 1]} : vector<16x1518xbf16> to vector<16x1436xbf16>
      %50 = vector.extract_strided_slice %47 {offsets = [0, 2], sizes = [16, 1436], strides = [1, 1]} : vector<16x1518xbf16> to vector<16x1436xbf16>
      %51 = vector.extract_strided_slice %47 {offsets = [0, 40], sizes = [16, 1436], strides = [1, 1]} : vector<16x1518xbf16> to vector<16x1436xbf16>
      %52 = vector.extract_strided_slice %47 {offsets = [0, 41], sizes = [16, 1436], strides = [1, 1]} : vector<16x1518xbf16> to vector<16x1436xbf16>
      %53 = vector.extract_strided_slice %47 {offsets = [0, 42], sizes = [16, 1436], strides = [1, 1]} : vector<16x1518xbf16> to vector<16x1436xbf16>
      %54 = vector.extract_strided_slice %47 {offsets = [0, 80], sizes = [16, 1436], strides = [1, 1]} : vector<16x1518xbf16> to vector<16x1436xbf16>
      %55 = vector.extract_strided_slice %47 {offsets = [0, 81], sizes = [16, 1436], strides = [1, 1]} : vector<16x1518xbf16> to vector<16x1436xbf16>
      %56 = vector.extract_strided_slice %47 {offsets = [0, 82], sizes = [16, 1436], strides = [1, 1]} : vector<16x1518xbf16> to vector<16x1436xbf16>
      %57 = tpu.concatenate %48, %49, %50, %51, %52, %53, %54, %55, %56 in 0 : vector<16x1436xbf16>, vector<16x1436xbf16>, vector<16x1436xbf16>, vector<16x1436xbf16>, vector<16x1436xbf16>, vector<16x1436xbf16>, vector<16x1436xbf16>, vector<16x1436xbf16>, vector<16x1436xbf16> -> vector<144x1436xbf16>
      %c0_24 = arith.constant 0 : index
      %c0_25 = arith.constant 0 : index
      %58 = vector.load %arg4[%c0_24, %c0_25] : memref<16x144xbf16, #tpu.memory_space<vmem>>, vector<16x144xbf16>
      %cst_26 = arith.constant dense<0.000000e+00> : vector<16x1436xf32>
      %59 = tpu.matmul %58, %57, %cst_26 {dimension_numbers = #tpu.dot_dimension_numbers<[1], [0], [0], [1], [0, 0, 1, 1], [], []>} : vector<16x144xbf16>, vector<144x1436xbf16>, vector<16x1436xf32> -> vector<16x1436xf32>
      %c0_27 = arith.constant 0 : index
      %c0_28 = arith.constant 0 : index
      %60 = vector.load %arg5[%c0_27, %c0_28] : memref<16x1xf32, #tpu.memory_space<vmem>>, vector<16x1xf32>
      %61 = vector.broadcast %60 : vector<16x1xf32> to vector<16x1436xf32>
      %62 = arith.addf %59, %61 : vector<16x1436xf32>
      %cst_29 = arith.constant 0.000000e+00 : f32
      %63 = vector.broadcast %cst_29 : f32 to vector<16x1436xf32>
      %64 = arith.maximumf %62, %63 : vector<16x1436xf32>
      %65 = arith.truncf %64 : vector<16x1436xf32> to vector<16x1436xbf16>
      %66 = vector.extract_strided_slice %65 {offsets = [0, 0], sizes = [16, 1395], strides = [1, 1]} : vector<16x1436xbf16> to vector<16x1395xbf16>
      %67 = vector.extract_strided_slice %65 {offsets = [0, 1], sizes = [16, 1395], strides = [1, 1]} : vector<16x1436xbf16> to vector<16x1395xbf16>
      %68 = arith.maximumf %66, %67 : vector<16x1395xbf16>
      %69 = vector.extract_strided_slice %65 {offsets = [0, 40], sizes = [16, 1395], strides = [1, 1]} : vector<16x1436xbf16> to vector<16x1395xbf16>
      %70 = vector.extract_strided_slice %65 {offsets = [0, 41], sizes = [16, 1395], strides = [1, 1]} : vector<16x1436xbf16> to vector<16x1395xbf16>
      %71 = arith.maximumf %69, %70 : vector<16x1395xbf16>
      %72 = arith.maximumf %68, %71 : vector<16x1395xbf16>
      %73 = vector.extract_strided_slice %72 {offsets = [0, 0], sizes = [16, 1231], strides = [1, 1]} : vector<16x1395xbf16> to vector<16x1231xbf16>
      %74 = vector.extract_strided_slice %72 {offsets = [0, 2], sizes = [16, 1231], strides = [1, 1]} : vector<16x1395xbf16> to vector<16x1231xbf16>
      %75 = vector.extract_strided_slice %72 {offsets = [0, 4], sizes = [16, 1231], strides = [1, 1]} : vector<16x1395xbf16> to vector<16x1231xbf16>
      %76 = vector.extract_strided_slice %72 {offsets = [0, 80], sizes = [16, 1231], strides = [1, 1]} : vector<16x1395xbf16> to vector<16x1231xbf16>
      %77 = vector.extract_strided_slice %72 {offsets = [0, 82], sizes = [16, 1231], strides = [1, 1]} : vector<16x1395xbf16> to vector<16x1231xbf16>
      %78 = vector.extract_strided_slice %72 {offsets = [0, 84], sizes = [16, 1231], strides = [1, 1]} : vector<16x1395xbf16> to vector<16x1231xbf16>
      %79 = vector.extract_strided_slice %72 {offsets = [0, 160], sizes = [16, 1231], strides = [1, 1]} : vector<16x1395xbf16> to vector<16x1231xbf16>
      %80 = vector.extract_strided_slice %72 {offsets = [0, 162], sizes = [16, 1231], strides = [1, 1]} : vector<16x1395xbf16> to vector<16x1231xbf16>
      %81 = vector.extract_strided_slice %72 {offsets = [0, 164], sizes = [16, 1231], strides = [1, 1]} : vector<16x1395xbf16> to vector<16x1231xbf16>
      %82 = tpu.concatenate %73, %74, %75, %76, %77, %78, %79, %80, %81 in 0 : vector<16x1231xbf16>, vector<16x1231xbf16>, vector<16x1231xbf16>, vector<16x1231xbf16>, vector<16x1231xbf16>, vector<16x1231xbf16>, vector<16x1231xbf16>, vector<16x1231xbf16>, vector<16x1231xbf16> -> vector<144x1231xbf16>
      %c0_30 = arith.constant 0 : index
      %c0_31 = arith.constant 0 : index
      %83 = vector.load %arg6[%c0_30, %c0_31] : memref<32x144xbf16, #tpu.memory_space<vmem>>, vector<32x144xbf16>
      %cst_32 = arith.constant dense<0.000000e+00> : vector<32x1231xf32>
      %84 = tpu.matmul %83, %82, %cst_32 {dimension_numbers = #tpu.dot_dimension_numbers<[1], [0], [0], [1], [0, 0, 1, 1], [], []>} : vector<32x144xbf16>, vector<144x1231xbf16>, vector<32x1231xf32> -> vector<32x1231xf32>
      %c0_33 = arith.constant 0 : index
      %c0_34 = arith.constant 0 : index
      %85 = vector.load %arg7[%c0_33, %c0_34] : memref<32x1xf32, #tpu.memory_space<vmem>>, vector<32x1xf32>
      %86 = vector.broadcast %85 : vector<32x1xf32> to vector<32x1231xf32>
      %87 = arith.addf %84, %86 : vector<32x1231xf32>
      %cst_35 = arith.constant 0.000000e+00 : f32
      %88 = vector.broadcast %cst_35 : f32 to vector<32x1231xf32>
      %89 = arith.maximumf %87, %88 : vector<32x1231xf32>
      %90 = arith.truncf %89 : vector<32x1231xf32> to vector<32x1231xbf16>
      %91 = vector.extract_strided_slice %90 {offsets = [0, 0], sizes = [32, 1149], strides = [1, 1]} : vector<32x1231xbf16> to vector<32x1149xbf16>
      %92 = vector.extract_strided_slice %90 {offsets = [0, 2], sizes = [32, 1149], strides = [1, 1]} : vector<32x1231xbf16> to vector<32x1149xbf16>
      %93 = arith.maximumf %91, %92 : vector<32x1149xbf16>
      %94 = vector.extract_strided_slice %90 {offsets = [0, 80], sizes = [32, 1149], strides = [1, 1]} : vector<32x1231xbf16> to vector<32x1149xbf16>
      %95 = vector.extract_strided_slice %90 {offsets = [0, 82], sizes = [32, 1149], strides = [1, 1]} : vector<32x1231xbf16> to vector<32x1149xbf16>
      %96 = arith.maximumf %94, %95 : vector<32x1149xbf16>
      %97 = arith.maximumf %93, %96 : vector<32x1149xbf16>
      %c0_36 = arith.constant 0 : index
      %c0_37 = arith.constant 0 : index
      %98 = vector.load %arg8[%c0_36, %c0_37] : memref<1149x128xbf16, #tpu.memory_space<vmem>>, vector<1149x128xbf16>
      %cst_38 = arith.constant dense<0.000000e+00> : vector<32x128xf32>
      %99 = tpu.matmul %97, %98, %cst_38 {dimension_numbers = #tpu.dot_dimension_numbers<[1], [0], [0], [1], [0, 0, 1, 1], [], []>} : vector<32x1149xbf16>, vector<1149x128xbf16>, vector<32x128xf32> -> vector<32x128xf32>
      %100 = arith.truncf %99 : vector<32x128xf32> to vector<32x128xbf16>
      %101 = arith.index_cast %arg15 : i32 to index
      %c0_39 = arith.constant 0 : index
      %c0_40 = arith.constant 0 : index
      %102 = vector.load %arg14[%101, %c0_39, %c0_40] : memref<2x32x128xbf16, #tpu.memory_space<vmem>>, vector<1x32x128xbf16>
      %103 = vector.shape_cast %102 : vector<1x32x128xbf16> to vector<32x128xbf16>
      %104 = vector.shape_cast %100 : vector<32x128xbf16> to vector<1x32x128xbf16>
      tpu.vector_store %arg14[%101, %c0_39, %c0_40], %104 {strides = array<i32>} : memref<2x32x128xbf16, #tpu.memory_space<vmem>>, vector<1x32x128xbf16>,
    }
    %c2_i32_0 = arith.constant 2 : i32
    %c0 = arith.constant 0 : index
    %c0_1 = arith.constant 0 : index
    %c0_2 = arith.constant 0 : index
    %1 = vector.load %arg14[%c0, %c0_1, %c0_2] : memref<2x32x128xbf16, #tpu.memory_space<vmem>>, vector<2x32x128xbf16>
    %2 = vector.shape_cast %1 : vector<2x32x128xbf16> to vector<2x4096xbf16>
    %c0_3 = arith.constant 0 : index
    %c0_4 = arith.constant 0 : index
    %3 = vector.load %arg9[%c0_3, %c0_4] : memref<4096x64xbf16, #tpu.memory_space<vmem>>, vector<4096x64xbf16>
    %cst = arith.constant dense<0.000000e+00> : vector<2x64xf32>
    %4 = tpu.matmul %2, %3, %cst {dimension_numbers = #tpu.dot_dimension_numbers<[1], [0], [0], [1], [0, 0, 1, 1], [], []>} : vector<2x4096xbf16>, vector<4096x64xbf16>, vector<2x64xf32> -> vector<2x64xf32>
    %c0_5 = arith.constant 0 : index
    %c0_6 = arith.constant 0 : index
    %5 = vector.load %arg10[%c0_5, %c0_6] : memref<1x64xf32, #tpu.memory_space<vmem>>, vector<1x64xf32>
    %6 = vector.broadcast %5 : vector<1x64xf32> to vector<2x64xf32>
    %7 = arith.addf %4, %6 : vector<2x64xf32>
    %cst_7 = arith.constant 0.000000e+00 : f32
    %8 = vector.broadcast %cst_7 : f32 to vector<2x64xf32>
    %9 = arith.maximumf %7, %8 : vector<2x64xf32>
    %10 = arith.truncf %9 : vector<2x64xf32> to vector<2x64xbf16>
    %c0_8 = arith.constant 0 : index
    %c0_9 = arith.constant 0 : index
    %11 = vector.load %arg11[%c0_8, %c0_9] : memref<64x2xbf16, #tpu.memory_space<vmem>>, vector<64x2xbf16>
    %cst_10 = arith.constant dense<0.000000e+00> : vector<2x2xf32>
    %12 = tpu.matmul %10, %11, %cst_10 {dimension_numbers = #tpu.dot_dimension_numbers<[1], [0], [0], [1], [0, 0, 1, 1], [], []>} : vector<2x64xbf16>, vector<64x2xbf16>, vector<2x2xf32> -> vector<2x2xf32>
    %c0_11 = arith.constant 0 : index
    %c0_12 = arith.constant 0 : index
    %13 = vector.load %arg12[%c0_11, %c0_12] : memref<1x2xf32, #tpu.memory_space<vmem>>, vector<1x2xf32>
    %14 = vector.broadcast %13 : vector<1x2xf32> to vector<2x2xf32>
    %15 = arith.addf %12, %14 : vector<2x2xf32>
    %cst_13 = arith.constant dense<0xFF800000> : vector<2xf32>
    %16 = vector.multi_reduction <maximumf>, %15, %cst_13 [1] : vector<2x2xf32> to vector<2xf32>
    %17 = vector.shape_cast %16 : vector<2xf32> to vector<2x1xf32>
    %18 = vector.broadcast %17 : vector<2x1xf32> to vector<2x2xf32>
    %19 = arith.subf %15, %18 : vector<2x2xf32>
    %20 = vector.broadcast %17 : vector<2x1xf32> to vector<2x2xf32>
    %21 = arith.subf %15, %20 : vector<2x2xf32>
    %22 = math.exp %21 : vector<2x2xf32>
    %cst_14 = arith.constant dense<0.000000e+00> : vector<2xf32>
    %23 = vector.multi_reduction <add>, %22, %cst_14 [1] : vector<2x2xf32> to vector<2xf32>
    %24 = vector.shape_cast %23 : vector<2xf32> to vector<2x1xf32>
    %25 = math.log %24 : vector<2x1xf32>
    %26 = vector.broadcast %25 : vector<2x1xf32> to vector<2x2xf32>
    %27 = arith.subf %19, %26 : vector<2x2xf32>
    %c0_15 = arith.constant 0 : index
    %c0_16 = arith.constant 0 : index
    %28 = vector.load %arg13[%c0_15, %c0_16] : memref<2x2xf32, #tpu.memory_space<vmem>>, vector<2x2xf32>
    tpu.vector_store %arg13[%c0_15, %c0_16], %27 {strides = array<i32>} : memref<2x2xf32, #tpu.memory_space<vmem>>, vector<2x2xf32>,
    return
  }
  func.func @transform_0(%arg0: i32) -> (i32, i32, i32) {
    %c0_i32 = arith.constant 0 : i32
    %c0_i32_0 = arith.constant 0 : i32
    %c0_i32_1 = arith.constant 0 : i32
    return %arg0, %c0_i32, %c0_i32_0 : i32, i32, i32
  }
  func.func @transform_1(%arg0: i32) -> (i32, i32) {
    %c0_i32 = arith.constant 0 : i32
    %c0_i32_0 = arith.constant 0 : i32
    %c0_i32_1 = arith.constant 0 : i32
    return %c0_i32, %c0_i32_0 : i32, i32
  }
  func.func @transform_2(%arg0: i32) -> (i32, i32) {
    %c0_i32 = arith.constant 0 : i32
    %c0_i32_0 = arith.constant 0 : i32
    %c0_i32_1 = arith.constant 0 : i32
    return %c0_i32, %c0_i32_0 : i32, i32
  }
  func.func @transform_3(%arg0: i32) -> (i32, i32) {
    %c0_i32 = arith.constant 0 : i32
    %c0_i32_0 = arith.constant 0 : i32
    %c0_i32_1 = arith.constant 0 : i32
    return %c0_i32, %c0_i32_0 : i32, i32
  }
  func.func @transform_4(%arg0: i32) -> (i32, i32) {
    %c0_i32 = arith.constant 0 : i32
    %c0_i32_0 = arith.constant 0 : i32
    %c0_i32_1 = arith.constant 0 : i32
    return %c0_i32, %c0_i32_0 : i32, i32
  }
  func.func @transform_5(%arg0: i32) -> (i32, i32) {
    %c0_i32 = arith.constant 0 : i32
    %c0_i32_0 = arith.constant 0 : i32
    %c0_i32_1 = arith.constant 0 : i32
    return %c0_i32, %c0_i32_0 : i32, i32
  }
  func.func @transform_6(%arg0: i32) -> (i32, i32) {
    %c0_i32 = arith.constant 0 : i32
    %c0_i32_0 = arith.constant 0 : i32
    %c0_i32_1 = arith.constant 0 : i32
    return %c0_i32, %c0_i32_0 : i32, i32
  }
  func.func @transform_7(%arg0: i32) -> (i32, i32) {
    %c0_i32 = arith.constant 0 : i32
    %c0_i32_0 = arith.constant 0 : i32
    %c0_i32_1 = arith.constant 0 : i32
    return %c0_i32, %c0_i32_0 : i32, i32
  }
  func.func @transform_8(%arg0: i32) -> (i32, i32) {
    %c0_i32 = arith.constant 0 : i32
    %c0_i32_0 = arith.constant 0 : i32
    %c0_i32_1 = arith.constant 0 : i32
    return %c0_i32, %c0_i32_0 : i32, i32
  }
  func.func @transform_9(%arg0: i32) -> (i32, i32) {
    %c0_i32 = arith.constant 0 : i32
    %c0_i32_0 = arith.constant 0 : i32
    %c0_i32_1 = arith.constant 0 : i32
    return %c0_i32, %c0_i32_0 : i32, i32
  }
  func.func @transform_10(%arg0: i32) -> (i32, i32) {
    %c0_i32 = arith.constant 0 : i32
    %c0_i32_0 = arith.constant 0 : i32
    %c0_i32_1 = arith.constant 0 : i32
    return %c0_i32, %c0_i32_0 : i32, i32
  }
  func.func @transform_11(%arg0: i32) -> (i32, i32) {
    %c0_i32 = arith.constant 0 : i32
    %c0_i32_0 = arith.constant 0 : i32
    %c0_i32_1 = arith.constant 0 : i32
    return %c0_i32, %c0_i32_0 : i32, i32
  }
  func.func @transform_12(%arg0: i32) -> (i32, i32) {
    %c0_i32 = arith.constant 0 : i32
    %c0_i32_0 = arith.constant 0 : i32
    return %arg0, %c0_i32 : i32, i32
  }
}

</mosaic_0001>

<llo_original>
// kernel: switchnet_forward.1
$region0: #{switchnet_forward.1}
  #allocation0 [shape = 'u32[]', space=smem, size = 0x4, offset = 0x4, fixed_abs, tag = 'smem constant byte address 0x4 - core index']
  #allocation1 [shape = 'u32[144,128]{1,0:T(1,128)}', space=vmem, size = 0x12000, scoped, tag = 'internal scratch']
  #allocation2 [shape = 'bf16[2,32,128]{2,1,0:T(8,128)(2,1)}', space=vmem, size = 0x4000, scoped, tag = 'scratch operand']
  %s0 = inlined_call_operand.vmem [shape: bf16[2,16,1600], index: 0, kind: input, shape index: {}]
  %s1 = inlined_call_operand.vmem [shape: bf16[16,144], index: 1, kind: input, shape index: {}]
  %s2 = inlined_call_operand.vmem [shape: f32[16,1], index: 2, kind: input, shape index: {}]
  %s3 = inlined_call_operand.vmem [shape: bf16[16,144], index: 3, kind: input, shape index: {}]
  %s4 = inlined_call_operand.vmem [shape: f32[16,1], index: 4, kind: input, shape index: {}]
  %s5 = inlined_call_operand.vmem [shape: bf16[32,144], index: 5, kind: input, shape index: {}]
  %s6 = inlined_call_operand.vmem [shape: f32[32,1], index: 6, kind: input, shape index: {}]
  %s7 = inlined_call_operand.vmem [shape: bf16[1149,128], index: 7, kind: input, shape index: {}]
  %s8 = inlined_call_operand.vmem [shape: bf16[4096,64], index: 8, kind: input, shape index: {}]
  %s9 = inlined_call_operand.vmem [shape: f32[1,64], index: 9, kind: input, shape index: {}]
  %s10 = inlined_call_operand.vmem [shape: bf16[64,2], index: 10, kind: input, shape index: {}]
  %s11 = inlined_call_operand.vmem [shape: f32[1,2], index: 11, kind: input, shape index: {}]
  %s12 = inlined_call_operand.hbm [shape: f32[2,2], index: 12, kind: output, shape index: {}]
  %s13 = sld [smem:[#allocation0]]
  $region65: #{switchnet_forward.1} parent=0
    _
  %s15 = ssub.s32 1, %s13
  %s16 = scalar_select 0, %s15, %s13
  $region1: #{switchnet_forward.1} parent=0
    #allocation3 [shape = 'u8[1024]{0}', space=vmem, size = 0x400, scoped, tag = 'output window, operand 0, single buffered']
    #allocation4 [shape = 's32[1]{0}', space=sflag, size = 0x4, scoped, tag = 'scoped memory for switchnet_forward.1']
    %17 = vsyncpa [#allocation4], 0
    // Predicated region
    $region2: #{switchnet_forward.1} parent=1 // pred_check
      _
    $region3: #{switchnet_forward.1} parent=1 // pred_check_branch
      %19 = sbr.rel (0) target = $region5
    $region4: #{switchnet_forward.1} parent=1 // pred_region
      _
    $region5: #{switchnet_forward.1} parent=1 // pred_fallthru
      _
    // Predicated region
    $region6: #{switchnet_forward.1} parent=1 // pred_check
      _
    $region7: #{switchnet_forward.1} parent=1 // pred_check_branch
      %21 = sbr.rel (0) target = $region9
    $region8: #{switchnet_forward.1} parent=1 // pred_region
      _
    $region9: #{switchnet_forward.1} parent=1 // pred_fallthru
      _
    // Predicated region
    $region10: #{switchnet_forward.1} parent=1 // pred_check
      _
    $region11: #{switchnet_forward.1} parent=1 // pred_check_branch
      %23 = sbr.rel (0) target = $region13
    $region12: #{switchnet_forward.1} parent=1 // pred_region
      _
    $region13: #{switchnet_forward.1} parent=1 // pred_fallthru
      _
    // Predicated region
    $region14: #{switchnet_forward.1} parent=1 // pred_check
      _
    $region15: #{switchnet_forward.1} parent=1 // pred_check_branch
      %25 = sbr.rel (0) target = $region17
    $region16: #{switchnet_forward.1} parent=1 // pred_region
      _
    $region17: #{switchnet_forward.1} parent=1 // pred_fallthru
      _
    // Predicated region
    $region18: #{switchnet_forward.1} parent=1 // pred_check
      _
    $region19: #{switchnet_forward.1} parent=1 // pred_check_branch
      %27 = sbr.rel (0) target = $region21
    $region20: #{switchnet_forward.1} parent=1 // pred_region
      _
    $region21: #{switchnet_forward.1} parent=1 // pred_fallthru
      _
    // Predicated region
    $region22: #{switchnet_forward.1} parent=1 // pred_check
      _
    $region23: #{switchnet_forward.1} parent=1 // pred_check_branch
      %29 = sbr.rel (0) target = $region25
    $region24: #{switchnet_forward.1} parent=1 // pred_region
      _
    $region25: #{switchnet_forward.1} parent=1 // pred_fallthru
      _
    // Predicated region
    $region26: #{switchnet_forward.1} parent=1 // pred_check
      _
    $region27: #{switchnet_forward.1} parent=1 // pred_check_branch
      %31 = sbr.rel (0) target = $region29
    $region28: #{switchnet_forward.1} parent=1 // pred_region
      _
    $region29: #{switchnet_forward.1} parent=1 // pred_fallthru
      _
    // Predicated region
    $region30: #{switchnet_forward.1} parent=1 // pred_check
      _
    $region31: #{switchnet_forward.1} parent=1 // pred_check_branch
      %33 = sbr.rel (0) target = $region33
    $region32: #{switchnet_forward.1} parent=1 // pred_region
      _
    $region33: #{switchnet_forward.1} parent=1 // pred_fallthru
      _
    // Predicated region
    $region34: #{switchnet_forward.1} parent=1 // pred_check
      _
    $region35: #{switchnet_forward.1} parent=1 // pred_check_branch
      %35 = sbr.rel (0) target = $region37
    $region36: #{switchnet_forward.1} parent=1 // pred_region
      _
    $region37: #{switchnet_forward.1} parent=1 // pred_fallthru
      _
    // Predicated region
    $region38: #{switchnet_forward.1} parent=1 // pred_check
      _
    $region39: #{switchnet_forward.1} parent=1 // pred_check_branch
      %37 = sbr.rel (0) target = $region41
    $region40: #{switchnet_forward.1} parent=1 // pred_region
      _
    $region41: #{switchnet_forward.1} parent=1 // pred_fallthru
      _
    // Predicated region
    $region42: #{switchnet_forward.1} parent=1 // pred_check
      _
    $region43: #{switchnet_forward.1} parent=1 // pred_check_branch
      %39 = sbr.rel (0) target = $region45
    $region44: #{switchnet_forward.1} parent=1 // pred_region
      _
    $region45: #{switchnet_forward.1} parent=1 // pred_fallthru
      _
    // Predicated region
    $region46: #{switchnet_forward.1} parent=1 // pred_check
      _
    $region47: #{switchnet_forward.1} parent=1 // pred_check_branch
      %41 = sbr.rel (0) target = $region49
    $region48: #{switchnet_forward.1} parent=1 // pred_region
      _
    $region49: #{switchnet_forward.1} parent=1 // pred_fallthru
      _
    loop: start=0, step=1, limit=2
    $region50: #{switchnet_forward.1} parent=1 // loop_pre_header
      _
    $region51: #{switchnet_forward.1} parent=1 // loop_header
      %s44 = sphi 0, %s48
      %p45 = scmp.ge.s32.totalorder %s44, 2
    $region52: #{switchnet_forward.1} parent=1 // loop_header_branch
      %47 = sbr.rel (%p45) target = $region56
    $region53: #{switchnet_forward.1} parent=1 // loop_body
      %s49 = smul.u32 %s44, 26
      %s50 = smul.addr %s49, 4
      %s51 = scalar_lea.vmem %s0, %s50
      %v52 = vld [vmem:[%s51] sm:$0xff]
      %v53 = vld [vmem:[%s51 + $0x8] sm:$0xff]
      %v54 = vld [vmem:[%s51 + $0x10] sm:$0xff]
      %v55 = vld [vmem:[%s51 + $0x18] sm:$0xff]
      %v56 = vld [vmem:[%s51 + $0x20] sm:$0xff]
      %v57 = vld [vmem:[%s51 + $0x28] sm:$0xff]
      %v58 = vld [vmem:[%s51 + $0x30] sm:$0xf]
      %v59 = vld [vmem:[%s51 + $0x34] sm:$0xff]
      %v60 = vld [vmem:[%s51 + $0x3c] sm:$0xff]
      %v61 = vld [vmem:[%s51 + $0x44] sm:$0xff]
      %v62 = vld [vmem:[%s51 + $0x4c] sm:$0xff]
      %v63 = vld [vmem:[%s51 + $0x54] sm:$0xff]
      %v64 = vld [vmem:[%s51 + $0x5c] sm:$0xff]
      %v65 = vld [vmem:[%s51 + $0x64] sm:$0xf]
      %v78 = vunpack.c.l.b16 %v52
      %v79 = vunpack.c.h.b16 %v52
      %v80 = vunpack.c.l.b16 %v53
      %v81 = vunpack.c.h.b16 %v53
      %v82 = vunpack.c.l.b16 %v54
      %v83 = vunpack.c.h.b16 %v54
      %v84 = vunpack.c.l.b16 %v55
      %v85 = vunpack.c.h.b16 %v55
      %v86 = vunpack.c.l.b16 %v56
      %v87 = vunpack.c.h.b16 %v56
      %v88 = vunpack.c.l.b16 %v57
      %v89 = vunpack.c.h.b16 %v57
      %v90 = vunpack.c.l.b16 %v59
      %v91 = vunpack.c.h.b16 %v59
      %v92 = vunpack.c.l.b16 %v60
      %v93 = vunpack.c.h.b16 %v60
      %v94 = vunpack.c.l.b16 %v61
      %v95 = vunpack.c.h.b16 %v61
      %v96 = vunpack.c.l.b16 %v62
      %v97 = vunpack.c.h.b16 %v62
      %v98 = vunpack.c.l.b16 %v63
      %v99 = vunpack.c.h.b16 %v63
      %v100 = vunpack.c.l.b16 %v64
      %v101 = vunpack.c.h.b16 %v64
      %v102 = vpack.c.b16 %v90, %v78
      %v103 = vpack.c.b16 %v91, %v79
      %v104 = vpack.c.b16 %v92, %v80
      %v105 = vpack.c.b16 %v93, %v81
      %v106 = vpack.c.b16 %v94, %v82
      %v107 = vpack.c.b16 %v95, %v83
      %v108 = vpack.c.b16 %v96, %v84
      %v109 = vpack.c.b16 %v97, %v85
      %v110 = vpack.c.b16 %v98, %v86
      %v111 = vpack.c.b16 %v99, %v87
      %v112 = vpack.c.b16 %v100, %v88
      %v113 = vpack.c.b16 %v101, %v89
      %126 = vrot.lane.b32.xlu0 %v102, 127
      %v127 = vpop.permute.xlu0 %126
      %128 = vrot.lane.b32.xlu0 %v103, 127
      %v129 = vpop.permute.xlu0 %128
      %130 = vrot.lane.b32.xlu0 %v104, 127
      %v131 = vpop.permute.xlu0 %130
      %132 = vrot.lane.b32.xlu0 %v105, 127
      %v133 = vpop.permute.xlu0 %132
      %134 = vrot.lane.b32.xlu0 %v106, 127
      %v135 = vpop.permute.xlu0 %134
      %136 = vrot.lane.b32.xlu0 %v107, 127
      %v137 = vpop.permute.xlu0 %136
      %138 = vrot.lane.b32.xlu0 %v108, 127
      %v139 = vpop.permute.xlu0 %138
      %140 = vrot.lane.b32.xlu0 %v109, 127
      %v141 = vpop.permute.xlu0 %140
      %142 = vrot.lane.b32.xlu0 %v110, 127
      %v143 = vpop.permute.xlu0 %142
      %144 = vrot.lane.b32.xlu0 %v111, 127
      %v145 = vpop.permute.xlu0 %144
      %146 = vrot.lane.b32.xlu0 %v112, 127
      %v147 = vpop.permute.xlu0 %146
      %148 = vrot.lane.b32.xlu0 %v113, 127
      %v149 = vpop.permute.xlu0 %148
      %vm150 = vcmask 1039360
      %v151 = vsel %vm150, %v127, %v129
      %v152 = vsel %vm150, %v129, %v131
      %v153 = vsel %vm150, %v131, %v133
      %v154 = vsel %vm150, %v133, %v135
      %v155 = vsel %vm150, %v135, %v137
      %v156 = vsel %vm150, %v137, %v139
      %v157 = vsel %vm150, %v139, %v141
      %v158 = vsel %vm150, %v141, %v143
      %v159 = vsel %vm150, %v143, %v145
      %v160 = vsel %vm150, %v145, %v147
      %v161 = vsel %vm150, %v147, %v149
      %174 = vrot.lane.b32.xlu0 %v102, 126
      %v175 = vpop.permute.xlu0 %174
      %176 = vrot.lane.b32.xlu0 %v103, 126
      %v177 = vpop.permute.xlu0 %176
      %178 = vrot.lane.b32.xlu0 %v104, 126
      %v179 = vpop.permute.xlu0 %178
      %180 = vrot.lane.b32.xlu0 %v105, 126
      %v181 = vpop.permute.xlu0 %180
      %182 = vrot.lane.b32.xlu0 %v106, 126
      %v183 = vpop.permute.xlu0 %182
      %184 = vrot.lane.b32.xlu0 %v107, 126
      %v185 = vpop.permute.xlu0 %184
      %186 = vrot.lane.b32.xlu0 %v108, 126
      %v187 = vpop.permute.xlu0 %186
      %188 = vrot.lane.b32.xlu0 %v109, 126
      %v189 = vpop.permute.xlu0 %188
      %190 = vrot.lane.b32.xlu0 %v110, 126
      %v191 = vpop.permute.xlu0 %190
      %192 = vrot.lane.b32.xlu0 %v111, 126
      %v193 = vpop.permute.xlu0 %192
      %194 = vrot.lane.b32.xlu0 %v112, 126
      %v195 = vpop.permute.xlu0 %194
      %196 = vrot.lane.b32.xlu0 %v113, 126
      %v197 = vpop.permute.xlu0 %196
      %vm198 = vcmask 1031168
      %v199 = vsel %vm198, %v175, %v177
      %v200 = vsel %vm198, %v177, %v179
      %v201 = vsel %vm198, %v179, %v181
      %v202 = vsel %vm198, %v181, %v183
      %v203 = vsel %vm198, %v183, %v185
      %v204 = vsel %vm198, %v185, %v187
      %v205 = vsel %vm198, %v187, %v189
      %v206 = vsel %vm198, %v189, %v191
      %v207 = vsel %vm198, %v191, %v193
      %v208 = vsel %vm198, %v193, %v195
      %v209 = vsel %vm198, %v195, %v197
      %v224 = vunpack.c.l.b16 %v58
      %v225 = vunpack.c.l.b16 %v65
      %v226 = vpack.c.b16 %v225, %v224
      %227 = vrot.lane.b32.xlu0 %v102, 88
      %v228 = vpop.permute.xlu0 %227
      %229 = vrot.lane.b32.xlu0 %v103, 88
      %v230 = vpop.permute.xlu0 %229
      %231 = vrot.lane.b32.xlu0 %v104, 88
      %v232 = vpop.permute.xlu0 %231
      %233 = vrot.lane.b32.xlu0 %v105, 88
      %v234 = vpop.permute.xlu0 %233
      %235 = vrot.lane.b32.xlu0 %v106, 88
      %v236 = vpop.permute.xlu0 %235
      %237 = vrot.lane.b32.xlu0 %v107, 88
      %v238 = vpop.permute.xlu0 %237
      %239 = vrot.lane.b32.xlu0 %v108, 88
      %v240 = vpop.permute.xlu0 %239
      %241 = vrot.lane.b32.xlu0 %v109, 88
      %v242 = vpop.permute.xlu0 %241
      %243 = vrot.lane.b32.xlu0 %v110, 88
      %v244 = vpop.permute.xlu0 %243
      %245 = vrot.lane.b32.xlu0 %v111, 88
      %v246 = vpop.permute.xlu0 %245
      %247 = vrot.lane.b32.xlu0 %v112, 88
      %v248 = vpop.permute.xlu0 %247
      %249 = vrot.lane.b32.xlu0 %v113, 88
      %v250 = vpop.permute.xlu0 %249
      %251 = vrot.lane.b32.xlu0 %v226, 88
      %v252 = vpop.permute.xlu0 %251
      %vm253 = vcmask 719872
      %v254 = vsel %vm253, %v228, %v230
      %v255 = vsel %vm253, %v230, %v232
      %v256 = vsel %vm253, %v232, %v234
      %v257 = vsel %vm253, %v234, %v236
      %v258 = vsel %vm253, %v236, %v238
      %v259 = vsel %vm253, %v238, %v240
      %v260 = vsel %vm253, %v240, %v242
      %v261 = vsel %vm253, %v242, %v244
      %v262 = vsel %vm253, %v244, %v246
      %v263 = vsel %vm253, %v246, %v248
      %v264 = vsel %vm253, %v248, %v250
      %v265 = vsel %vm253, %v250, %v252
      %278 = vrot.lane.b32.xlu0 %v102, 87
      %v279 = vpop.permute.xlu0 %278
      %280 = vrot.lane.b32.xlu0 %v103, 87
      %v281 = vpop.permute.xlu0 %280
      %282 = vrot.lane.b32.xlu0 %v104, 87
      %v283 = vpop.permute.xlu0 %282
      %284 = vrot.lane.b32.xlu0 %v105, 87
      %v285 = vpop.permute.xlu0 %284
      %286 = vrot.lane.b32.xlu0 %v106, 87
      %v287 = vpop.permute.xlu0 %286
      %288 = vrot.lane.b32.xlu0 %v107, 87
      %v289 = vpop.permute.xlu0 %288
      %290 = vrot.lane.b32.xlu0 %v108, 87
      %v291 = vpop.permute.xlu0 %290
      %292 = vrot.lane.b32.xlu0 %v109, 87
      %v293 = vpop.permute.xlu0 %292
      %294 = vrot.lane.b32.xlu0 %v110, 87
      %v295 = vpop.permute.xlu0 %294
      %296 = vrot.lane.b32.xlu0 %v111, 87
      %v297 = vpop.permute.xlu0 %296
      %298 = vrot.lane.b32.xlu0 %v112, 87
      %v299 = vpop.permute.xlu0 %298
      %300 = vrot.lane.b32.xlu0 %v113, 87
      %v301 = vpop.permute.xlu0 %300
      %302 = vrot.lane.b32.xlu0 %v226, 87
      %v303 = vpop.permute.xlu0 %302
      %vm304 = vcmask 711680
      %v305 = vsel %vm304, %v279, %v281
      %v306 = vsel %vm304, %v281, %v283
      %v307 = vsel %vm304, %v283, %v285
      %v308 = vsel %vm304, %v285, %v287
      %v309 = vsel %vm304, %v287, %v289
      %v310 = vsel %vm304, %v289, %v291
      %v311 = vsel %vm304, %v291, %v293
      %v312 = vsel %vm304, %v293, %v295
      %v313 = vsel %vm304, %v295, %v297
      %v314 = vsel %vm304, %v297, %v299
      %v315 = vsel %vm304, %v299, %v301
      %v316 = vsel %vm304, %v301, %v303
      %329 = vrot.lane.b32.xlu0 %v102, 86
      %v330 = vpop.permute.xlu0 %329
      %331 = vrot.lane.b32.xlu0 %v103, 86
      %v332 = vpop.permute.xlu0 %331
      %333 = vrot.lane.b32.xlu0 %v104, 86
      %v334 = vpop.permute.xlu0 %333
      %335 = vrot.lane.b32.xlu0 %v105, 86
      %v336 = vpop.permute.xlu0 %335
      %337 = vrot.lane.b32.xlu0 %v106, 86
      %v338 = vpop.permute.xlu0 %337
      %339 = vrot.lane.b32.xlu0 %v107, 86
      %v340 = vpop.permute.xlu0 %339
      %341 = vrot.lane.b32.xlu0 %v108, 86
      %v342 = vpop.permute.xlu0 %341
      %343 = vrot.lane.b32.xlu0 %v109, 86
      %v344 = vpop.permute.xlu0 %343
      %345 = vrot.lane.b32.xlu0 %v110, 86
      %v346 = vpop.permute.xlu0 %345
      %347 = vrot.lane.b32.xlu0 %v111, 86
      %v348 = vpop.permute.xlu0 %347
      %349 = vrot.lane.b32.xlu0 %v112, 86
      %v350 = vpop.permute.xlu0 %349
      %351 = vrot.lane.b32.xlu0 %v113, 86
      %v352 = vpop.permute.xlu0 %351
      %353 = vrot.lane.b32.xlu0 %v226, 86
      %v354 = vpop.permute.xlu0 %353
      %vm355 = vcmask 703488
      %v356 = vsel %vm355, %v330, %v332
      %v357 = vsel %vm355, %v332, %v334
      %v358 = vsel %vm355, %v334, %v336
      %v359 = vsel %vm355, %v336, %v338
      %v360 = vsel %vm355, %v338, %v340
      %v361 = vsel %vm355, %v340, %v342
      %v362 = vsel %vm355, %v342, %v344
      %v363 = vsel %vm355, %v344, %v346
      %v364 = vsel %vm355, %v346, %v348
      %v365 = vsel %vm355, %v348, %v350
      %v366 = vsel %vm355, %v350, %v352
      %v367 = vsel %vm355, %v352, %v354
      %380 = vrot.lane.b32.xlu0 %v102, 48
      %v381 = vpop.permute.xlu0 %380
      %382 = vrot.lane.b32.xlu0 %v103, 48
      %v383 = vpop.permute.xlu0 %382
      %384 = vrot.lane.b32.xlu0 %v104, 48
      %v385 = vpop.permute.xlu0 %384
      %386 = vrot.lane.b32.xlu0 %v105, 48
      %v387 = vpop.permute.xlu0 %386
      %388 = vrot.lane.b32.xlu0 %v106, 48
      %v389 = vpop.permute.xlu0 %388
      %390 = vrot.lane.b32.xlu0 %v107, 48
      %v391 = vpop.permute.xlu0 %390
      %392 = vrot.lane.b32.xlu0 %v108, 48
      %v393 = vpop.permute.xlu0 %392
      %394 = vrot.lane.b32.xlu0 %v109, 48
      %v395 = vpop.permute.xlu0 %394
      %396 = vrot.lane.b32.xlu0 %v110, 48
      %v397 = vpop.permute.xlu0 %396
      %398 = vrot.lane.b32.xlu0 %v111, 48
      %v399 = vpop.permute.xlu0 %398
      %400 = vrot.lane.b32.xlu0 %v112, 48
      %v401 = vpop.permute.xlu0 %400
      %402 = vrot.lane.b32.xlu0 %v113, 48
      %v403 = vpop.permute.xlu0 %402
      %404 = vrot.lane.b32.xlu0 %v226, 48
      %v405 = vpop.permute.xlu0 %404
      %vm406 = vcmask 392192
      %v407 = vsel %vm406, %v381, %v383
      %v408 = vsel %vm406, %v383, %v385
      %v409 = vsel %vm406, %v385, %v387
      %v410 = vsel %vm406, %v387, %v389
      %v411 = vsel %vm406, %v389, %v391
      %v412 = vsel %vm406, %v391, %v393
      %v413 = vsel %vm406, %v393, %v395
      %v414 = vsel %vm406, %v395, %v397
      %v415 = vsel %vm406, %v397, %v399
      %v416 = vsel %vm406, %v399, %v401
      %v417 = vsel %vm406, %v401, %v403
      %v418 = vsel %vm406, %v403, %v405
      %431 = vrot.lane.b32.xlu0 %v102, 47
      %v432 = vpop.permute.xlu0 %431
      %433 = vrot.lane.b32.xlu0 %v103, 47
      %v434 = vpop.permute.xlu0 %433
      %435 = vrot.lane.b32.xlu0 %v104, 47
      %v436 = vpop.permute.xlu0 %435
      %437 = vrot.lane.b32.xlu0 %v105, 47
      %v438 = vpop.permute.xlu0 %437
      %439 = vrot.lane.b32.xlu0 %v106, 47
      %v440 = vpop.permute.xlu0 %439
      %441 = vrot.lane.b32.xlu0 %v107, 47
      %v442 = vpop.permute.xlu0 %441
      %443 = vrot.lane.b32.xlu0 %v108, 47
      %v444 = vpop.permute.xlu0 %443
      %445 = vrot.lane.b32.xlu0 %v109, 47
      %v446 = vpop.permute.xlu0 %445
      %447 = vrot.lane.b32.xlu0 %v110, 47
      %v448 = vpop.permute.xlu0 %447
      %449 = vrot.lane.b32.xlu0 %v111, 47
      %v450 = vpop.permute.xlu0 %449
      %451 = vrot.lane.b32.xlu0 %v112, 47
      %v452 = vpop.permute.xlu0 %451
      %453 = vrot.lane.b32.xlu0 %v113, 47
      %v454 = vpop.permute.xlu0 %453
      %455 = vrot.lane.b32.xlu0 %v226, 47
      %v456 = vpop.permute.xlu0 %455
      %vm457 = vcmask 384000
      %v458 = vsel %vm457, %v432, %v434
      %v459 = vsel %vm457, %v434, %v436
      %v460 = vsel %vm457, %v436, %v438
      %v461 = vsel %vm457, %v438, %v440
      %v462 = vsel %vm457, %v440, %v442
      %v463 = vsel %vm457, %v442, %v444
      %v464 = vsel %vm457, %v444, %v446
      %v465 = vsel %vm457, %v446, %v448
      %v466 = vsel %vm457, %v448, %v450
      %v467 = vsel %vm457, %v450, %v452
      %v468 = vsel %vm457, %v452, %v454
      %v469 = vsel %vm457, %v454, %v456
      %482 = vrot.lane.b32.xlu0 %v102, 46
      %v483 = vpop.permute.xlu0 %482
      %484 = vrot.lane.b32.xlu0 %v103, 46
      %v485 = vpop.permute.xlu0 %484
      %486 = vrot.lane.b32.xlu0 %v104, 46
      %v487 = vpop.permute.xlu0 %486
      %488 = vrot.lane.b32.xlu0 %v105, 46
      %v489 = vpop.permute.xlu0 %488
      %490 = vrot.lane.b32.xlu0 %v106, 46
      %v491 = vpop.permute.xlu0 %490
      %492 = vrot.lane.b32.xlu0 %v107, 46
      %v493 = vpop.permute.xlu0 %492
      %494 = vrot.lane.b32.xlu0 %v108, 46
      %v495 = vpop.permute.xlu0 %494
      %496 = vrot.lane.b32.xlu0 %v109, 46
      %v497 = vpop.permute.xlu0 %496
      %498 = vrot.lane.b32.xlu0 %v110, 46
      %v499 = vpop.permute.xlu0 %498
      %500 = vrot.lane.b32.xlu0 %v111, 46
      %v501 = vpop.permute.xlu0 %500
      %502 = vrot.lane.b32.xlu0 %v112, 46
      %v503 = vpop.permute.xlu0 %502
      %504 = vrot.lane.b32.xlu0 %v113, 46
      %v505 = vpop.permute.xlu0 %504
      %506 = vrot.lane.b32.xlu0 %v226, 46
      %v507 = vpop.permute.xlu0 %506
      %vm508 = vcmask 375808
      %v509 = vsel %vm508, %v483, %v485
      %v510 = vsel %vm508, %v485, %v487
      %v511 = vsel %vm508, %v487, %v489
      %v512 = vsel %vm508, %v489, %v491
      %v513 = vsel %vm508, %v491, %v493
      %v514 = vsel %vm508, %v493, %v495
      %v515 = vsel %vm508, %v495, %v497
      %v516 = vsel %vm508, %v497, %v499
      %v517 = vsel %vm508, %v499, %v501
      %v518 = vsel %vm508, %v501, %v503
      %v519 = vsel %vm508, %v503, %v505
      %v520 = vsel %vm508, %v505, %v507
      %v533 = vld [vmem:[%s1] sm:$0xff]
      %v534 = vld [vmem:[%s1 + $0x8] sm:$0xff]
      %v535 = vld [vmem:[%s2] sm:$0xff]
      %v536 = vld [vmem:[%s2 + $0x8] sm:$0xff]
      %538 = vset.pattern.permute.xlu0 0
      %539 = vperm.xlu0 %538, %v535
      %v540 = vpop.permute.xlu0 %539
      %543 = vset.pattern.permute.xlu0 0
      %544 = vperm.xlu0 %543, %v536
      %v545 = vpop.permute.xlu0 %544
      %v549 = vunpack.c.l.b16 %v533
      %v550 = vunpack.c.h.b16 %v533
      %v551 = vunpack.c.l.b16 %v534
      %v552 = vunpack.c.h.b16 %v534
      %v553 = vpack.c.b16 %v551, %v549
      %v554 = vpack.c.b16 %v552, %v550
      %vm556 = vcmask 130048
      %v558 = vsel %vm556, %v554, 0
      %560 = vmatprep.subr.bf16.mxu0 %v459
      %561 = vmatpush1.bf16.msra.mxu0 %v458
      %562 = vmatprep.subr.bf16.mxu0 %v408
      %563 = vmatpush1.bf16.msra.mxu0 %v407
      %564 = vmatprep.subr.bf16.mxu0 %v357
      %565 = vmatpush1.bf16.msra.mxu0 %v356
      %566 = vmatprep.subr.bf16.mxu0 %v306
      %567 = vmatpush1.bf16.msra.mxu0 %v305
      %568 = vmatprep.subr.bf16.mxu0 %v255
      %569 = vmatpush1.bf16.msra.mxu0 %v254
      %570 = vmatprep.subr.bf16.mxu0 %v200
      %571 = vmatpush1.bf16.msra.mxu0 %v199
      %572 = vmatprep.subr.bf16.mxu0 %v152
      %573 = vmatpush1.bf16.msra.mxu0 %v151
      %574 = vmatprep.subr.bf16.mxu0 %v103
      %575 = vmatpush1.bf16.msra.mxu0 %v102
      %576 = vmatprep.subr.bf16.mxu0 0
      %577 = vmatpush2.bf16.msra.mxu0 0
      %578 = vmatprep.subr.bf16.mxu0 0
      %579 = vmatpush2.bf16.msra.mxu0 0
      %580 = vmatprep.subr.bf16.mxu0 0
      %581 = vmatpush2.bf16.msra.mxu0 0
      %582 = vmatprep.subr.bf16.mxu0 0
      %583 = vmatpush2.bf16.msra.mxu0 0
      %584 = vmatprep.subr.bf16.mxu0 0
      %585 = vmatpush2.bf16.msra.mxu0 0
      %586 = vmatprep.subr.bf16.mxu0 0
      %587 = vmatpush2.bf16.msra.mxu0 0
      %588 = vmatprep.subr.bf16.mxu0 0
      %589 = vmatpush2.bf16.msra.mxu0 0
      %590 = vmatprep.subr.bf16.mxu0 %v510
      %591 = vmatpush2.bf16.msra.mxu0 %v509
      %592 = vmatprep.mubr.bf16.mxu0 %v558
      %593 = vmatmul.mubr.bf16.gmra.mxu0 %v553
      %v594 = vpop.f32.mrf.mxu0
      %v595 = vadd.f32 %v540, %v594
      %v596 = vpop.f32.mrf.mxu0
      %v597 = vadd.f32 %v540, %v596
      %v598 = vpop.f32.mrf.mxu0
      %v599 = vadd.f32 %v545, %v598
      %v600 = vpop.f32.mrf.mxu0
      %v601 = vadd.f32 %v545, %v600
      %602 = vdwg.mxu0
      %603 = vmatprep.subr.bf16.mxu0 %v461
      %604 = vmatpush1.bf16.msra.mxu0 %v460
      %605 = vmatprep.subr.bf16.mxu0 %v410
      %606 = vmatpush1.bf16.msra.mxu0 %v409
      %607 = vmatprep.subr.bf16.mxu0 %v359
      %608 = vmatpush1.bf16.msra.mxu0 %v358
      %609 = vmatprep.subr.bf16.mxu0 %v308
      %610 = vmatpush1.bf16.msra.mxu0 %v307
      %611 = vmatprep.subr.bf16.mxu0 %v257
      %612 = vmatpush1.bf16.msra.mxu0 %v256
      %613 = vmatprep.subr.bf16.mxu0 %v202
      %614 = vmatpush1.bf16.msra.mxu0 %v201
      %615 = vmatprep.subr.bf16.mxu0 %v154
      %616 = vmatpush1.bf16.msra.mxu0 %v153
      %617 = vmatprep.subr.bf16.mxu0 %v105
      %618 = vmatpush1.bf16.msra.mxu0 %v104
      %619 = vmatprep.subr.bf16.mxu0 0
      %620 = vmatpush2.bf16.msra.mxu0 0
      %621 = vmatprep.subr.bf16.mxu0 0
      %622 = vmatpush2.bf16.msra.mxu0 0
      %623 = vmatprep.subr.bf16.mxu0 0
      %624 = vmatpush2.bf16.msra.mxu0 0
      %625 = vmatprep.subr.bf16.mxu0 0
      %626 = vmatpush2.bf16.msra.mxu0 0
      %627 = vmatprep.subr.bf16.mxu0 0
      %628 = vmatpush2.bf16.msra.mxu0 0
      %629 = vmatprep.subr.bf16.mxu0 0
      %630 = vmatpush2.bf16.msra.mxu0 0
      %631 = vmatprep.subr.bf16.mxu0 0
      %632 = vmatpush2.bf16.msra.mxu0 0
      %633 = vmatprep.subr.bf16.mxu0 %v512
      %634 = vmatpush2.bf16.msra.mxu0 %v511
      %635 = vmatprep.mubr.bf16.mxu0 %v558
      %636 = vmatmul.mubr.bf16.gmra.mxu0 %v553
      %v637 = vpop.f32.mrf.mxu0
      %v638 = vadd.f32 %v540, %v637
      %v639 = vpop.f32.mrf.mxu0
      %v640 = vadd.f32 %v540, %v639
      %v641 = vpop.f32.mrf.mxu0
      %v642 = vadd.f32 %v545, %v641
      %v643 = vpop.f32.mrf.mxu0
      %v644 = vadd.f32 %v545, %v643
      %645 = vdwg.mxu0
      %646 = vmatprep.subr.bf16.mxu0 %v463
      %647 = vmatpush1.bf16.msra.mxu0 %v462
      %648 = vmatprep.subr.bf16.mxu0 %v412
      %649 = vmatpush1.bf16.msra.mxu0 %v411
      %650 = vmatprep.subr.bf16.mxu0 %v361
      %651 = vmatpush1.bf16.msra.mxu0 %v360
      %652 = vmatprep.subr.bf16.mxu0 %v310
      %653 = vmatpush1.bf16.msra.mxu0 %v309
      %654 = vmatprep.subr.bf16.mxu0 %v259
      %655 = vmatpush1.bf16.msra.mxu0 %v258
      %656 = vmatprep.subr.bf16.mxu0 %v204
      %657 = vmatpush1.bf16.msra.mxu0 %v203
      %658 = vmatprep.subr.bf16.mxu0 %v156
      %659 = vmatpush1.bf16.msra.mxu0 %v155
      %660 = vmatprep.subr.bf16.mxu0 %v107
      %661 = vmatpush1.bf16.msra.mxu0 %v106
      %662 = vmatprep.subr.bf16.mxu0 0
      %663 = vmatpush2.bf16.msra.mxu0 0
      %664 = vmatprep.subr.bf16.mxu0 0
      %665 = vmatpush2.bf16.msra.mxu0 0
      %666 = vmatprep.subr.bf16.mxu0 0
      %667 = vmatpush2.bf16.msra.mxu0 0
      %668 = vmatprep.subr.bf16.mxu0 0
      %669 = vmatpush2.bf16.msra.mxu0 0
      %670 = vmatprep.subr.bf16.mxu0 0
      %671 = vmatpush2.bf16.msra.mxu0 0
      %672 = vmatprep.subr.bf16.mxu0 0
      %673 = vmatpush2.bf16.msra.mxu0 0
      %674 = vmatprep.subr.bf16.mxu0 0
      %675 = vmatpush2.bf16.msra.mxu0 0
      %676 = vmatprep.subr.bf16.mxu0 %v514
      %677 = vmatpush2.bf16.msra.mxu0 %v513
      %678 = vmatprep.mubr.bf16.mxu0 %v558
      %679 = vmatmul.mubr.bf16.gmra.mxu0 %v553
      %v680 = vpop.f32.mrf.mxu0
      %v681 = vadd.f32 %v540, %v680
      %v682 = vpop.f32.mrf.mxu0
      %v683 = vadd.f32 %v540, %v682
      %v684 = vpop.f32.mrf.mxu0
      %v685 = vadd.f32 %v545, %v684
      %v686 = vpop.f32.mrf.mxu0
      %v687 = vadd.f32 %v545, %v686
      %688 = vdwg.mxu0
      %689 = vmatprep.subr.bf16.mxu0 %v465
      %690 = vmatpush1.bf16.msra.mxu0 %v464
      %691 = vmatprep.subr.bf16.mxu0 %v414
      %692 = vmatpush1.bf16.msra.mxu0 %v413
      %693 = vmatprep.subr.bf16.mxu0 %v363
      %694 = vmatpush1.bf16.msra.mxu0 %v362
      %695 = vmatprep.subr.bf16.mxu0 %v312
      %696 = vmatpush1.bf16.msra.mxu0 %v311
      %697 = vmatprep.subr.bf16.mxu0 %v261
      %698 = vmatpush1.bf16.msra.mxu0 %v260
      %699 = vmatprep.subr.bf16.mxu0 %v206
      %700 = vmatpush1.bf16.msra.mxu0 %v205
      %701 = vmatprep.subr.bf16.mxu0 %v158
      %702 = vmatpush1.bf16.msra.mxu0 %v157
      %703 = vmatprep.subr.bf16.mxu0 %v109
      %704 = vmatpush1.bf16.msra.mxu0 %v108
      %705 = vmatprep.subr.bf16.mxu0 0
      %706 = vmatpush2.bf16.msra.mxu0 0
      %707 = vmatprep.subr.bf16.mxu0 0
      %708 = vmatpush2.bf16.msra.mxu0 0
      %709 = vmatprep.subr.bf16.mxu0 0
      %710 = vmatpush2.bf16.msra.mxu0 0
      %711 = vmatprep.subr.bf16.mxu0 0
      %712 = vmatpush2.bf16.msra.mxu0 0
      %713 = vmatprep.subr.bf16.mxu0 0
      %714 = vmatpush2.bf16.msra.mxu0 0
      %715 = vmatprep.subr.bf16.mxu0 0
      %716 = vmatpush2.bf16.msra.mxu0 0
      %717 = vmatprep.subr.bf16.mxu0 0
      %718 = vmatpush2.bf16.msra.mxu0 0
      %719 = vmatprep.subr.bf16.mxu0 %v516
      %720 = vmatpush2.bf16.msra.mxu0 %v515
      %721 = vmatprep.mubr.bf16.mxu0 %v558
      %722 = vmatmul.mubr.bf16.gmra.mxu0 %v553
      %v723 = vpop.f32.mrf.mxu0
      %v724 = vadd.f32 %v540, %v723
      %v725 = vpop.f32.mrf.mxu0
      %v726 = vadd.f32 %v540, %v725
      %v727 = vpop.f32.mrf.mxu0
      %v728 = vadd.f32 %v545, %v727
      %v729 = vpop.f32.mrf.mxu0
      %v730 = vadd.f32 %v545, %v729
      %731 = vdwg.mxu0
      %732 = vmatprep.subr.bf16.mxu0 %v467
      %733 = vmatpush1.bf16.msra.mxu0 %v466
      %734 = vmatprep.subr.bf16.mxu0 %v416
      %735 = vmatpush1.bf16.msra.mxu0 %v415
      %736 = vmatprep.subr.bf16.mxu0 %v365
      %737 = vmatpush1.bf16.msra.mxu0 %v364
      %738 = vmatprep.subr.bf16.mxu0 %v314
      %739 = vmatpush1.bf16.msra.mxu0 %v313
      %740 = vmatprep.subr.bf16.mxu0 %v263
      %741 = vmatpush1.bf16.msra.mxu0 %v262
      %742 = vmatprep.subr.bf16.mxu0 %v208
      %743 = vmatpush1.bf16.msra.mxu0 %v207
      %744 = vmatprep.subr.bf16.mxu0 %v160
      %745 = vmatpush1.bf16.msra.mxu0 %v159
      %746 = vmatprep.subr.bf16.mxu0 %v111
      %747 = vmatpush1.bf16.msra.mxu0 %v110
      %748 = vmatprep.subr.bf16.mxu0 0
      %749 = vmatpush2.bf16.msra.mxu0 0
      %750 = vmatprep.subr.bf16.mxu0 0
      %751 = vmatpush2.bf16.msra.mxu0 0
      %752 = vmatprep.subr.bf16.mxu0 0
      %753 = vmatpush2.bf16.msra.mxu0 0
      %754 = vmatprep.subr.bf16.mxu0 0
      %755 = vmatpush2.bf16.msra.mxu0 0
      %756 = vmatprep.subr.bf16.mxu0 0
      %757 = vmatpush2.bf16.msra.mxu0 0
      %758 = vmatprep.subr.bf16.mxu0 0
      %759 = vmatpush2.bf16.msra.mxu0 0
      %760 = vmatprep.subr.bf16.mxu0 0
      %761 = vmatpush2.bf16.msra.mxu0 0
      %762 = vmatprep.subr.bf16.mxu0 %v518
      %763 = vmatpush2.bf16.msra.mxu0 %v517
      %764 = vmatprep.mubr.bf16.mxu0 %v558
      %765 = vmatmul.mubr.bf16.gmra.mxu0 %v553
      %v766 = vpop.f32.mrf.mxu0
      %v767 = vadd.f32 %v540, %v766
      %v768 = vpop.f32.mrf.mxu0
      %v769 = vadd.f32 %v540, %v768
      %v770 = vpop.f32.mrf.mxu0
      %v771 = vadd.f32 %v545, %v770
      %v772 = vpop.f32.mrf.mxu0
      %v773 = vadd.f32 %v545, %v772
      %774 = vdwg.mxu0
      %775 = vmatprep.subr.bf16.mxu0 %v469
      %776 = vmatpush1.bf16.msra.mxu0 %v468
      %777 = vmatprep.subr.bf16.mxu0 %v418
      %778 = vmatpush1.bf16.msra.mxu0 %v417
      %779 = vmatprep.subr.bf16.mxu0 %v367
      %780 = vmatpush1.bf16.msra.mxu0 %v366
      %781 = vmatprep.subr.bf16.mxu0 %v316
      %782 = vmatpush1.bf16.msra.mxu0 %v315
      %783 = vmatprep.subr.bf16.mxu0 %v265
      %784 = vmatpush1.bf16.msra.mxu0 %v264
      %785 = vmatprep.subr.bf16.mxu0 %v197
      %786 = vmatpush1.bf16.msra.mxu0 %v209
      %787 = vmatprep.subr.bf16.mxu0 %v149
      %788 = vmatpush1.bf16.msra.mxu0 %v161
      %789 = vmatprep.subr.bf16.mxu0 %v113
      %790 = vmatpush1.bf16.msra.mxu0 %v112
      %791 = vmatprep.subr.bf16.mxu0 0
      %792 = vmatpush2.bf16.msra.mxu0 0
      %793 = vmatprep.subr.bf16.mxu0 0
      %794 = vmatpush2.bf16.msra.mxu0 0
      %795 = vmatprep.subr.bf16.mxu0 0
      %796 = vmatpush2.bf16.msra.mxu0 0
      %797 = vmatprep.subr.bf16.mxu0 0
      %798 = vmatpush2.bf16.msra.mxu0 0
      %799 = vmatprep.subr.bf16.mxu0 0
      %800 = vmatpush2.bf16.msra.mxu0 0
      %801 = vmatprep.subr.bf16.mxu0 0
      %802 = vmatpush2.bf16.msra.mxu0 0
      %803 = vmatprep.subr.bf16.mxu0 0
      %804 = vmatpush2.bf16.msra.mxu0 0
      %805 = vmatprep.subr.bf16.mxu0 %v520
      %806 = vmatpush2.bf16.msra.mxu0 %v519
      %807 = vmatprep.mubr.bf16.mxu0 %v558
      %808 = vmatmul.mubr.bf16.gmra.mxu0 %v553
      %v809 = vpop.f32.mrf.mxu0
      %v810 = vadd.f32 %v540, %v809
      %v811 = vpop.f32.mrf.mxu0
      %v812 = vadd.f32 %v540, %v811
      %v813 = vpop.f32.mrf.mxu0
      %v814 = vadd.f32 %v545, %v813
      %v815 = vpop.f32.mrf.mxu0
      %v816 = vadd.f32 %v545, %v815
      %817 = vdwg.mxu0
      %v818 = vpack.c.bf16 %v599, %v595
      %v819 = vpack.c.bf16 %v601, %v597
      %v820 = vpack.c.bf16 %v642, %v638
      %v821 = vpack.c.bf16 %v644, %v640
      %v822 = vpack.c.bf16 %v685, %v681
      %v823 = vpack.c.bf16 %v687, %v683
      %v824 = vpack.c.bf16 %v728, %v724
      %v825 = vpack.c.bf16 %v730, %v726
      %v826 = vpack.c.bf16 %v771, %v767
      %v827 = vpack.c.bf16 %v773, %v769
      %v828 = vpack.c.bf16 %v814, %v810
      %v829 = vpack.c.bf16 %v816, %v812
      %842 = vrot.lane.b32.xlu0 %v818, 127
      %v843 = vpop.permute.xlu0 %842
      %844 = vrot.lane.b32.xlu0 %v819, 127
      %v845 = vpop.permute.xlu0 %844
      %846 = vrot.lane.b32.xlu0 %v820, 127
      %v847 = vpop.permute.xlu0 %846
      %848 = vrot.lane.b32.xlu0 %v821, 127
      %v849 = vpop.permute.xlu0 %848
      %850 = vrot.lane.b32.xlu0 %v822, 127
      %v851 = vpop.permute.xlu0 %850
      %852 = vrot.lane.b32.xlu0 %v823, 127
      %v853 = vpop.permute.xlu0 %852
      %854 = vrot.lane.b32.xlu0 %v824, 127
      %v855 = vpop.permute.xlu0 %854
      %856 = vrot.lane.b32.xlu0 %v825, 127
      %v857 = vpop.permute.xlu0 %856
      %858 = vrot.lane.b32.xlu0 %v826, 127
      %v859 = vpop.permute.xlu0 %858
      %860 = vrot.lane.b32.xlu0 %v827, 127
      %v861 = vpop.permute.xlu0 %860
      %862 = vrot.lane.b32.xlu0 %v828, 127
      %v863 = vpop.permute.xlu0 %862
      %864 = vrot.lane.b32.xlu0 %v829, 127
      %v865 = vpop.permute.xlu0 %864
      %v866 = vsel %vm150, %v843, %v845
      %v867 = vsel %vm150, %v845, %v847
      %v868 = vsel %vm150, %v847, %v849
      %v869 = vsel %vm150, %v849, %v851
      %v870 = vsel %vm150, %v851, %v853
      %v871 = vsel %vm150, %v853, %v855
      %v872 = vsel %vm150, %v855, %v857
      %v873 = vsel %vm150, %v857, %v859
      %v874 = vsel %vm150, %v859, %v861
      %v875 = vsel %vm150, %v861, %v863
      %v876 = vsel %vm150, %v863, %v865
      %889 = vrot.lane.b32.xlu0 %v818, 126
      %v890 = vpop.permute.xlu0 %889
      %891 = vrot.lane.b32.xlu0 %v819, 126
      %v892 = vpop.permute.xlu0 %891
      %893 = vrot.lane.b32.xlu0 %v820, 126
      %v894 = vpop.permute.xlu0 %893
      %895 = vrot.lane.b32.xlu0 %v821, 126
      %v896 = vpop.permute.xlu0 %895
      %897 = vrot.lane.b32.xlu0 %v822, 126
      %v898 = vpop.permute.xlu0 %897
      %899 = vrot.lane.b32.xlu0 %v823, 126
      %v900 = vpop.permute.xlu0 %899
      %901 = vrot.lane.b32.xlu0 %v824, 126
      %v902 = vpop.permute.xlu0 %901
      %903 = vrot.lane.b32.xlu0 %v825, 126
      %v904 = vpop.permute.xlu0 %903
      %905 = vrot.lane.b32.xlu0 %v826, 126
      %v906 = vpop.permute.xlu0 %905
      %907 = vrot.lane.b32.xlu0 %v827, 126
      %v908 = vpop.permute.xlu0 %907
      %909 = vrot.lane.b32.xlu0 %v828, 126
      %v910 = vpop.permute.xlu0 %909
      %911 = vrot.lane.b32.xlu0 %v829, 126
      %v912 = vpop.permute.xlu0 %911
      %v913 = vsel %vm198, %v890, %v892
      %v914 = vsel %vm198, %v892, %v894
      %v915 = vsel %vm198, %v894, %v896
      %v916 = vsel %vm198, %v896, %v898
      %v917 = vsel %vm198, %v898, %v900
      %v918 = vsel %vm198, %v900, %v902
      %v919 = vsel %vm198, %v902, %v904
      %v920 = vsel %vm198, %v904, %v906
      %v921 = vsel %vm198, %v906, %v908
      %v922 = vsel %vm198, %v908, %v910
      %v923 = vsel %vm198, %v910, %v912
      %936 = vrot.lane.b32.xlu0 %v818, 88
      %v937 = vpop.permute.xlu0 %936
      %938 = vrot.lane.b32.xlu0 %v819, 88
      %v939 = vpop.permute.xlu0 %938
      %940 = vrot.lane.b32.xlu0 %v820, 88
      %v941 = vpop.permute.xlu0 %940
      %942 = vrot.lane.b32.xlu0 %v821, 88
      %v943 = vpop.permute.xlu0 %942
      %944 = vrot.lane.b32.xlu0 %v822, 88
      %v945 = vpop.permute.xlu0 %944
      %946 = vrot.lane.b32.xlu0 %v823, 88
      %v947 = vpop.permute.xlu0 %946
      %948 = vrot.lane.b32.xlu0 %v824, 88
      %v949 = vpop.permute.xlu0 %948
      %950 = vrot.lane.b32.xlu0 %v825, 88
      %v951 = vpop.permute.xlu0 %950
      %952 = vrot.lane.b32.xlu0 %v826, 88
      %v953 = vpop.permute.xlu0 %952
      %954 = vrot.lane.b32.xlu0 %v827, 88
      %v955 = vpop.permute.xlu0 %954
      %956 = vrot.lane.b32.xlu0 %v828, 88
      %v957 = vpop.permute.xlu0 %956
      %958 = vrot.lane.b32.xlu0 %v829, 88
      %v959 = vpop.permute.xlu0 %958
      %v960 = vsel %vm253, %v937, %v939
      %v961 = vsel %vm253, %v939, %v941
      %v962 = vsel %vm253, %v941, %v943
      %v963 = vsel %vm253, %v943, %v945
      %v964 = vsel %vm253, %v945, %v947
      %v965 = vsel %vm253, %v947, %v949
      %v966 = vsel %vm253, %v949, %v951
      %v967 = vsel %vm253, %v951, %v953
      %v968 = vsel %vm253, %v953, %v955
      %v969 = vsel %vm253, %v955, %v957
      %v970 = vsel %vm253, %v957, %v959
      %983 = vrot.lane.b32.xlu0 %v818, 87
      %v984 = vpop.permute.xlu0 %983
      %985 = vrot.lane.b32.xlu0 %v819, 87
      %v986 = vpop.permute.xlu0 %985
      %987 = vrot.lane.b32.xlu0 %v820, 87
      %v988 = vpop.permute.xlu0 %987
      %989 = vrot.lane.b32.xlu0 %v821, 87
      %v990 = vpop.permute.xlu0 %989
      %991 = vrot.lane.b32.xlu0 %v822, 87
      %v992 = vpop.permute.xlu0 %991
      %993 = vrot.lane.b32.xlu0 %v823, 87
      %v994 = vpop.permute.xlu0 %993
      %995 = vrot.lane.b32.xlu0 %v824, 87
      %v996 = vpop.permute.xlu0 %995
      %997 = vrot.lane.b32.xlu0 %v825, 87
      %v998 = vpop.permute.xlu0 %997
      %999 = vrot.lane.b32.xlu0 %v826, 87
      %v1000 = vpop.permute.xlu0 %999
      %1001 = vrot.lane.b32.xlu0 %v827, 87
      %v1002 = vpop.permute.xlu0 %1001
      %1003 = vrot.lane.b32.xlu0 %v828, 87
      %v1004 = vpop.permute.xlu0 %1003
      %1005 = vrot.lane.b32.xlu0 %v829, 87
      %v1006 = vpop.permute.xlu0 %1005
      %v1007 = vsel %vm304, %v984, %v986
      %v1008 = vsel %vm304, %v986, %v988
      %v1009 = vsel %vm304, %v988, %v990
      %v1010 = vsel %vm304, %v990, %v992
      %v1011 = vsel %vm304, %v992, %v994
      %v1012 = vsel %vm304, %v994, %v996
      %v1013 = vsel %vm304, %v996, %v998
      %v1014 = vsel %vm304, %v998, %v1000
      %v1015 = vsel %vm304, %v1000, %v1002
      %v1016 = vsel %vm304, %v1002, %v1004
      %v1017 = vsel %vm304, %v1004, %v1006
      %1030 = vrot.lane.b32.xlu0 %v818, 86
      %v1031 = vpop.permute.xlu0 %1030
      %1032 = vrot.lane.b32.xlu0 %v819, 86
      %v1033 = vpop.permute.xlu0 %1032
      %1034 = vrot.lane.b32.xlu0 %v820, 86
      %v1035 = vpop.permute.xlu0 %1034
      %1036 = vrot.lane.b32.xlu0 %v821, 86
      %v1037 = vpop.permute.xlu0 %1036
      %1038 = vrot.lane.b32.xlu0 %v822, 86
      %v1039 = vpop.permute.xlu0 %1038
      %1040 = vrot.lane.b32.xlu0 %v823, 86
      %v1041 = vpop.permute.xlu0 %1040
      %1042 = vrot.lane.b32.xlu0 %v824, 86
      %v1043 = vpop.permute.xlu0 %1042
      %1044 = vrot.lane.b32.xlu0 %v825, 86
      %v1045 = vpop.permute.xlu0 %1044
      %1046 = vrot.lane.b32.xlu0 %v826, 86
      %v1047 = vpop.permute.xlu0 %1046
      %1048 = vrot.lane.b32.xlu0 %v827, 86
      %v1049 = vpop.permute.xlu0 %1048
      %1050 = vrot.lane.b32.xlu0 %v828, 86
      %v1051 = vpop.permute.xlu0 %1050
      %1052 = vrot.lane.b32.xlu0 %v829, 86
      %v1053 = vpop.permute.xlu0 %1052
      %v1054 = vsel %vm355, %v1031, %v1033
      %v1055 = vsel %vm355, %v1033, %v1035
      %v1056 = vsel %vm355, %v1035, %v1037
      %v1057 = vsel %vm355, %v1037, %v1039
      %v1058 = vsel %vm355, %v1039, %v1041
      %v1059 = vsel %vm355, %v1041, %v1043
      %v1060 = vsel %vm355, %v1043, %v1045
      %v1061 = vsel %vm355, %v1045, %v1047
      %v1062 = vsel %vm355, %v1047, %v1049
      %v1063 = vsel %vm355, %v1049, %v1051
      %v1064 = vsel %vm355, %v1051, %v1053
      %1077 = vrot.lane.b32.xlu0 %v818, 48
      %v1078 = vpop.permute.xlu0 %1077
      %1079 = vrot.lane.b32.xlu0 %v819, 48
      %v1080 = vpop.permute.xlu0 %1079
      %1081 = vrot.lane.b32.xlu0 %v820, 48
      %v1082 = vpop.permute.xlu0 %1081
      %1083 = vrot.lane.b32.xlu0 %v821, 48
      %v1084 = vpop.permute.xlu0 %1083
      %1085 = vrot.lane.b32.xlu0 %v822, 48
      %v1086 = vpop.permute.xlu0 %1085
      %1087 = vrot.lane.b32.xlu0 %v823, 48
      %v1088 = vpop.permute.xlu0 %1087
      %1089 = vrot.lane.b32.xlu0 %v824, 48
      %v1090 = vpop.permute.xlu0 %1089
      %1091 = vrot.lane.b32.xlu0 %v825, 48
      %v1092 = vpop.permute.xlu0 %1091
      %1093 = vrot.lane.b32.xlu0 %v826, 48
      %v1094 = vpop.permute.xlu0 %1093
      %1095 = vrot.lane.b32.xlu0 %v827, 48
      %v1096 = vpop.permute.xlu0 %1095
      %1097 = vrot.lane.b32.xlu0 %v828, 48
      %v1098 = vpop.permute.xlu0 %1097
      %1099 = vrot.lane.b32.xlu0 %v829, 48
      %v1100 = vpop.permute.xlu0 %1099
      %v1101 = vsel %vm406, %v1078, %v1080
      %v1102 = vsel %vm406, %v1080, %v1082
      %v1103 = vsel %vm406, %v1082, %v1084
      %v1104 = vsel %vm406, %v1084, %v1086
      %v1105 = vsel %vm406, %v1086, %v1088
      %v1106 = vsel %vm406, %v1088, %v1090
      %v1107 = vsel %vm406, %v1090, %v1092
      %v1108 = vsel %vm406, %v1092, %v1094
      %v1109 = vsel %vm406, %v1094, %v1096
      %v1110 = vsel %vm406, %v1096, %v1098
      %v1111 = vsel %vm406, %v1098, %v1100
      %1124 = vrot.lane.b32.xlu0 %v818, 47
      %v1125 = vpop.permute.xlu0 %1124
      %1126 = vrot.lane.b32.xlu0 %v819, 47
      %v1127 = vpop.permute.xlu0 %1126
      %1128 = vrot.lane.b32.xlu0 %v820, 47
      %v1129 = vpop.permute.xlu0 %1128
      %1130 = vrot.lane.b32.xlu0 %v821, 47
      %v1131 = vpop.permute.xlu0 %1130
      %1132 = vrot.lane.b32.xlu0 %v822, 47
      %v1133 = vpop.permute.xlu0 %1132
      %1134 = vrot.lane.b32.xlu0 %v823, 47
      %v1135 = vpop.permute.xlu0 %1134
      %1136 = vrot.lane.b32.xlu0 %v824, 47
      %v1137 = vpop.permute.xlu0 %1136
      %1138 = vrot.lane.b32.xlu0 %v825, 47
      %v1139 = vpop.permute.xlu0 %1138
      %1140 = vrot.lane.b32.xlu0 %v826, 47
      %v1141 = vpop.permute.xlu0 %1140
      %1142 = vrot.lane.b32.xlu0 %v827, 47
      %v1143 = vpop.permute.xlu0 %1142
      %1144 = vrot.lane.b32.xlu0 %v828, 47
      %v1145 = vpop.permute.xlu0 %1144
      %1146 = vrot.lane.b32.xlu0 %v829, 47
      %v1147 = vpop.permute.xlu0 %1146
      %v1148 = vsel %vm457, %v1125, %v1127
      %v1149 = vsel %vm457, %v1127, %v1129
      %v1150 = vsel %vm457, %v1129, %v1131
      %v1151 = vsel %vm457, %v1131, %v1133
      %v1152 = vsel %vm457, %v1133, %v1135
      %v1153 = vsel %vm457, %v1135, %v1137
      %v1154 = vsel %vm457, %v1137, %v1139
      %v1155 = vsel %vm457, %v1139, %v1141
      %v1156 = vsel %vm457, %v1141, %v1143
      %v1157 = vsel %vm457, %v1143, %v1145
      %v1158 = vsel %vm457, %v1145, %v1147
      %1171 = vrot.lane.b32.xlu0 %v818, 46
      %v1172 = vpop.permute.xlu0 %1171
      %1173 = vrot.lane.b32.xlu0 %v819, 46
      %v1174 = vpop.permute.xlu0 %1173
      %1175 = vrot.lane.b32.xlu0 %v820, 46
      %v1176 = vpop.permute.xlu0 %1175
      %1177 = vrot.lane.b32.xlu0 %v821, 46
      %v1178 = vpop.permute.xlu0 %1177
      %1179 = vrot.lane.b32.xlu0 %v822, 46
      %v1180 = vpop.permute.xlu0 %1179
      %1181 = vrot.lane.b32.xlu0 %v823, 46
      %v1182 = vpop.permute.xlu0 %1181
      %1183 = vrot.lane.b32.xlu0 %v824, 46
      %v1184 = vpop.permute.xlu0 %1183
      %1185 = vrot.lane.b32.xlu0 %v825, 46
      %v1186 = vpop.permute.xlu0 %1185
      %1187 = vrot.lane.b32.xlu0 %v826, 46
      %v1188 = vpop.permute.xlu0 %1187
      %1189 = vrot.lane.b32.xlu0 %v827, 46
      %v1190 = vpop.permute.xlu0 %1189
      %1191 = vrot.lane.b32.xlu0 %v828, 46
      %v1192 = vpop.permute.xlu0 %1191
      %1193 = vrot.lane.b32.xlu0 %v829, 46
      %v1194 = vpop.permute.xlu0 %1193
      %v1195 = vsel %vm508, %v1172, %v1174
      %v1196 = vsel %vm508, %v1174, %v1176
      %v1197 = vsel %vm508, %v1176, %v1178
      %v1198 = vsel %vm508, %v1178, %v1180
      %v1199 = vsel %vm508, %v1180, %v1182
      %v1200 = vsel %vm508, %v1182, %v1184
      %v1201 = vsel %vm508, %v1184, %v1186
      %v1202 = vsel %vm508, %v1186, %v1188
      %v1203 = vsel %vm508, %v1188, %v1190
      %v1204 = vsel %vm508, %v1190, %v1192
      %v1205 = vsel %vm508, %v1192, %v1194
      %v1218 = vld [vmem:[%s3] sm:$0xff]
      %v1219 = vld [vmem:[%s3 + $0x8] sm:$0xff]
      %v1220 = vld [vmem:[%s4] sm:$0xff]
      %v1221 = vld [vmem:[%s4 + $0x8] sm:$0xff]
      %1223 = vset.pattern.permute.xlu0 0
      %1224 = vperm.xlu0 %1223, %v1220
      %v1225 = vpop.permute.xlu0 %1224
      %1228 = vset.pattern.permute.xlu0 0
      %1229 = vperm.xlu0 %1228, %v1221
      %v1230 = vpop.permute.xlu0 %1229
      %v1234 = vunpack.c.l.b16 %v1218
      %v1235 = vunpack.c.h.b16 %v1218
      %v1236 = vunpack.c.l.b16 %v1219
      %v1237 = vunpack.c.h.b16 %v1219
      %v1238 = vpack.c.b16 %v1236, %v1234
      %v1239 = vpack.c.b16 %v1237, %v1235
      %v1242 = vsel %vm556, %v1239, 0
      %1244 = vmatprep.subr.bf16.mxu0 %v1149
      %1245 = vmatpush1.bf16.msra.mxu0 %v1148
      %1246 = vmatprep.subr.bf16.mxu0 %v1102
      %1247 = vmatpush1.bf16.msra.mxu0 %v1101
      %1248 = vmatprep.subr.bf16.mxu0 %v1055
      %1249 = vmatpush1.bf16.msra.mxu0 %v1054
      %1250 = vmatprep.subr.bf16.mxu0 %v1008
      %1251 = vmatpush1.bf16.msra.mxu0 %v1007
      %1252 = vmatprep.subr.bf16.mxu0 %v961
      %1253 = vmatpush1.bf16.msra.mxu0 %v960
      %1254 = vmatprep.subr.bf16.mxu0 %v914
      %1255 = vmatpush1.bf16.msra.mxu0 %v913
      %1256 = vmatprep.subr.bf16.mxu0 %v867
      %1257 = vmatpush1.bf16.msra.mxu0 %v866
      %1258 = vmatprep.subr.bf16.mxu0 %v819
      %1259 = vmatpush1.bf16.msra.mxu0 %v818
      %1260 = vmatprep.subr.bf16.mxu0 0
      %1261 = vmatpush2.bf16.msra.mxu0 0
      %1262 = vmatprep.subr.bf16.mxu0 0
      %1263 = vmatpush2.bf16.msra.mxu0 0
      %1264 = vmatprep.subr.bf16.mxu0 0
      %1265 = vmatpush2.bf16.msra.mxu0 0
      %1266 = vmatprep.subr.bf16.mxu0 0
      %1267 = vmatpush2.bf16.msra.mxu0 0
      %1268 = vmatprep.subr.bf16.mxu0 0
      %1269 = vmatpush2.bf16.msra.mxu0 0
      %1270 = vmatprep.subr.bf16.mxu0 0
      %1271 = vmatpush2.bf16.msra.mxu0 0
      %1272 = vmatprep.subr.bf16.mxu0 0
      %1273 = vmatpush2.bf16.msra.mxu0 0
      %1274 = vmatprep.subr.bf16.mxu0 %v1196
      %1275 = vmatpush2.bf16.msra.mxu0 %v1195
      %1276 = vmatprep.mubr.bf16.mxu0 %v1242
      %1277 = vmatmul.mubr.bf16.gmra.mxu0 %v1238
      %v1278 = vpop.f32.mrf.mxu0
      %v1279 = vadd.f32 %v1225, %v1278
      %v1280 = vpop.f32.mrf.mxu0
      %v1281 = vadd.f32 %v1225, %v1280
      %v1282 = vpop.f32.mrf.mxu0
      %v1283 = vadd.f32 %v1230, %v1282
      %v1284 = vpop.f32.mrf.mxu0
      %v1285 = vadd.f32 %v1230, %v1284
      %1286 = vdwg.mxu0
      %1287 = vmatprep.subr.bf16.mxu0 %v1151
      %1288 = vmatpush1.bf16.msra.mxu0 %v1150
      %1289 = vmatprep.subr.bf16.mxu0 %v1104
      %1290 = vmatpush1.bf16.msra.mxu0 %v1103
      %1291 = vmatprep.subr.bf16.mxu0 %v1057
      %1292 = vmatpush1.bf16.msra.mxu0 %v1056
      %1293 = vmatprep.subr.bf16.mxu0 %v1010
      %1294 = vmatpush1.bf16.msra.mxu0 %v1009
      %1295 = vmatprep.subr.bf16.mxu0 %v963
      %1296 = vmatpush1.bf16.msra.mxu0 %v962
      %1297 = vmatprep.subr.bf16.mxu0 %v916
      %1298 = vmatpush1.bf16.msra.mxu0 %v915
      %1299 = vmatprep.subr.bf16.mxu0 %v869
      %1300 = vmatpush1.bf16.msra.mxu0 %v868
      %1301 = vmatprep.subr.bf16.mxu0 %v821
      %1302 = vmatpush1.bf16.msra.mxu0 %v820
      %1303 = vmatprep.subr.bf16.mxu0 0
      %1304 = vmatpush2.bf16.msra.mxu0 0
      %1305 = vmatprep.subr.bf16.mxu0 0
      %1306 = vmatpush2.bf16.msra.mxu0 0
      %1307 = vmatprep.subr.bf16.mxu0 0
      %1308 = vmatpush2.bf16.msra.mxu0 0
      %1309 = vmatprep.subr.bf16.mxu0 0
      %1310 = vmatpush2.bf16.msra.mxu0 0
      %1311 = vmatprep.subr.bf16.mxu0 0
      %1312 = vmatpush2.bf16.msra.mxu0 0
      %1313 = vmatprep.subr.bf16.mxu0 0
      %1314 = vmatpush2.bf16.msra.mxu0 0
      %1315 = vmatprep.subr.bf16.mxu0 0
      %1316 = vmatpush2.bf16.msra.mxu0 0
      %1317 = vmatprep.subr.bf16.mxu0 %v1198
      %1318 = vmatpush2.bf16.msra.mxu0 %v1197
      %1319 = vmatprep.mubr.bf16.mxu0 %v1242
      %1320 = vmatmul.mubr.bf16.gmra.mxu0 %v1238
      %v1321 = vpop.f32.mrf.mxu0
      %v1322 = vadd.f32 %v1225, %v1321
      %v1323 = vpop.f32.mrf.mxu0
      %v1324 = vadd.f32 %v1225, %v1323
      %v1325 = vpop.f32.mrf.mxu0
      %v1326 = vadd.f32 %v1230, %v1325
      %v1327 = vpop.f32.mrf.mxu0
      %v1328 = vadd.f32 %v1230, %v1327
      %1329 = vdwg.mxu0
      %1330 = vmatprep.subr.bf16.mxu0 %v1153
      %1331 = vmatpush1.bf16.msra.mxu0 %v1152
      %1332 = vmatprep.subr.bf16.mxu0 %v1106
      %1333 = vmatpush1.bf16.msra.mxu0 %v1105
      %1334 = vmatprep.subr.bf16.mxu0 %v1059
      %1335 = vmatpush1.bf16.msra.mxu0 %v1058
      %1336 = vmatprep.subr.bf16.mxu0 %v1012
      %1337 = vmatpush1.bf16.msra.mxu0 %v1011
      %1338 = vmatprep.subr.bf16.mxu0 %v965
      %1339 = vmatpush1.bf16.msra.mxu0 %v964
      %1340 = vmatprep.subr.bf16.mxu0 %v918
      %1341 = vmatpush1.bf16.msra.mxu0 %v917
      %1342 = vmatprep.subr.bf16.mxu0 %v871
      %1343 = vmatpush1.bf16.msra.mxu0 %v870
      %1344 = vmatprep.subr.bf16.mxu0 %v823
      %1345 = vmatpush1.bf16.msra.mxu0 %v822
      %1346 = vmatprep.subr.bf16.mxu0 0
      %1347 = vmatpush2.bf16.msra.mxu0 0
      %1348 = vmatprep.subr.bf16.mxu0 0
      %1349 = vmatpush2.bf16.msra.mxu0 0
      %1350 = vmatprep.subr.bf16.mxu0 0
      %1351 = vmatpush2.bf16.msra.mxu0 0
      %1352 = vmatprep.subr.bf16.mxu0 0
      %1353 = vmatpush2.bf16.msra.mxu0 0
      %1354 = vmatprep.subr.bf16.mxu0 0
      %1355 = vmatpush2.bf16.msra.mxu0 0
      %1356 = vmatprep.subr.bf16.mxu0 0
      %1357 = vmatpush2.bf16.msra.mxu0 0
      %1358 = vmatprep.subr.bf16.mxu0 0
      %1359 = vmatpush2.bf16.msra.mxu0 0
      %1360 = vmatprep.subr.bf16.mxu0 %v1200
      %1361 = vmatpush2.bf16.msra.mxu0 %v1199
      %1362 = vmatprep.mubr.bf16.mxu0 %v1242
      %1363 = vmatmul.mubr.bf16.gmra.mxu0 %v1238
      %v1364 = vpop.f32.mrf.mxu0
      %v1365 = vadd.f32 %v1225, %v1364
      %v1366 = vpop.f32.mrf.mxu0
      %v1367 = vadd.f32 %v1225, %v1366
      %v1368 = vpop.f32.mrf.mxu0
      %v1369 = vadd.f32 %v1230, %v1368
      %v1370 = vpop.f32.mrf.mxu0
      %v1371 = vadd.f32 %v1230, %v1370
      %1372 = vdwg.mxu0
      %1373 = vmatprep.subr.bf16.mxu0 %v1155
      %1374 = vmatpush1.bf16.msra.mxu0 %v1154
      %1375 = vmatprep.subr.bf16.mxu0 %v1108
      %1376 = vmatpush1.bf16.msra.mxu0 %v1107
      %1377 = vmatprep.subr.bf16.mxu0 %v1061
      %1378 = vmatpush1.bf16.msra.mxu0 %v1060
      %1379 = vmatprep.subr.bf16.mxu0 %v1014
      %1380 = vmatpush1.bf16.msra.mxu0 %v1013
      %1381 = vmatprep.subr.bf16.mxu0 %v967
      %1382 = vmatpush1.bf16.msra.mxu0 %v966
      %1383 = vmatprep.subr.bf16.mxu0 %v920
      %1384 = vmatpush1.bf16.msra.mxu0 %v919
      %1385 = vmatprep.subr.bf16.mxu0 %v873
      %1386 = vmatpush1.bf16.msra.mxu0 %v872
      %1387 = vmatprep.subr.bf16.mxu0 %v825
      %1388 = vmatpush1.bf16.msra.mxu0 %v824
      %1389 = vmatprep.subr.bf16.mxu0 0
      %1390 = vmatpush2.bf16.msra.mxu0 0
      %1391 = vmatprep.subr.bf16.mxu0 0
      %1392 = vmatpush2.bf16.msra.mxu0 0
      %1393 = vmatprep.subr.bf16.mxu0 0
      %1394 = vmatpush2.bf16.msra.mxu0 0
      %1395 = vmatprep.subr.bf16.mxu0 0
      %1396 = vmatpush2.bf16.msra.mxu0 0
      %1397 = vmatprep.subr.bf16.mxu0 0
      %1398 = vmatpush2.bf16.msra.mxu0 0
      %1399 = vmatprep.subr.bf16.mxu0 0
      %1400 = vmatpush2.bf16.msra.mxu0 0
      %1401 = vmatprep.subr.bf16.mxu0 0
      %1402 = vmatpush2.bf16.msra.mxu0 0
      %1403 = vmatprep.subr.bf16.mxu0 %v1202
      %1404 = vmatpush2.bf16.msra.mxu0 %v1201
      %1405 = vmatprep.mubr.bf16.mxu0 %v1242
      %1406 = vmatmul.mubr.bf16.gmra.mxu0 %v1238
      %v1407 = vpop.f32.mrf.mxu0
      %v1408 = vadd.f32 %v1225, %v1407
      %v1409 = vpop.f32.mrf.mxu0
      %v1410 = vadd.f32 %v1225, %v1409
      %v1411 = vpop.f32.mrf.mxu0
      %v1412 = vadd.f32 %v1230, %v1411
      %v1413 = vpop.f32.mrf.mxu0
      %v1414 = vadd.f32 %v1230, %v1413
      %1415 = vdwg.mxu0
      %1416 = vmatprep.subr.bf16.mxu0 %v1157
      %1417 = vmatpush1.bf16.msra.mxu0 %v1156
      %1418 = vmatprep.subr.bf16.mxu0 %v1110
      %1419 = vmatpush1.bf16.msra.mxu0 %v1109
      %1420 = vmatprep.subr.bf16.mxu0 %v1063
      %1421 = vmatpush1.bf16.msra.mxu0 %v1062
      %1422 = vmatprep.subr.bf16.mxu0 %v1016
      %1423 = vmatpush1.bf16.msra.mxu0 %v1015
      %1424 = vmatprep.subr.bf16.mxu0 %v969
      %1425 = vmatpush1.bf16.msra.mxu0 %v968
      %1426 = vmatprep.subr.bf16.mxu0 %v922
      %1427 = vmatpush1.bf16.msra.mxu0 %v921
      %1428 = vmatprep.subr.bf16.mxu0 %v875
      %1429 = vmatpush1.bf16.msra.mxu0 %v874
      %1430 = vmatprep.subr.bf16.mxu0 %v827
      %1431 = vmatpush1.bf16.msra.mxu0 %v826
      %1432 = vmatprep.subr.bf16.mxu0 0
      %1433 = vmatpush2.bf16.msra.mxu0 0
      %1434 = vmatprep.subr.bf16.mxu0 0
      %1435 = vmatpush2.bf16.msra.mxu0 0
      %1436 = vmatprep.subr.bf16.mxu0 0
      %1437 = vmatpush2.bf16.msra.mxu0 0
      %1438 = vmatprep.subr.bf16.mxu0 0
      %1439 = vmatpush2.bf16.msra.mxu0 0
      %1440 = vmatprep.subr.bf16.mxu0 0
      %1441 = vmatpush2.bf16.msra.mxu0 0
      %1442 = vmatprep.subr.bf16.mxu0 0
      %1443 = vmatpush2.bf16.msra.mxu0 0
      %1444 = vmatprep.subr.bf16.mxu0 0
      %1445 = vmatpush2.bf16.msra.mxu0 0
      %1446 = vmatprep.subr.bf16.mxu0 %v1204
      %1447 = vmatpush2.bf16.msra.mxu0 %v1203
      %1448 = vmatprep.mubr.bf16.mxu0 %v1242
      %1449 = vmatmul.mubr.bf16.gmra.mxu0 %v1238
      %v1450 = vpop.f32.mrf.mxu0
      %v1451 = vadd.f32 %v1225, %v1450
      %v1452 = vpop.f32.mrf.mxu0
      %v1453 = vadd.f32 %v1225, %v1452
      %v1454 = vpop.f32.mrf.mxu0
      %v1455 = vadd.f32 %v1230, %v1454
      %v1456 = vpop.f32.mrf.mxu0
      %v1457 = vadd.f32 %v1230, %v1456
      %1458 = vdwg.mxu0
      %1459 = vmatprep.subr.bf16.mxu0 %v1147
      %1460 = vmatpush1.bf16.msra.mxu0 %v1158
      %1461 = vmatprep.subr.bf16.mxu0 %v1100
      %1462 = vmatpush1.bf16.msra.mxu0 %v1111
      %1463 = vmatprep.subr.bf16.mxu0 %v1053
      %1464 = vmatpush1.bf16.msra.mxu0 %v1064
      %1465 = vmatprep.subr.bf16.mxu0 %v1006
      %1466 = vmatpush1.bf16.msra.mxu0 %v1017
      %1467 = vmatprep.subr.bf16.mxu0 %v959
      %1468 = vmatpush1.bf16.msra.mxu0 %v970
      %1469 = vmatprep.subr.bf16.mxu0 %v912
      %1470 = vmatpush1.bf16.msra.mxu0 %v923
      %1471 = vmatprep.subr.bf16.mxu0 %v865
      %1472 = vmatpush1.bf16.msra.mxu0 %v876
      %1473 = vmatprep.subr.bf16.mxu0 %v829
      %1474 = vmatpush1.bf16.msra.mxu0 %v828
      %1475 = vmatprep.subr.bf16.mxu0 0
      %1476 = vmatpush2.bf16.msra.mxu0 0
      %1477 = vmatprep.subr.bf16.mxu0 0
      %1478 = vmatpush2.bf16.msra.mxu0 0
      %1479 = vmatprep.subr.bf16.mxu0 0
      %1480 = vmatpush2.bf16.msra.mxu0 0
      %1481 = vmatprep.subr.bf16.mxu0 0
      %1482 = vmatpush2.bf16.msra.mxu0 0
      %1483 = vmatprep.subr.bf16.mxu0 0
      %1484 = vmatpush2.bf16.msra.mxu0 0
      %1485 = vmatprep.subr.bf16.mxu0 0
      %1486 = vmatpush2.bf16.msra.mxu0 0
      %1487 = vmatprep.subr.bf16.mxu0 0
      %1488 = vmatpush2.bf16.msra.mxu0 0
      %1489 = vmatprep.subr.bf16.mxu0 %v1194
      %1490 = vmatpush2.bf16.msra.mxu0 %v1205
      %1491 = vmatprep.mubr.bf16.mxu0 %v1242
      %1492 = vmatmul.mubr.bf16.gmra.mxu0 %v1238
      %v1493 = vpop.f32.mrf.mxu0
      %v1494 = vadd.f32 %v1225, %v1493
      %v1495 = vpop.f32.mrf.mxu0
      %v1496 = vadd.f32 %v1225, %v1495
      %v1497 = vpop.f32.mrf.mxu0
      %v1498 = vadd.f32 %v1230, %v1497
      %v1499 = vpop.f32.mrf.mxu0
      %v1500 = vadd.f32 %v1230, %v1499
      %1501 = vdwg.mxu0
      %v1502 = vmax.f32 %v1279, 0.0
      %v1503 = vmax.f32 %v1281, 0.0
      %v1504 = vmax.f32 %v1322, 0.0
      %v1505 = vmax.f32 %v1324, 0.0
      %v1506 = vmax.f32 %v1365, 0.0
      %v1507 = vmax.f32 %v1367, 0.0
      %v1508 = vmax.f32 %v1408, 0.0
      %v1509 = vmax.f32 %v1410, 0.0
      %v1510 = vmax.f32 %v1451, 0.0
      %v1511 = vmax.f32 %v1453, 0.0
      %v1512 = vmax.f32 %v1494, 0.0
      %v1513 = vmax.f32 %v1496, 0.0
      %v1514 = vmax.f32 %v1283, 0.0
      %v1515 = vmax.f32 %v1285, 0.0
      %v1516 = vmax.f32 %v1326, 0.0
      %v1517 = vmax.f32 %v1328, 0.0
      %v1518 = vmax.f32 %v1369, 0.0
      %v1519 = vmax.f32 %v1371, 0.0
      %v1520 = vmax.f32 %v1412, 0.0
      %v1521 = vmax.f32 %v1414, 0.0
      %v1522 = vmax.f32 %v1455, 0.0
      %v1523 = vmax.f32 %v1457, 0.0
      %v1524 = vmax.f32 %v1498, 0.0
      %v1525 = vmax.f32 %v1500, 0.0
      %v1526 = vpack.c.bf16 %v1514, %v1502
      %v1527 = vpack.c.bf16 %v1515, %v1503
      %v1528 = vpack.c.bf16 %v1516, %v1504
      %v1529 = vpack.c.bf16 %v1517, %v1505
      %v1530 = vpack.c.bf16 %v1518, %v1506
      %v1531 = vpack.c.bf16 %v1519, %v1507
      %v1532 = vpack.c.bf16 %v1520, %v1508
      %v1533 = vpack.c.bf16 %v1521, %v1509
      %v1534 = vpack.c.bf16 %v1522, %v1510
      %v1535 = vpack.c.bf16 %v1523, %v1511
      %v1536 = vpack.c.bf16 %v1524, %v1512
      %v1537 = vpack.c.bf16 %v1525, %v1513
      %1549 = vrot.lane.b32.xlu0 %v1526, 127
      %v1550 = vpop.permute.xlu0 %1549
      %1551 = vrot.lane.b32.xlu0 %v1527, 127
      %v1552 = vpop.permute.xlu0 %1551
      %1553 = vrot.lane.b32.xlu0 %v1528, 127
      %v1554 = vpop.permute.xlu0 %1553
      %1555 = vrot.lane.b32.xlu0 %v1529, 127
      %v1556 = vpop.permute.xlu0 %1555
      %1557 = vrot.lane.b32.xlu0 %v1530, 127
      %v1558 = vpop.permute.xlu0 %1557
      %1559 = vrot.lane.b32.xlu0 %v1531, 127
      %v1560 = vpop.permute.xlu0 %1559
      %1561 = vrot.lane.b32.xlu0 %v1532, 127
      %v1562 = vpop.permute.xlu0 %1561
      %1563 = vrot.lane.b32.xlu0 %v1533, 127
      %v1564 = vpop.permute.xlu0 %1563
      %1565 = vrot.lane.b32.xlu0 %v1534, 127
      %v1566 = vpop.permute.xlu0 %1565
      %1567 = vrot.lane.b32.xlu0 %v1535, 127
      %v1568 = vpop.permute.xlu0 %1567
      %1569 = vrot.lane.b32.xlu0 %v1536, 127
      %v1570 = vpop.permute.xlu0 %1569
      %v1571 = vsel %vm150, %v1550, %v1552
      %v1572 = vsel %vm150, %v1552, %v1554
      %v1573 = vsel %vm150, %v1554, %v1556
      %v1574 = vsel %vm150, %v1556, %v1558
      %v1575 = vsel %vm150, %v1558, %v1560
      %v1576 = vsel %vm150, %v1560, %v1562
      %v1577 = vsel %vm150, %v1562, %v1564
      %v1578 = vsel %vm150, %v1564, %v1566
      %v1579 = vsel %vm150, %v1566, %v1568
      %v1580 = vsel %vm150, %v1568, %v1570
      %v1592 = vmax.bf16 %v1526, %v1571
      %v1593 = vmax.bf16 %v1527, %v1572
      %v1594 = vmax.bf16 %v1528, %v1573
      %v1595 = vmax.bf16 %v1529, %v1574
      %v1596 = vmax.bf16 %v1530, %v1575
      %v1597 = vmax.bf16 %v1531, %v1576
      %v1598 = vmax.bf16 %v1532, %v1577
      %v1599 = vmax.bf16 %v1533, %v1578
      %v1600 = vmax.bf16 %v1534, %v1579
      %v1601 = vmax.bf16 %v1535, %v1580
      %v1602 = vmax.bf16 %v1536, %v1570
      %1604 = vrot.lane.b32.xlu0 %v1537, 127
      %v1605 = vpop.permute.xlu0 %1604
      %v1606 = vsel %vm150, %v1570, %v1605
      %v1609 = vmax.bf16 %v1536, %v1606
      %v1610 = vmax.bf16 %v1537, %v1605
      %1623 = vrot.lane.b32.xlu0 %v1592, 88
      %v1624 = vpop.permute.xlu0 %1623
      %1625 = vrot.lane.b32.xlu0 %v1593, 88
      %v1626 = vpop.permute.xlu0 %1625
      %1627 = vrot.lane.b32.xlu0 %v1594, 88
      %v1628 = vpop.permute.xlu0 %1627
      %1629 = vrot.lane.b32.xlu0 %v1595, 88
      %v1630 = vpop.permute.xlu0 %1629
      %1631 = vrot.lane.b32.xlu0 %v1596, 88
      %v1632 = vpop.permute.xlu0 %1631
      %1633 = vrot.lane.b32.xlu0 %v1597, 88
      %v1634 = vpop.permute.xlu0 %1633
      %1635 = vrot.lane.b32.xlu0 %v1598, 88
      %v1636 = vpop.permute.xlu0 %1635
      %1637 = vrot.lane.b32.xlu0 %v1599, 88
      %v1638 = vpop.permute.xlu0 %1637
      %1639 = vrot.lane.b32.xlu0 %v1600, 88
      %v1640 = vpop.permute.xlu0 %1639
      %1641 = vrot.lane.b32.xlu0 %v1601, 88
      %v1642 = vpop.permute.xlu0 %1641
      %1643 = vrot.lane.b32.xlu0 %v1609, 88
      %v1644 = vpop.permute.xlu0 %1643
      %1645 = vrot.lane.b32.xlu0 %v1610, 88
      %v1646 = vpop.permute.xlu0 %1645
      %v1647 = vsel %vm253, %v1624, %v1626
      %v1648 = vsel %vm253, %v1626, %v1628
      %v1649 = vsel %vm253, %v1628, %v1630
      %v1650 = vsel %vm253, %v1630, %v1632
      %v1651 = vsel %vm253, %v1632, %v1634
      %v1652 = vsel %vm253, %v1634, %v1636
      %v1653 = vsel %vm253, %v1636, %v1638
      %v1654 = vsel %vm253, %v1638, %v1640
      %v1655 = vsel %vm253, %v1640, %v1642
      %v1656 = vsel %vm253, %v1642, %v1644
      %v1657 = vsel %vm253, %v1644, %v1646
      %v1669 = vmax.bf16 %v1592, %v1647
      %v1670 = vmax.bf16 %v1593, %v1648
      %v1671 = vmax.bf16 %v1594, %v1649
      %v1672 = vmax.bf16 %v1595, %v1650
      %v1673 = vmax.bf16 %v1596, %v1651
      %v1674 = vmax.bf16 %v1597, %v1652
      %v1675 = vmax.bf16 %v1598, %v1653
      %v1676 = vmax.bf16 %v1599, %v1654
      %v1677 = vmax.bf16 %v1600, %v1655
      %v1678 = vmax.bf16 %v1601, %v1656
      %v1679 = vmax.bf16 %v1602, %v1657
      %1690 = vrot.lane.b32.xlu0 %v1669, 126
      %v1691 = vpop.permute.xlu0 %1690
      %1692 = vrot.lane.b32.xlu0 %v1670, 126
      %v1693 = vpop.permute.xlu0 %1692
      %1694 = vrot.lane.b32.xlu0 %v1671, 126
      %v1695 = vpop.permute.xlu0 %1694
      %1696 = vrot.lane.b32.xlu0 %v1672, 126
      %v1697 = vpop.permute.xlu0 %1696
      %1698 = vrot.lane.b32.xlu0 %v1673, 126
      %v1699 = vpop.permute.xlu0 %1698
      %1700 = vrot.lane.b32.xlu0 %v1674, 126
      %v1701 = vpop.permute.xlu0 %1700
      %1702 = vrot.lane.b32.xlu0 %v1675, 126
      %v1703 = vpop.permute.xlu0 %1702
      %1704 = vrot.lane.b32.xlu0 %v1676, 126
      %v1705 = vpop.permute.xlu0 %1704
      %1706 = vrot.lane.b32.xlu0 %v1677, 126
      %v1707 = vpop.permute.xlu0 %1706
      %1708 = vrot.lane.b32.xlu0 %v1678, 126
      %v1709 = vpop.permute.xlu0 %1708
      %v1710 = vsel %vm198, %v1691, %v1693
      %v1711 = vsel %vm198, %v1693, %v1695
      %v1712 = vsel %vm198, %v1695, %v1697
      %v1713 = vsel %vm198, %v1697, %v1699
      %v1714 = vsel %vm198, %v1699, %v1701
      %v1715 = vsel %vm198, %v1701, %v1703
      %v1716 = vsel %vm198, %v1703, %v1705
      %v1717 = vsel %vm198, %v1705, %v1707
      %v1718 = vsel %vm198, %v1707, %v1709
      %1729 = vrot.lane.b32.xlu0 %v1669, 124
      %v1730 = vpop.permute.xlu0 %1729
      %1731 = vrot.lane.b32.xlu0 %v1670, 124
      %v1732 = vpop.permute.xlu0 %1731
      %1733 = vrot.lane.b32.xlu0 %v1671, 124
      %v1734 = vpop.permute.xlu0 %1733
      %1735 = vrot.lane.b32.xlu0 %v1672, 124
      %v1736 = vpop.permute.xlu0 %1735
      %1737 = vrot.lane.b32.xlu0 %v1673, 124
      %v1738 = vpop.permute.xlu0 %1737
      %1739 = vrot.lane.b32.xlu0 %v1674, 124
      %v1740 = vpop.permute.xlu0 %1739
      %1741 = vrot.lane.b32.xlu0 %v1675, 124
      %v1742 = vpop.permute.xlu0 %1741
      %1743 = vrot.lane.b32.xlu0 %v1676, 124
      %v1744 = vpop.permute.xlu0 %1743
      %1745 = vrot.lane.b32.xlu0 %v1677, 124
      %v1746 = vpop.permute.xlu0 %1745
      %1747 = vrot.lane.b32.xlu0 %v1678, 124
      %v1748 = vpop.permute.xlu0 %1747
      %vm1749 = vcmask 1014784
      %v1750 = vsel %vm1749, %v1730, %v1732
      %v1751 = vsel %vm1749, %v1732, %v1734
      %v1752 = vsel %vm1749, %v1734, %v1736
      %v1753 = vsel %vm1749, %v1736, %v1738
      %v1754 = vsel %vm1749, %v1738, %v1740
      %v1755 = vsel %vm1749, %v1740, %v1742
      %v1756 = vsel %vm1749, %v1742, %v1744
      %v1757 = vsel %vm1749, %v1744, %v1746
      %v1758 = vsel %vm1749, %v1746, %v1748
      %1770 = vrot.lane.b32.xlu0 %v1669, 48
      %v1771 = vpop.permute.xlu0 %1770
      %1772 = vrot.lane.b32.xlu0 %v1670, 48
      %v1773 = vpop.permute.xlu0 %1772
      %1774 = vrot.lane.b32.xlu0 %v1671, 48
      %v1775 = vpop.permute.xlu0 %1774
      %1776 = vrot.lane.b32.xlu0 %v1672, 48
      %v1777 = vpop.permute.xlu0 %1776
      %1778 = vrot.lane.b32.xlu0 %v1673, 48
      %v1779 = vpop.permute.xlu0 %1778
      %1780 = vrot.lane.b32.xlu0 %v1674, 48
      %v1781 = vpop.permute.xlu0 %1780
      %1782 = vrot.lane.b32.xlu0 %v1675, 48
      %v1783 = vpop.permute.xlu0 %1782
      %1784 = vrot.lane.b32.xlu0 %v1676, 48
      %v1785 = vpop.permute.xlu0 %1784
      %1786 = vrot.lane.b32.xlu0 %v1677, 48
      %v1787 = vpop.permute.xlu0 %1786
      %1788 = vrot.lane.b32.xlu0 %v1678, 48
      %v1789 = vpop.permute.xlu0 %1788
      %1790 = vrot.lane.b32.xlu0 %v1679, 48
      %v1791 = vpop.permute.xlu0 %1790
      %v1792 = vsel %vm406, %v1771, %v1773
      %v1793 = vsel %vm406, %v1773, %v1775
      %v1794 = vsel %vm406, %v1775, %v1777
      %v1795 = vsel %vm406, %v1777, %v1779
      %v1796 = vsel %vm406, %v1779, %v1781
      %v1797 = vsel %vm406, %v1781, %v1783
      %v1798 = vsel %vm406, %v1783, %v1785
      %v1799 = vsel %vm406, %v1785, %v1787
      %v1800 = vsel %vm406, %v1787, %v1789
      %v1801 = vsel %vm406, %v1789, %v1791
      %1812 = vrot.lane.b32.xlu0 %v1669, 46
      %v1813 = vpop.permute.xlu0 %1812
      %1814 = vrot.lane.b32.xlu0 %v1670, 46
      %v1815 = vpop.permute.xlu0 %1814
      %1816 = vrot.lane.b32.xlu0 %v1671, 46
      %v1817 = vpop.permute.xlu0 %1816
      %1818 = vrot.lane.b32.xlu0 %v1672, 46
      %v1819 = vpop.permute.xlu0 %1818
      %1820 = vrot.lane.b32.xlu0 %v1673, 46
      %v1821 = vpop.permute.xlu0 %1820
      %1822 = vrot.lane.b32.xlu0 %v1674, 46
      %v1823 = vpop.permute.xlu0 %1822
      %1824 = vrot.lane.b32.xlu0 %v1675, 46
      %v1825 = vpop.permute.xlu0 %1824
      %1826 = vrot.lane.b32.xlu0 %v1676, 46
      %v1827 = vpop.permute.xlu0 %1826
      %1828 = vrot.lane.b32.xlu0 %v1677, 46
      %v1829 = vpop.permute.xlu0 %1828
      %1830 = vrot.lane.b32.xlu0 %v1678, 46
      %v1831 = vpop.permute.xlu0 %1830
      %1832 = vrot.lane.b32.xlu0 %v1679, 46
      %v1833 = vpop.permute.xlu0 %1832
      %v1834 = vsel %vm508, %v1813, %v1815
      %v1835 = vsel %vm508, %v1815, %v1817
      %v1836 = vsel %vm508, %v1817, %v1819
      %v1837 = vsel %vm508, %v1819, %v1821
      %v1838 = vsel %vm508, %v1821, %v1823
      %v1839 = vsel %vm508, %v1823, %v1825
      %v1840 = vsel %vm508, %v1825, %v1827
      %v1841 = vsel %vm508, %v1827, %v1829
      %v1842 = vsel %vm508, %v1829, %v1831
      %v1843 = vsel %vm508, %v1831, %v1833
      %1854 = vrot.lane.b32.xlu0 %v1669, 44
      %v1855 = vpop.permute.xlu0 %1854
      %1856 = vrot.lane.b32.xlu0 %v1670, 44
      %v1857 = vpop.permute.xlu0 %1856
      %1858 = vrot.lane.b32.xlu0 %v1671, 44
      %v1859 = vpop.permute.xlu0 %1858
      %1860 = vrot.lane.b32.xlu0 %v1672, 44
      %v1861 = vpop.permute.xlu0 %1860
      %1862 = vrot.lane.b32.xlu0 %v1673, 44
      %v1863 = vpop.permute.xlu0 %1862
      %1864 = vrot.lane.b32.xlu0 %v1674, 44
      %v1865 = vpop.permute.xlu0 %1864
      %1866 = vrot.lane.b32.xlu0 %v1675, 44
      %v1867 = vpop.permute.xlu0 %1866
      %1868 = vrot.lane.b32.xlu0 %v1676, 44
      %v1869 = vpop.permute.xlu0 %1868
      %1870 = vrot.lane.b32.xlu0 %v1677, 44
      %v1871 = vpop.permute.xlu0 %1870
      %1872 = vrot.lane.b32.xlu0 %v1678, 44
      %v1873 = vpop.permute.xlu0 %1872
      %1874 = vrot.lane.b32.xlu0 %v1679, 44
      %v1875 = vpop.permute.xlu0 %1874
      %vm1876 = vcmask 359424
      %v1877 = vsel %vm1876, %v1855, %v1857
      %v1878 = vsel %vm1876, %v1857, %v1859
      %v1879 = vsel %vm1876, %v1859, %v1861
      %v1880 = vsel %vm1876, %v1861, %v1863
      %v1881 = vsel %vm1876, %v1863, %v1865
      %v1882 = vsel %vm1876, %v1865, %v1867
      %v1883 = vsel %vm1876, %v1867, %v1869
      %v1884 = vsel %vm1876, %v1869, %v1871
      %v1885 = vsel %vm1876, %v1871, %v1873
      %v1886 = vsel %vm1876, %v1873, %v1875
      %1897 = vrot.lane.b32.xlu0 %v1670, 96
      %v1898 = vpop.permute.xlu0 %1897
      %1899 = vrot.lane.b32.xlu0 %v1671, 96
      %v1900 = vpop.permute.xlu0 %1899
      %1901 = vrot.lane.b32.xlu0 %v1672, 96
      %v1902 = vpop.permute.xlu0 %1901
      %1903 = vrot.lane.b32.xlu0 %v1673, 96
      %v1904 = vpop.permute.xlu0 %1903
      %1905 = vrot.lane.b32.xlu0 %v1674, 96
      %v1906 = vpop.permute.xlu0 %1905
      %1907 = vrot.lane.b32.xlu0 %v1675, 96
      %v1908 = vpop.permute.xlu0 %1907
      %1909 = vrot.lane.b32.xlu0 %v1676, 96
      %v1910 = vpop.permute.xlu0 %1909
      %1911 = vrot.lane.b32.xlu0 %v1677, 96
      %v1912 = vpop.permute.xlu0 %1911
      %1913 = vrot.lane.b32.xlu0 %v1678, 96
      %v1914 = vpop.permute.xlu0 %1913
      %1915 = vrot.lane.b32.xlu0 %v1679, 96
      %v1916 = vpop.permute.xlu0 %1915
      %vm1917 = vcmask 785408
      %v1918 = vsel %vm1917, %v1898, %v1900
      %v1919 = vsel %vm1917, %v1900, %v1902
      %v1920 = vsel %vm1917, %v1902, %v1904
      %v1921 = vsel %vm1917, %v1904, %v1906
      %v1922 = vsel %vm1917, %v1906, %v1908
      %v1923 = vsel %vm1917, %v1908, %v1910
      %v1924 = vsel %vm1917, %v1910, %v1912
      %v1925 = vsel %vm1917, %v1912, %v1914
      %v1926 = vsel %vm1917, %v1914, %v1916
      %1937 = vrot.lane.b32.xlu0 %v1670, 94
      %v1938 = vpop.permute.xlu0 %1937
      %1939 = vrot.lane.b32.xlu0 %v1671, 94
      %v1940 = vpop.permute.xlu0 %1939
      %1941 = vrot.lane.b32.xlu0 %v1672, 94
      %v1942 = vpop.permute.xlu0 %1941
      %1943 = vrot.lane.b32.xlu0 %v1673, 94
      %v1944 = vpop.permute.xlu0 %1943
      %1945 = vrot.lane.b32.xlu0 %v1674, 94
      %v1946 = vpop.permute.xlu0 %1945
      %1947 = vrot.lane.b32.xlu0 %v1675, 94
      %v1948 = vpop.permute.xlu0 %1947
      %1949 = vrot.lane.b32.xlu0 %v1676, 94
      %v1950 = vpop.permute.xlu0 %1949
      %1951 = vrot.lane.b32.xlu0 %v1677, 94
      %v1952 = vpop.permute.xlu0 %1951
      %1953 = vrot.lane.b32.xlu0 %v1678, 94
      %v1954 = vpop.permute.xlu0 %1953
      %1955 = vrot.lane.b32.xlu0 %v1679, 94
      %v1956 = vpop.permute.xlu0 %1955
      %vm1957 = vcmask 769024
      %v1958 = vsel %vm1957, %v1938, %v1940
      %v1959 = vsel %vm1957, %v1940, %v1942
      %v1960 = vsel %vm1957, %v1942, %v1944
      %v1961 = vsel %vm1957, %v1944, %v1946
      %v1962 = vsel %vm1957, %v1946, %v1948
      %v1963 = vsel %vm1957, %v1948, %v1950
      %v1964 = vsel %vm1957, %v1950, %v1952
      %v1965 = vsel %vm1957, %v1952, %v1954
      %v1966 = vsel %vm1957, %v1954, %v1956
      %1977 = vrot.lane.b32.xlu0 %v1670, 92
      %v1978 = vpop.permute.xlu0 %1977
      %1979 = vrot.lane.b32.xlu0 %v1671, 92
      %v1980 = vpop.permute.xlu0 %1979
      %1981 = vrot.lane.b32.xlu0 %v1672, 92
      %v1982 = vpop.permute.xlu0 %1981
      %1983 = vrot.lane.b32.xlu0 %v1673, 92
      %v1984 = vpop.permute.xlu0 %1983
      %1985 = vrot.lane.b32.xlu0 %v1674, 92
      %v1986 = vpop.permute.xlu0 %1985
      %1987 = vrot.lane.b32.xlu0 %v1675, 92
      %v1988 = vpop.permute.xlu0 %1987
      %1989 = vrot.lane.b32.xlu0 %v1676, 92
      %v1990 = vpop.permute.xlu0 %1989
      %1991 = vrot.lane.b32.xlu0 %v1677, 92
      %v1992 = vpop.permute.xlu0 %1991
      %1993 = vrot.lane.b32.xlu0 %v1678, 92
      %v1994 = vpop.permute.xlu0 %1993
      %1995 = vrot.lane.b32.xlu0 %v1679, 92
      %v1996 = vpop.permute.xlu0 %1995
      %vm1997 = vcmask 752640
      %v1998 = vsel %vm1997, %v1978, %v1980
      %v1999 = vsel %vm1997, %v1980, %v1982
      %v2000 = vsel %vm1997, %v1982, %v1984
      %v2001 = vsel %vm1997, %v1984, %v1986
      %v2002 = vsel %vm1997, %v1986, %v1988
      %v2003 = vsel %vm1997, %v1988, %v1990
      %v2004 = vsel %vm1997, %v1990, %v1992
      %v2005 = vsel %vm1997, %v1992, %v1994
      %v2006 = vsel %vm1997, %v1994, %v1996
      %v2017 = vld [vmem:[%s5] sm:$0xff]
      %v2018 = vld [vmem:[%s5 + $0x8] sm:$0xff]
      %v2019 = vld [vmem:[%s5 + $0x10] sm:$0xff]
      %v2020 = vld [vmem:[%s5 + $0x18] sm:$0xff]
      %v2021 = vld [vmem:[%s6] sm:$0xff]
      %v2022 = vld [vmem:[%s6 + $0x8] sm:$0xff]
      %v2023 = vld [vmem:[%s6 + $0x10] sm:$0xff]
      %v2024 = vld [vmem:[%s6 + $0x18] sm:$0xff]
      %2026 = vset.pattern.permute.xlu0 0
      %2027 = vperm.xlu0 %2026, %v2021
      %v2028 = vpop.permute.xlu0 %2027
      %2031 = vset.pattern.permute.xlu0 0
      %2032 = vperm.xlu0 %2031, %v2022
      %v2033 = vpop.permute.xlu0 %2032
      %2036 = vset.pattern.permute.xlu0 0
      %2037 = vperm.xlu0 %2036, %v2023
      %v2038 = vpop.permute.xlu0 %2037
      %2041 = vset.pattern.permute.xlu0 0
      %2042 = vperm.xlu0 %2041, %v2024
      %v2043 = vpop.permute.xlu0 %2042
      %v2049 = vunpack.c.l.b16 %v2017
      %v2050 = vunpack.c.h.b16 %v2017
      %v2051 = vunpack.c.l.b16 %v2018
      %v2052 = vunpack.c.h.b16 %v2018
      %v2053 = vunpack.c.l.b16 %v2019
      %v2054 = vunpack.c.h.b16 %v2019
      %v2055 = vunpack.c.l.b16 %v2020
      %v2056 = vunpack.c.h.b16 %v2020
      %v2057 = vpack.c.b16 %v2051, %v2049
      %v2058 = vpack.c.b16 %v2052, %v2050
      %v2059 = vpack.c.b16 %v2055, %v2053
      %v2060 = vpack.c.b16 %v2056, %v2054
      %v2064 = vsel %vm556, %v2058, 0
      %v2067 = vsel %vm556, %v2060, 0
      %2069 = vmatprep.subr.bf16.mxu0 %v1959
      %2070 = vmatpush1.bf16.msra.mxu0 %v1958
      %2071 = vmatprep.subr.bf16.mxu0 %v1919
      %2072 = vmatpush1.bf16.msra.mxu0 %v1918
      %2073 = vmatprep.subr.bf16.mxu0 %v1878
      %2074 = vmatpush1.bf16.msra.mxu0 %v1877
      %2075 = vmatprep.subr.bf16.mxu0 %v1835
      %2076 = vmatpush1.bf16.msra.mxu0 %v1834
      %2077 = vmatprep.subr.bf16.mxu0 %v1793
      %2078 = vmatpush1.bf16.msra.mxu0 %v1792
      %2079 = vmatprep.subr.bf16.mxu0 %v1751
      %2080 = vmatpush1.bf16.msra.mxu0 %v1750
      %2081 = vmatprep.subr.bf16.mxu0 %v1711
      %2082 = vmatpush1.bf16.msra.mxu0 %v1710
      %2083 = vmatprep.subr.bf16.mxu0 %v1670
      %2084 = vmatpush1.bf16.msra.mxu0 %v1669
      %2085 = vmatprep.subr.bf16.mxu0 0
      %2086 = vmatpush2.bf16.msra.mxu0 0
      %2087 = vmatprep.subr.bf16.mxu0 0
      %2088 = vmatpush2.bf16.msra.mxu0 0
      %2089 = vmatprep.subr.bf16.mxu0 0
      %2090 = vmatpush2.bf16.msra.mxu0 0
      %2091 = vmatprep.subr.bf16.mxu0 0
      %2092 = vmatpush2.bf16.msra.mxu0 0
      %2093 = vmatprep.subr.bf16.mxu0 0
      %2094 = vmatpush2.bf16.msra.mxu0 0
      %2095 = vmatprep.subr.bf16.mxu0 0
      %2096 = vmatpush2.bf16.msra.mxu0 0
      %2097 = vmatprep.subr.bf16.mxu0 0
      %2098 = vmatpush2.bf16.msra.mxu0 0
      %2099 = vmatprep.subr.bf16.mxu0 %v1999
      %2100 = vmatpush2.bf16.msra.mxu0 %v1998
      %2101 = vmatprep.mubr.bf16.mxu0 %v2064
      %2102 = vmatmul.mubr.bf16.gmra.mxu0 %v2057
      %v2103 = vpop.f32.mrf.mxu0
      %v2104 = vadd.f32 %v2028, %v2103
      %v2105 = vpop.f32.mrf.mxu0
      %v2106 = vadd.f32 %v2028, %v2105
      %v2107 = vpop.f32.mrf.mxu0
      %v2108 = vadd.f32 %v2033, %v2107
      %v2109 = vpop.f32.mrf.mxu0
      %v2110 = vadd.f32 %v2033, %v2109
      %2111 = vmatprep.mubr.bf16.mxu0 %v2067
      %2112 = vmatmul.mubr.bf16.gmra.mxu0 %v2059
      %v2113 = vpop.f32.mrf.mxu0
      %v2114 = vadd.f32 %v2038, %v2113
      %v2115 = vpop.f32.mrf.mxu0
      %v2116 = vadd.f32 %v2038, %v2115
      %v2117 = vpop.f32.mrf.mxu0
      %v2118 = vadd.f32 %v2043, %v2117
      %v2119 = vpop.f32.mrf.mxu0
      %v2120 = vadd.f32 %v2043, %v2119
      %2121 = vdwg.mxu0
      %2122 = vmatprep.subr.bf16.mxu0 %v1961
      %2123 = vmatpush1.bf16.msra.mxu0 %v1960
      %2124 = vmatprep.subr.bf16.mxu0 %v1921
      %2125 = vmatpush1.bf16.msra.mxu0 %v1920
      %2126 = vmatprep.subr.bf16.mxu0 %v1880
      %2127 = vmatpush1.bf16.msra.mxu0 %v1879
      %2128 = vmatprep.subr.bf16.mxu0 %v1837
      %2129 = vmatpush1.bf16.msra.mxu0 %v1836
      %2130 = vmatprep.subr.bf16.mxu0 %v1795
      %2131 = vmatpush1.bf16.msra.mxu0 %v1794
      %2132 = vmatprep.subr.bf16.mxu0 %v1753
      %2133 = vmatpush1.bf16.msra.mxu0 %v1752
      %2134 = vmatprep.subr.bf16.mxu0 %v1713
      %2135 = vmatpush1.bf16.msra.mxu0 %v1712
      %2136 = vmatprep.subr.bf16.mxu0 %v1672
      %2137 = vmatpush1.bf16.msra.mxu0 %v1671
      %2138 = vmatprep.subr.bf16.mxu0 0
      %2139 = vmatpush2.bf16.msra.mxu0 0
      %2140 = vmatprep.subr.bf16.mxu0 0
      %2141 = vmatpush2.bf16.msra.mxu0 0
      %2142 = vmatprep.subr.bf16.mxu0 0
      %2143 = vmatpush2.bf16.msra.mxu0 0
      %2144 = vmatprep.subr.bf16.mxu0 0
      %2145 = vmatpush2.bf16.msra.mxu0 0
      %2146 = vmatprep.subr.bf16.mxu0 0
      %2147 = vmatpush2.bf16.msra.mxu0 0
      %2148 = vmatprep.subr.bf16.mxu0 0
      %2149 = vmatpush2.bf16.msra.mxu0 0
      %2150 = vmatprep.subr.bf16.mxu0 0
      %2151 = vmatpush2.bf16.msra.mxu0 0
      %2152 = vmatprep.subr.bf16.mxu0 %v2001
      %2153 = vmatpush2.bf16.msra.mxu0 %v2000
      %2154 = vmatprep.mubr.bf16.mxu0 %v2064
      %2155 = vmatmul.mubr.bf16.gmra.mxu0 %v2057
      %v2156 = vpop.f32.mrf.mxu0
      %v2157 = vadd.f32 %v2028, %v2156
      %v2158 = vpop.f32.mrf.mxu0
      %v2159 = vadd.f32 %v2028, %v2158
      %v2160 = vpop.f32.mrf.mxu0
      %v2161 = vadd.f32 %v2033, %v2160
      %v2162 = vpop.f32.mrf.mxu0
      %v2163 = vadd.f32 %v2033, %v2162
      %2164 = vmatprep.mubr.bf16.mxu0 %v2067
      %2165 = vmatmul.mubr.bf16.gmra.mxu0 %v2059
      %v2166 = vpop.f32.mrf.mxu0
      %v2167 = vadd.f32 %v2038, %v2166
      %v2168 = vpop.f32.mrf.mxu0
      %v2169 = vadd.f32 %v2038, %v2168
      %v2170 = vpop.f32.mrf.mxu0
      %v2171 = vadd.f32 %v2043, %v2170
      %v2172 = vpop.f32.mrf.mxu0
      %v2173 = vadd.f32 %v2043, %v2172
      %2174 = vdwg.mxu0
      %2175 = vmatprep.subr.bf16.mxu0 %v1963
      %2176 = vmatpush1.bf16.msra.mxu0 %v1962
      %2177 = vmatprep.subr.bf16.mxu0 %v1923
      %2178 = vmatpush1.bf16.msra.mxu0 %v1922
      %2179 = vmatprep.subr.bf16.mxu0 %v1882
      %2180 = vmatpush1.bf16.msra.mxu0 %v1881
      %2181 = vmatprep.subr.bf16.mxu0 %v1839
      %2182 = vmatpush1.bf16.msra.mxu0 %v1838
      %2183 = vmatprep.subr.bf16.mxu0 %v1797
      %2184 = vmatpush1.bf16.msra.mxu0 %v1796
      %2185 = vmatprep.subr.bf16.mxu0 %v1755
      %2186 = vmatpush1.bf16.msra.mxu0 %v1754
      %2187 = vmatprep.subr.bf16.mxu0 %v1715
      %2188 = vmatpush1.bf16.msra.mxu0 %v1714
      %2189 = vmatprep.subr.bf16.mxu0 %v1674
      %2190 = vmatpush1.bf16.msra.mxu0 %v1673
      %2191 = vmatprep.subr.bf16.mxu0 0
      %2192 = vmatpush2.bf16.msra.mxu0 0
      %2193 = vmatprep.subr.bf16.mxu0 0
      %2194 = vmatpush2.bf16.msra.mxu0 0
      %2195 = vmatprep.subr.bf16.mxu0 0
      %2196 = vmatpush2.bf16.msra.mxu0 0
      %2197 = vmatprep.subr.bf16.mxu0 0
      %2198 = vmatpush2.bf16.msra.mxu0 0
      %2199 = vmatprep.subr.bf16.mxu0 0
      %2200 = vmatpush2.bf16.msra.mxu0 0
      %2201 = vmatprep.subr.bf16.mxu0 0
      %2202 = vmatpush2.bf16.msra.mxu0 0
      %2203 = vmatprep.subr.bf16.mxu0 0
      %2204 = vmatpush2.bf16.msra.mxu0 0
      %2205 = vmatprep.subr.bf16.mxu0 %v2003
      %2206 = vmatpush2.bf16.msra.mxu0 %v2002
      %2207 = vmatprep.mubr.bf16.mxu0 %v2064
      %2208 = vmatmul.mubr.bf16.gmra.mxu0 %v2057
      %v2209 = vpop.f32.mrf.mxu0
      %v2210 = vadd.f32 %v2028, %v2209
      %v2211 = vpop.f32.mrf.mxu0
      %v2212 = vadd.f32 %v2028, %v2211
      %v2213 = vpop.f32.mrf.mxu0
      %v2214 = vadd.f32 %v2033, %v2213
      %v2215 = vpop.f32.mrf.mxu0
      %v2216 = vadd.f32 %v2033, %v2215
      %2217 = vmatprep.mubr.bf16.mxu0 %v2067
      %2218 = vmatmul.mubr.bf16.gmra.mxu0 %v2059
      %v2219 = vpop.f32.mrf.mxu0
      %v2220 = vadd.f32 %v2038, %v2219
      %v2221 = vpop.f32.mrf.mxu0
      %v2222 = vadd.f32 %v2038, %v2221
      %v2223 = vpop.f32.mrf.mxu0
      %v2224 = vadd.f32 %v2043, %v2223
      %v2225 = vpop.f32.mrf.mxu0
      %v2226 = vadd.f32 %v2043, %v2225
      %2227 = vdwg.mxu0
      %2228 = vmatprep.subr.bf16.mxu0 %v1965
      %2229 = vmatpush1.bf16.msra.mxu0 %v1964
      %2230 = vmatprep.subr.bf16.mxu0 %v1925
      %2231 = vmatpush1.bf16.msra.mxu0 %v1924
      %2232 = vmatprep.subr.bf16.mxu0 %v1884
      %2233 = vmatpush1.bf16.msra.mxu0 %v1883
      %2234 = vmatprep.subr.bf16.mxu0 %v1841
      %2235 = vmatpush1.bf16.msra.mxu0 %v1840
      %2236 = vmatprep.subr.bf16.mxu0 %v1799
      %2237 = vmatpush1.bf16.msra.mxu0 %v1798
      %2238 = vmatprep.subr.bf16.mxu0 %v1757
      %2239 = vmatpush1.bf16.msra.mxu0 %v1756
      %2240 = vmatprep.subr.bf16.mxu0 %v1717
      %2241 = vmatpush1.bf16.msra.mxu0 %v1716
      %2242 = vmatprep.subr.bf16.mxu0 %v1676
      %2243 = vmatpush1.bf16.msra.mxu0 %v1675
      %2244 = vmatprep.subr.bf16.mxu0 0
      %2245 = vmatpush2.bf16.msra.mxu0 0
      %2246 = vmatprep.subr.bf16.mxu0 0
      %2247 = vmatpush2.bf16.msra.mxu0 0
      %2248 = vmatprep.subr.bf16.mxu0 0
      %2249 = vmatpush2.bf16.msra.mxu0 0
      %2250 = vmatprep.subr.bf16.mxu0 0
      %2251 = vmatpush2.bf16.msra.mxu0 0
      %2252 = vmatprep.subr.bf16.mxu0 0
      %2253 = vmatpush2.bf16.msra.mxu0 0
      %2254 = vmatprep.subr.bf16.mxu0 0
      %2255 = vmatpush2.bf16.msra.mxu0 0
      %2256 = vmatprep.subr.bf16.mxu0 0
      %2257 = vmatpush2.bf16.msra.mxu0 0
      %2258 = vmatprep.subr.bf16.mxu0 %v2005
      %2259 = vmatpush2.bf16.msra.mxu0 %v2004
      %2260 = vmatprep.mubr.bf16.mxu0 %v2064
      %2261 = vmatmul.mubr.bf16.gmra.mxu0 %v2057
      %v2262 = vpop.f32.mrf.mxu0
      %v2263 = vadd.f32 %v2028, %v2262
      %v2264 = vpop.f32.mrf.mxu0
      %v2265 = vadd.f32 %v2028, %v2264
      %v2266 = vpop.f32.mrf.mxu0
      %v2267 = vadd.f32 %v2033, %v2266
      %v2268 = vpop.f32.mrf.mxu0
      %v2269 = vadd.f32 %v2033, %v2268
      %2270 = vmatprep.mubr.bf16.mxu0 %v2067
      %2271 = vmatmul.mubr.bf16.gmra.mxu0 %v2059
      %v2272 = vpop.f32.mrf.mxu0
      %v2273 = vadd.f32 %v2038, %v2272
      %v2274 = vpop.f32.mrf.mxu0
      %v2275 = vadd.f32 %v2038, %v2274
      %v2276 = vpop.f32.mrf.mxu0
      %v2277 = vadd.f32 %v2043, %v2276
      %v2278 = vpop.f32.mrf.mxu0
      %v2279 = vadd.f32 %v2043, %v2278
      %2280 = vdwg.mxu0
      %2281 = vmatprep.subr.bf16.mxu0 %v1956
      %2282 = vmatpush1.bf16.msra.mxu0 %v1966
      %2283 = vmatprep.subr.bf16.mxu0 %v1916
      %2284 = vmatpush1.bf16.msra.mxu0 %v1926
      %2285 = vmatprep.subr.bf16.mxu0 %v1886
      %2286 = vmatpush1.bf16.msra.mxu0 %v1885
      %2287 = vmatprep.subr.bf16.mxu0 %v1843
      %2288 = vmatpush1.bf16.msra.mxu0 %v1842
      %2289 = vmatprep.subr.bf16.mxu0 %v1801
      %2290 = vmatpush1.bf16.msra.mxu0 %v1800
      %2291 = vmatprep.subr.bf16.mxu0 %v1748
      %2292 = vmatpush1.bf16.msra.mxu0 %v1758
      %2293 = vmatprep.subr.bf16.mxu0 %v1709
      %2294 = vmatpush1.bf16.msra.mxu0 %v1718
      %2295 = vmatprep.subr.bf16.mxu0 %v1678
      %2296 = vmatpush1.bf16.msra.mxu0 %v1677
      %2297 = vmatprep.subr.bf16.mxu0 0
      %2298 = vmatpush2.bf16.msra.mxu0 0
      %2299 = vmatprep.subr.bf16.mxu0 0
      %2300 = vmatpush2.bf16.msra.mxu0 0
      %2301 = vmatprep.subr.bf16.mxu0 0
      %2302 = vmatpush2.bf16.msra.mxu0 0
      %2303 = vmatprep.subr.bf16.mxu0 0
      %2304 = vmatpush2.bf16.msra.mxu0 0
      %2305 = vmatprep.subr.bf16.mxu0 0
      %2306 = vmatpush2.bf16.msra.mxu0 0
      %2307 = vmatprep.subr.bf16.mxu0 0
      %2308 = vmatpush2.bf16.msra.mxu0 0
      %2309 = vmatprep.subr.bf16.mxu0 0
      %2310 = vmatpush2.bf16.msra.mxu0 0
      %2311 = vmatprep.subr.bf16.mxu0 %v1996
      %2312 = vmatpush2.bf16.msra.mxu0 %v2006
      %2313 = vmatprep.mubr.bf16.mxu0 %v2064
      %2314 = vmatmul.mubr.bf16.gmra.mxu0 %v2057
      %v2315 = vpop.f32.mrf.mxu0
      %v2316 = vadd.f32 %v2028, %v2315
      %v2317 = vpop.f32.mrf.mxu0
      %v2318 = vadd.f32 %v2028, %v2317
      %v2319 = vpop.f32.mrf.mxu0
      %v2320 = vadd.f32 %v2033, %v2319
      %v2321 = vpop.f32.mrf.mxu0
      %v2322 = vadd.f32 %v2033, %v2321
      %2323 = vmatprep.mubr.bf16.mxu0 %v2067
      %2324 = vmatmul.mubr.bf16.gmra.mxu0 %v2059
      %v2325 = vpop.f32.mrf.mxu0
      %v2326 = vadd.f32 %v2038, %v2325
      %v2327 = vpop.f32.mrf.mxu0
      %v2328 = vadd.f32 %v2038, %v2327
      %v2329 = vpop.f32.mrf.mxu0
      %v2330 = vadd.f32 %v2043, %v2329
      %v2331 = vpop.f32.mrf.mxu0
      %v2332 = vadd.f32 %v2043, %v2331
      %2333 = vdwg.mxu0
      %v2334 = vmax.f32 %v2104, 0.0
      %v2335 = vmax.f32 %v2106, 0.0
      %v2336 = vmax.f32 %v2157, 0.0
      %v2337 = vmax.f32 %v2159, 0.0
      %v2338 = vmax.f32 %v2210, 0.0
      %v2339 = vmax.f32 %v2212, 0.0
      %v2340 = vmax.f32 %v2263, 0.0
      %v2341 = vmax.f32 %v2265, 0.0
      %v2342 = vmax.f32 %v2316, 0.0
      %v2343 = vmax.f32 %v2318, 0.0
      %v2344 = vmax.f32 %v2108, 0.0
      %v2345 = vmax.f32 %v2110, 0.0
      %v2346 = vmax.f32 %v2161, 0.0
      %v2347 = vmax.f32 %v2163, 0.0
      %v2348 = vmax.f32 %v2214, 0.0
      %v2349 = vmax.f32 %v2216, 0.0
      %v2350 = vmax.f32 %v2267, 0.0
      %v2351 = vmax.f32 %v2269, 0.0
      %v2352 = vmax.f32 %v2320, 0.0
      %v2353 = vmax.f32 %v2322, 0.0
      %v2354 = vmax.f32 %v2114, 0.0
      %v2355 = vmax.f32 %v2116, 0.0
      %v2356 = vmax.f32 %v2167, 0.0
      %v2357 = vmax.f32 %v2169, 0.0
      %v2358 = vmax.f32 %v2220, 0.0
      %v2359 = vmax.f32 %v2222, 0.0
      %v2360 = vmax.f32 %v2273, 0.0
      %v2361 = vmax.f32 %v2275, 0.0
      %v2362 = vmax.f32 %v2326, 0.0
      %v2363 = vmax.f32 %v2328, 0.0
      %v2364 = vmax.f32 %v2118, 0.0
      %v2365 = vmax.f32 %v2120, 0.0
      %v2366 = vmax.f32 %v2171, 0.0
      %v2367 = vmax.f32 %v2173, 0.0
      %v2368 = vmax.f32 %v2224, 0.0
      %v2369 = vmax.f32 %v2226, 0.0
      %v2370 = vmax.f32 %v2277, 0.0
      %v2371 = vmax.f32 %v2279, 0.0
      %v2372 = vmax.f32 %v2330, 0.0
      %v2373 = vmax.f32 %v2332, 0.0
      %v2374 = vpack.c.bf16 %v2344, %v2334
      %v2375 = vpack.c.bf16 %v2345, %v2335
      %v2376 = vpack.c.bf16 %v2346, %v2336
      %v2377 = vpack.c.bf16 %v2347, %v2337
      %v2378 = vpack.c.bf16 %v2348, %v2338
      %v2379 = vpack.c.bf16 %v2349, %v2339
      %v2380 = vpack.c.bf16 %v2350, %v2340
      %v2381 = vpack.c.bf16 %v2351, %v2341
      %v2382 = vpack.c.bf16 %v2352, %v2342
      %v2383 = vpack.c.bf16 %v2353, %v2343
      %v2384 = vpack.c.bf16 %v2364, %v2354
      %v2385 = vpack.c.bf16 %v2365, %v2355
      %v2386 = vpack.c.bf16 %v2366, %v2356
      %v2387 = vpack.c.bf16 %v2367, %v2357
      %v2388 = vpack.c.bf16 %v2368, %v2358
      %v2389 = vpack.c.bf16 %v2369, %v2359
      %v2390 = vpack.c.bf16 %v2370, %v2360
      %v2391 = vpack.c.bf16 %v2371, %v2361
      %v2392 = vpack.c.bf16 %v2372, %v2362
      %v2393 = vpack.c.bf16 %v2373, %v2363
      %2412 = vrot.lane.b32.xlu0 %v2374, 126
      %v2413 = vpop.permute.xlu0 %2412
      %2414 = vrot.lane.b32.xlu0 %v2375, 126
      %v2415 = vpop.permute.xlu0 %2414
      %2416 = vrot.lane.b32.xlu0 %v2376, 126
      %v2417 = vpop.permute.xlu0 %2416
      %2418 = vrot.lane.b32.xlu0 %v2377, 126
      %v2419 = vpop.permute.xlu0 %2418
      %2420 = vrot.lane.b32.xlu0 %v2378, 126
      %v2421 = vpop.permute.xlu0 %2420
      %2422 = vrot.lane.b32.xlu0 %v2379, 126
      %v2423 = vpop.permute.xlu0 %2422
      %2424 = vrot.lane.b32.xlu0 %v2380, 126
      %v2425 = vpop.permute.xlu0 %2424
      %2426 = vrot.lane.b32.xlu0 %v2381, 126
      %v2427 = vpop.permute.xlu0 %2426
      %2428 = vrot.lane.b32.xlu0 %v2382, 126
      %v2429 = vpop.permute.xlu0 %2428
      %2430 = vrot.lane.b32.xlu0 %v2384, 126
      %v2431 = vpop.permute.xlu0 %2430
      %2432 = vrot.lane.b32.xlu0 %v2385, 126
      %v2433 = vpop.permute.xlu0 %2432
      %2434 = vrot.lane.b32.xlu0 %v2386, 126
      %v2435 = vpop.permute.xlu0 %2434
      %2436 = vrot.lane.b32.xlu0 %v2387, 126
      %v2437 = vpop.permute.xlu0 %2436
      %2438 = vrot.lane.b32.xlu0 %v2388, 126
      %v2439 = vpop.permute.xlu0 %2438
      %2440 = vrot.lane.b32.xlu0 %v2389, 126
      %v2441 = vpop.permute.xlu0 %2440
      %2442 = vrot.lane.b32.xlu0 %v2390, 126
      %v2443 = vpop.permute.xlu0 %2442
      %2444 = vrot.lane.b32.xlu0 %v2391, 126
      %v2445 = vpop.permute.xlu0 %2444
      %2446 = vrot.lane.b32.xlu0 %v2392, 126
      %v2447 = vpop.permute.xlu0 %2446
      %v2448 = vsel %vm198, %v2413, %v2415
      %v2449 = vsel %vm198, %v2415, %v2417
      %v2450 = vsel %vm198, %v2417, %v2419
      %v2451 = vsel %vm198, %v2419, %v2421
      %v2452 = vsel %vm198, %v2421, %v2423
      %v2453 = vsel %vm198, %v2423, %v2425
      %v2454 = vsel %vm198, %v2425, %v2427
      %v2455 = vsel %vm198, %v2427, %v2429
      %v2456 = vsel %vm198, %v2431, %v2433
      %v2457 = vsel %vm198, %v2433, %v2435
      %v2458 = vsel %vm198, %v2435, %v2437
      %v2459 = vsel %vm198, %v2437, %v2439
      %v2460 = vsel %vm198, %v2439, %v2441
      %v2461 = vsel %vm198, %v2441, %v2443
      %v2462 = vsel %vm198, %v2443, %v2445
      %v2463 = vsel %vm198, %v2445, %v2447
      %v2482 = vmax.bf16 %v2374, %v2448
      %v2483 = vmax.bf16 %v2375, %v2449
      %v2484 = vmax.bf16 %v2376, %v2450
      %v2485 = vmax.bf16 %v2377, %v2451
      %v2486 = vmax.bf16 %v2378, %v2452
      %v2487 = vmax.bf16 %v2379, %v2453
      %v2488 = vmax.bf16 %v2380, %v2454
      %v2489 = vmax.bf16 %v2381, %v2455
      %v2490 = vmax.bf16 %v2382, %v2429
      %v2491 = vmax.bf16 %v2384, %v2456
      %v2492 = vmax.bf16 %v2385, %v2457
      %v2493 = vmax.bf16 %v2386, %v2458
      %v2494 = vmax.bf16 %v2387, %v2459
      %v2495 = vmax.bf16 %v2388, %v2460
      %v2496 = vmax.bf16 %v2389, %v2461
      %v2497 = vmax.bf16 %v2390, %v2462
      %v2498 = vmax.bf16 %v2391, %v2463
      %v2499 = vmax.bf16 %v2392, %v2447
      %2502 = vrot.lane.b32.xlu0 %v2383, 126
      %v2503 = vpop.permute.xlu0 %2502
      %2504 = vrot.lane.b32.xlu0 %v2393, 126
      %v2505 = vpop.permute.xlu0 %2504
      %v2506 = vsel %vm198, %v2429, %v2503
      %v2507 = vsel %vm198, %v2447, %v2505
      %v2512 = vmax.bf16 %v2382, %v2506
      %v2513 = vmax.bf16 %v2383, %v2503
      %v2514 = vmax.bf16 %v2392, %v2507
      %v2515 = vmax.bf16 %v2393, %v2505
      %2536 = vrot.lane.b32.xlu0 %v2482, 48
      %v2537 = vpop.permute.xlu0 %2536
      %2538 = vrot.lane.b32.xlu0 %v2483, 48
      %v2539 = vpop.permute.xlu0 %2538
      %2540 = vrot.lane.b32.xlu0 %v2484, 48
      %v2541 = vpop.permute.xlu0 %2540
      %2542 = vrot.lane.b32.xlu0 %v2485, 48
      %v2543 = vpop.permute.xlu0 %2542
      %2544 = vrot.lane.b32.xlu0 %v2486, 48
      %v2545 = vpop.permute.xlu0 %2544
      %2546 = vrot.lane.b32.xlu0 %v2487, 48
      %v2547 = vpop.permute.xlu0 %2546
      %2548 = vrot.lane.b32.xlu0 %v2488, 48
      %v2549 = vpop.permute.xlu0 %2548
      %2550 = vrot.lane.b32.xlu0 %v2489, 48
      %v2551 = vpop.permute.xlu0 %2550
      %2552 = vrot.lane.b32.xlu0 %v2512, 48
      %v2553 = vpop.permute.xlu0 %2552
      %2554 = vrot.lane.b32.xlu0 %v2513, 48
      %v2555 = vpop.permute.xlu0 %2554
      %2556 = vrot.lane.b32.xlu0 %v2491, 48
      %v2557 = vpop.permute.xlu0 %2556
      %2558 = vrot.lane.b32.xlu0 %v2492, 48
      %v2559 = vpop.permute.xlu0 %2558
      %2560 = vrot.lane.b32.xlu0 %v2493, 48
      %v2561 = vpop.permute.xlu0 %2560
      %2562 = vrot.lane.b32.xlu0 %v2494, 48
      %v2563 = vpop.permute.xlu0 %2562
      %2564 = vrot.lane.b32.xlu0 %v2495, 48
      %v2565 = vpop.permute.xlu0 %2564
      %2566 = vrot.lane.b32.xlu0 %v2496, 48
      %v2567 = vpop.permute.xlu0 %2566
      %2568 = vrot.lane.b32.xlu0 %v2497, 48
      %v2569 = vpop.permute.xlu0 %2568
      %2570 = vrot.lane.b32.xlu0 %v2498, 48
      %v2571 = vpop.permute.xlu0 %2570
      %2572 = vrot.lane.b32.xlu0 %v2514, 48
      %v2573 = vpop.permute.xlu0 %2572
      %2574 = vrot.lane.b32.xlu0 %v2515, 48
      %v2575 = vpop.permute.xlu0 %2574
      %v2576 = vsel %vm406, %v2537, %v2539
      %v2577 = vsel %vm406, %v2539, %v2541
      %v2578 = vsel %vm406, %v2541, %v2543
      %v2579 = vsel %vm406, %v2543, %v2545
      %v2580 = vsel %vm406, %v2545, %v2547
      %v2581 = vsel %vm406, %v2547, %v2549
      %v2582 = vsel %vm406, %v2549, %v2551
      %v2583 = vsel %vm406, %v2551, %v2553
      %v2584 = vsel %vm406, %v2553, %v2555
      %v2585 = vsel %vm406, %v2557, %v2559
      %v2586 = vsel %vm406, %v2559, %v2561
      %v2587 = vsel %vm406, %v2561, %v2563
      %v2588 = vsel %vm406, %v2563, %v2565
      %v2589 = vsel %vm406, %v2565, %v2567
      %v2590 = vsel %vm406, %v2567, %v2569
      %v2591 = vsel %vm406, %v2569, %v2571
      %v2592 = vsel %vm406, %v2571, %v2573
      %v2593 = vsel %vm406, %v2573, %v2575
      %v2612 = vmax.bf16 %v2482, %v2576
      %v2613 = vmax.bf16 %v2483, %v2577
      %v2614 = vmax.bf16 %v2484, %v2578
      %v2615 = vmax.bf16 %v2485, %v2579
      %v2616 = vmax.bf16 %v2486, %v2580
      %v2617 = vmax.bf16 %v2487, %v2581
      %v2618 = vmax.bf16 %v2488, %v2582
      %v2619 = vmax.bf16 %v2489, %v2583
      %v2620 = vmax.bf16 %v2490, %v2584
      %v2621 = vmax.bf16 %v2491, %v2585
      %v2622 = vmax.bf16 %v2492, %v2586
      %v2623 = vmax.bf16 %v2493, %v2587
      %v2624 = vmax.bf16 %v2494, %v2588
      %v2625 = vmax.bf16 %v2495, %v2589
      %v2626 = vmax.bf16 %v2496, %v2590
      %v2627 = vmax.bf16 %v2497, %v2591
      %v2628 = vmax.bf16 %v2498, %v2592
      %v2629 = vmax.bf16 %v2499, %v2593
      %v2630 = vld [vmem:[%s7] sm:$0xf]
      %v2631 = vld [vmem:[%s7 + $0x4] sm:$0xf]
      %v2632 = vld [vmem:[%s7 + $0x8] sm:$0xf]
      %v2633 = vld [vmem:[%s7 + $0xc] sm:$0xf]
      %v2634 = vld [vmem:[%s7 + $0x10] sm:$0xf]
      %v2635 = vld [vmem:[%s7 + $0x14] sm:$0xf]
      %v2636 = vld [vmem:[%s7 + $0x18] sm:$0xf]
      %v2637 = vld [vmem:[%s7 + $0x1c] sm:$0xf]
      %v2638 = vld [vmem:[%s7 + $0x20] sm:$0xf]
      %v2639 = vld [vmem:[%s7 + $0x24] sm:$0xf]
      %v2640 = vld [vmem:[%s7 + $0x28] sm:$0xf]
      %v2641 = vld [vmem:[%s7 + $0x2c] sm:$0xf]
      %v2642 = vld [vmem:[%s7 + $0x30] sm:$0xf]
      %v2643 = vld [vmem:[%s7 + $0x34] sm:$0xf]
      %v2644 = vld [vmem:[%s7 + $0x38] sm:$0xf]
      %v2645 = vld [vmem:[%s7 + $0x3c] sm:$0xf]
      %v2646 = vld [vmem:[%s7 + $0x40] sm:$0xf]
      %v2647 = vld [vmem:[%s7 + $0x44] sm:$0xf]
      %v2648 = vld [vmem:[%s7 + $0x48] sm:$0xf]
      %v2649 = vld [vmem:[%s7 + $0x4c] sm:$0xf]
      %v2650 = vld [vmem:[%s7 + $0x50] sm:$0xf]
      %v2651 = vld [vmem:[%s7 + $0x54] sm:$0xf]
      %v2652 = vld [vmem:[%s7 + $0x58] sm:$0xf]
      %v2653 = vld [vmem:[%s7 + $0x5c] sm:$0xf]
      %v2654 = vld [vmem:[%s7 + $0x60] sm:$0xf]
      %v2655 = vld [vmem:[%s7 + $0x64] sm:$0xf]
      %v2656 = vld [vmem:[%s7 + $0x68] sm:$0xf]
      %v2657 = vld [vmem:[%s7 + $0x6c] sm:$0xf]
      %v2658 = vld [vmem:[%s7 + $0x70] sm:$0xf]
      %v2659 = vld [vmem:[%s7 + $0x74] sm:$0xf]
      %v2660 = vld [vmem:[%s7 + $0x78] sm:$0xf]
      %v2661 = vld [vmem:[%s7 + $0x7c] sm:$0xf]
      %v2662 = vld [vmem:[%s7 + $0x80] sm:$0xf]
      %v2663 = vld [vmem:[%s7 + $0x84] sm:$0xf]
      %v2664 = vld [vmem:[%s7 + $0x88] sm:$0xf]
      %v2665 = vld [vmem:[%s7 + $0x8c] sm:$0xf]
      %v2666 = vld [vmem:[%s7 + $0x90] sm:$0xf]
      %v2667 = vld [vmem:[%s7 + $0x94] sm:$0xf]
      %v2668 = vld [vmem:[%s7 + $0x98] sm:$0xf]
      %v2669 = vld [vmem:[%s7 + $0x9c] sm:$0xf]
      %v2670 = vld [vmem:[%s7 + $0xa0] sm:$0xf]
      %v2671 = vld [vmem:[%s7 + $0xa4] sm:$0xf]
      %v2672 = vld [vmem:[%s7 + $0xa8] sm:$0xf]
      %v2673 = vld [vmem:[%s7 + $0xac] sm:$0xf]
      %v2674 = vld [vmem:[%s7 + $0xb0] sm:$0xf]
      %v2675 = vld [vmem:[%s7 + $0xb4] sm:$0xf]
      %v2676 = vld [vmem:[%s7 + $0xb8] sm:$0xf]
      %v2677 = vld [vmem:[%s7 + $0xbc] sm:$0xf]
      %v2678 = vld [vmem:[%s7 + $0xc0] sm:$0xf]
      %v2679 = vld [vmem:[%s7 + $0xc4] sm:$0xf]
      %v2680 = vld [vmem:[%s7 + $0xc8] sm:$0xf]
      %v2681 = vld [vmem:[%s7 + $0xcc] sm:$0xf]
      %v2682 = vld [vmem:[%s7 + $0xd0] sm:$0xf]
      %v2683 = vld [vmem:[%s7 + $0xd4] sm:$0xf]
      %v2684 = vld [vmem:[%s7 + $0xd8] sm:$0xf]
      %v2685 = vld [vmem:[%s7 + $0xdc] sm:$0xf]
      %v2686 = vld [vmem:[%s7 + $0xe0] sm:$0xf]
      %v2687 = vld [vmem:[%s7 + $0xe4] sm:$0xf]
      %v2688 = vld [vmem:[%s7 + $0xe8] sm:$0xf]
      %v2689 = vld [vmem:[%s7 + $0xec] sm:$0xf]
      %v2690 = vld [vmem:[%s7 + $0xf0] sm:$0xf]
      %v2691 = vld [vmem:[%s7 + $0xf4] sm:$0xf]
      %v2692 = vld [vmem:[%s7 + $0xf8] sm:$0xf]
      %v2693 = vld [vmem:[%s7 + $0xfc] sm:$0xf]
      %v2694 = vld [vmem:[%s7 + $0x100] sm:$0xf]
      %v2695 = vld [vmem:[%s7 + $0x104] sm:$0xf]
      %v2696 = vld [vmem:[%s7 + $0x108] sm:$0xf]
      %v2697 = vld [vmem:[%s7 + $0x10c] sm:$0xf]
      %v2698 = vld [vmem:[%s7 + $0x110] sm:$0xf]
      %v2699 = vld [vmem:[%s7 + $0x114] sm:$0xf]
      %v2700 = vld [vmem:[%s7 + $0x118] sm:$0xf]
      %v2701 = vld [vmem:[%s7 + $0x11c] sm:$0xf]
      %v2702 = vld [vmem:[%s7 + $0x120] sm:$0xf]
      %v2703 = vld [vmem:[%s7 + $0x124] sm:$0xf]
      %v2704 = vld [vmem:[%s7 + $0x128] sm:$0xf]
      %v2705 = vld [vmem:[%s7 + $0x12c] sm:$0xf]
      %v2706 = vld [vmem:[%s7 + $0x130] sm:$0xf]
      %v2707 = vld [vmem:[%s7 + $0x134] sm:$0xf]
      %v2708 = vld [vmem:[%s7 + $0x138] sm:$0xf]
      %v2709 = vld [vmem:[%s7 + $0x13c] sm:$0xf]
      %v2710 = vld [vmem:[%s7 + $0x140] sm:$0xf]
      %v2711 = vld [vmem:[%s7 + $0x144] sm:$0xf]
      %v2712 = vld [vmem:[%s7 + $0x148] sm:$0xf]
      %v2713 = vld [vmem:[%s7 + $0x14c] sm:$0xf]
      %v2714 = vld [vmem:[%s7 + $0x150] sm:$0xf]
      %v2715 = vld [vmem:[%s7 + $0x154] sm:$0xf]
      %v2716 = vld [vmem:[%s7 + $0x158] sm:$0xf]
      %v2717 = vld [vmem:[%s7 + $0x15c] sm:$0xf]
      %v2718 = vld [vmem:[%s7 + $0x160] sm:$0xf]
      %v2719 = vld [vmem:[%s7 + $0x164] sm:$0xf]
      %v2720 = vld [vmem:[%s7 + $0x168] sm:$0xf]
      %v2721 = vld [vmem:[%s7 + $0x16c] sm:$0xf]
      %v2722 = vld [vmem:[%s7 + $0x170] sm:$0xf]
      %v2723 = vld [vmem:[%s7 + $0x174] sm:$0xf]
      %v2724 = vld [vmem:[%s7 + $0x178] sm:$0xf]
      %v2725 = vld [vmem:[%s7 + $0x17c] sm:$0xf]
      %v2726 = vld [vmem:[%s7 + $0x180] sm:$0xf]
      %v2727 = vld [vmem:[%s7 + $0x184] sm:$0xf]
      %v2728 = vld [vmem:[%s7 + $0x188] sm:$0xf]
      %v2729 = vld [vmem:[%s7 + $0x18c] sm:$0xf]
      %v2730 = vld [vmem:[%s7 + $0x190] sm:$0xf]
      %v2731 = vld [vmem:[%s7 + $0x194] sm:$0xf]
      %v2732 = vld [vmem:[%s7 + $0x198] sm:$0xf]
      %v2733 = vld [vmem:[%s7 + $0x19c] sm:$0xf]
      %v2734 = vld [vmem:[%s7 + $0x1a0] sm:$0xf]
      %v2735 = vld [vmem:[%s7 + $0x1a4] sm:$0xf]
      %v2736 = vld [vmem:[%s7 + $0x1a8] sm:$0xf]
      %v2737 = vld [vmem:[%s7 + $0x1ac] sm:$0xf]
      %v2738 = vld [vmem:[%s7 + $0x1b0] sm:$0xf]
      %v2739 = vld [vmem:[%s7 + $0x1b4] sm:$0xf]
      %v2740 = vld [vmem:[%s7 + $0x1b8] sm:$0xf]
      %v2741 = vld [vmem:[%s7 + $0x1bc] sm:$0xf]
      %v2742 = vld [vmem:[%s7 + $0x1c0] sm:$0xf]
      %v2743 = vld [vmem:[%s7 + $0x1c4] sm:$0xf]
      %v2744 = vld [vmem:[%s7 + $0x1c8] sm:$0xf]
      %v2745 = vld [vmem:[%s7 + $0x1cc] sm:$0xf]
      %v2746 = vld [vmem:[%s7 + $0x1d0] sm:$0xf]
      %v2747 = vld [vmem:[%s7 + $0x1d4] sm:$0xf]
      %v2748 = vld [vmem:[%s7 + $0x1d8] sm:$0xf]
      %v2749 = vld [vmem:[%s7 + $0x1dc] sm:$0xf]
      %v2750 = vld [vmem:[%s7 + $0x1e0] sm:$0xf]
      %v2751 = vld [vmem:[%s7 + $0x1e4] sm:$0xf]
      %v2752 = vld [vmem:[%s7 + $0x1e8] sm:$0xf]
      %v2753 = vld [vmem:[%s7 + $0x1ec] sm:$0xf]
      %v2754 = vld [vmem:[%s7 + $0x1f0] sm:$0xf]
      %v2755 = vld [vmem:[%s7 + $0x1f4] sm:$0xf]
      %v2756 = vld [vmem:[%s7 + $0x1f8] sm:$0xf]
      %v2757 = vld [vmem:[%s7 + $0x1fc] sm:$0xf]
      %v2758 = vld [vmem:[%s7 + $0x200] sm:$0xf]
      %v2759 = vld [vmem:[%s7 + $0x204] sm:$0xf]
      %v2760 = vld [vmem:[%s7 + $0x208] sm:$0xf]
      %v2761 = vld [vmem:[%s7 + $0x20c] sm:$0xf]
      %v2762 = vld [vmem:[%s7 + $0x210] sm:$0xf]
      %v2763 = vld [vmem:[%s7 + $0x214] sm:$0xf]
      %v2764 = vld [vmem:[%s7 + $0x218] sm:$0xf]
      %v2765 = vld [vmem:[%s7 + $0x21c] sm:$0xf]
      %v2766 = vld [vmem:[%s7 + $0x220] sm:$0xf]
      %v2767 = vld [vmem:[%s7 + $0x224] sm:$0xf]
      %v2768 = vld [vmem:[%s7 + $0x228] sm:$0xf]
      %v2769 = vld [vmem:[%s7 + $0x22c] sm:$0xf]
      %v2770 = vld [vmem:[%s7 + $0x230] sm:$0xf]
      %v2771 = vld [vmem:[%s7 + $0x234] sm:$0xf]
      %v2772 = vld [vmem:[%s7 + $0x238] sm:$0xf]
      %v2773 = vld [vmem:[%s7 + $0x23c] sm:$0x7]
      %v2918 = vunpack.c.l.b16 %v2630
      %v2919 = vunpack.c.l.b16 %v2631
      %v2920 = vunpack.c.l.b16 %v2632
      %v2921 = vunpack.c.l.b16 %v2633
      %v2922 = vunpack.c.l.b16 %v2634
      %v2923 = vunpack.c.l.b16 %v2635
      %v2924 = vunpack.c.l.b16 %v2636
      %v2925 = vunpack.c.l.b16 %v2637
      %v2926 = vunpack.c.l.b16 %v2638
      %v2927 = vunpack.c.l.b16 %v2639
      %v2928 = vunpack.c.l.b16 %v2640
      %v2929 = vunpack.c.l.b16 %v2641
      %v2930 = vunpack.c.l.b16 %v2642
      %v2931 = vunpack.c.l.b16 %v2643
      %v2932 = vunpack.c.l.b16 %v2644
      %v2933 = vunpack.c.l.b16 %v2645
      %v2934 = vunpack.c.l.b16 %v2646
      %v2935 = vunpack.c.l.b16 %v2647
      %v2936 = vunpack.c.l.b16 %v2648
      %v2937 = vunpack.c.l.b16 %v2649
      %v2938 = vunpack.c.l.b16 %v2650
      %v2939 = vunpack.c.l.b16 %v2651
      %v2940 = vunpack.c.l.b16 %v2652
      %v2941 = vunpack.c.l.b16 %v2653
      %v2942 = vunpack.c.l.b16 %v2654
      %v2943 = vunpack.c.l.b16 %v2655
      %v2944 = vunpack.c.l.b16 %v2656
      %v2945 = vunpack.c.l.b16 %v2657
      %v2946 = vunpack.c.l.b16 %v2658
      %v2947 = vunpack.c.l.b16 %v2659
      %v2948 = vunpack.c.l.b16 %v2660
      %v2949 = vunpack.c.l.b16 %v2661
      %v2950 = vunpack.c.l.b16 %v2662
      %v2951 = vunpack.c.l.b16 %v2663
      %v2952 = vunpack.c.l.b16 %v2664
      %v2953 = vunpack.c.l.b16 %v2665
      %v2954 = vunpack.c.l.b16 %v2666
      %v2955 = vunpack.c.l.b16 %v2667
      %v2956 = vunpack.c.l.b16 %v2668
      %v2957 = vunpack.c.l.b16 %v2669
      %v2958 = vunpack.c.l.b16 %v2670
      %v2959 = vunpack.c.l.b16 %v2671
      %v2960 = vunpack.c.l.b16 %v2672
      %v2961 = vunpack.c.l.b16 %v2673
      %v2962 = vunpack.c.l.b16 %v2674
      %v2963 = vunpack.c.l.b16 %v2675
      %v2964 = vunpack.c.l.b16 %v2676
      %v2965 = vunpack.c.l.b16 %v2677
      %v2966 = vunpack.c.l.b16 %v2678
      %v2967 = vunpack.c.l.b16 %v2679
      %v2968 = vunpack.c.l.b16 %v2680
      %v2969 = vunpack.c.l.b16 %v2681
      %v2970 = vunpack.c.l.b16 %v2682
      %v2971 = vunpack.c.l.b16 %v2683
      %v2972 = vunpack.c.l.b16 %v2684
      %v2973 = vunpack.c.l.b16 %v2685
      %v2974 = vunpack.c.l.b16 %v2686
      %v2975 = vunpack.c.l.b16 %v2687
      %v2976 = vunpack.c.l.b16 %v2688
      %v2977 = vunpack.c.l.b16 %v2689
      %v2978 = vunpack.c.l.b16 %v2690
      %v2979 = vunpack.c.l.b16 %v2691
      %v2980 = vunpack.c.l.b16 %v2692
      %v2981 = vunpack.c.l.b16 %v2693
      %v2982 = vunpack.c.l.b16 %v2694
      %v2983 = vunpack.c.l.b16 %v2695
      %v2984 = vunpack.c.l.b16 %v2696
      %v2985 = vunpack.c.l.b16 %v2697
      %v2986 = vunpack.c.l.b16 %v2698
      %v2987 = vunpack.c.l.b16 %v2699
      %v2988 = vunpack.c.l.b16 %v2700
      %v2989 = vunpack.c.l.b16 %v2701
      %v2990 = vunpack.c.l.b16 %v2702
      %v2991 = vunpack.c.l.b16 %v2703
      %v2992 = vunpack.c.l.b16 %v2704
      %v2993 = vunpack.c.l.b16 %v2705
      %v2994 = vunpack.c.l.b16 %v2706
      %v2995 = vunpack.c.l.b16 %v2707
      %v2996 = vunpack.c.l.b16 %v2708
      %v2997 = vunpack.c.l.b16 %v2709
      %v2998 = vunpack.c.l.b16 %v2710
      %v2999 = vunpack.c.l.b16 %v2711
      %v3000 = vunpack.c.l.b16 %v2712
      %v3001 = vunpack.c.l.b16 %v2713
      %v3002 = vunpack.c.l.b16 %v2714
      %v3003 = vunpack.c.l.b16 %v2715
      %v3004 = vunpack.c.l.b16 %v2716
      %v3005 = vunpack.c.l.b16 %v2717
      %v3006 = vunpack.c.l.b16 %v2718
      %v3007 = vunpack.c.l.b16 %v2719
      %v3008 = vunpack.c.l.b16 %v2720
      %v3009 = vunpack.c.l.b16 %v2721
      %v3010 = vunpack.c.l.b16 %v2722
      %v3011 = vunpack.c.l.b16 %v2723
      %v3012 = vunpack.c.l.b16 %v2724
      %v3013 = vunpack.c.l.b16 %v2725
      %v3014 = vunpack.c.l.b16 %v2726
      %v3015 = vunpack.c.l.b16 %v2727
      %v3016 = vunpack.c.l.b16 %v2728
      %v3017 = vunpack.c.l.b16 %v2729
      %v3018 = vunpack.c.l.b16 %v2730
      %v3019 = vunpack.c.l.b16 %v2731
      %v3020 = vunpack.c.l.b16 %v2732
      %v3021 = vunpack.c.l.b16 %v2733
      %v3022 = vunpack.c.l.b16 %v2734
      %v3023 = vunpack.c.l.b16 %v2735
      %v3024 = vunpack.c.l.b16 %v2736
      %v3025 = vunpack.c.l.b16 %v2737
      %v3026 = vunpack.c.l.b16 %v2738
      %v3027 = vunpack.c.l.b16 %v2739
      %v3028 = vunpack.c.l.b16 %v2740
      %v3029 = vunpack.c.l.b16 %v2741
      %v3030 = vunpack.c.l.b16 %v2742
      %v3031 = vunpack.c.l.b16 %v2743
      %v3032 = vunpack.c.l.b16 %v2744
      %v3033 = vunpack.c.l.b16 %v2745
      %v3034 = vunpack.c.l.b16 %v2746
      %v3035 = vunpack.c.l.b16 %v2747
      %v3036 = vunpack.c.l.b16 %v2748
      %v3037 = vunpack.c.l.b16 %v2749
      %v3038 = vunpack.c.l.b16 %v2750
      %v3039 = vunpack.c.l.b16 %v2751
      %v3040 = vunpack.c.l.b16 %v2752
      %v3041 = vunpack.c.l.b16 %v2753
      %v3042 = vunpack.c.l.b16 %v2754
      %v3043 = vunpack.c.l.b16 %v2755
      %v3044 = vunpack.c.l.b16 %v2756
      %v3045 = vunpack.c.l.b16 %v2757
      %v3046 = vunpack.c.l.b16 %v2758
      %v3047 = vunpack.c.l.b16 %v2759
      %v3048 = vunpack.c.l.b16 %v2760
      %v3049 = vunpack.c.l.b16 %v2761
      %v3050 = vunpack.c.l.b16 %v2762
      %v3051 = vunpack.c.l.b16 %v2763
      %v3052 = vunpack.c.l.b16 %v2764
      %v3053 = vunpack.c.l.b16 %v2765
      %v3054 = vunpack.c.l.b16 %v2766
      %v3055 = vunpack.c.l.b16 %v2767
      %v3056 = vunpack.c.l.b16 %v2768
      %v3057 = vunpack.c.l.b16 %v2769
      %v3058 = vunpack.c.l.b16 %v2770
      %v3059 = vunpack.c.l.b16 %v2771
      %v3060 = vunpack.c.l.b16 %v2772
      %v3061 = vunpack.c.l.b16 %v2773
      %v3062 = vpack.c.b16 %v2919, %v2918
      %v3063 = vpack.c.b16 %v2921, %v2920
      %v3064 = vpack.c.b16 %v2923, %v2922
      %v3065 = vpack.c.b16 %v2925, %v2924
      %v3066 = vpack.c.b16 %v2927, %v2926
      %v3067 = vpack.c.b16 %v2929, %v2928
      %v3068 = vpack.c.b16 %v2931, %v2930
      %v3069 = vpack.c.b16 %v2933, %v2932
      %v3070 = vpack.c.b16 %v2935, %v2934
      %v3071 = vpack.c.b16 %v2937, %v2936
      %v3072 = vpack.c.b16 %v2939, %v2938
      %v3073 = vpack.c.b16 %v2941, %v2940
      %v3074 = vpack.c.b16 %v2943, %v2942
      %v3075 = vpack.c.b16 %v2945, %v2944
      %v3076 = vpack.c.b16 %v2947, %v2946
      %v3077 = vpack.c.b16 %v2949, %v2948
      %v3078 = vpack.c.b16 %v2951, %v2950
      %v3079 = vpack.c.b16 %v2953, %v2952
      %v3080 = vpack.c.b16 %v2955, %v2954
      %v3081 = vpack.c.b16 %v2957, %v2956
      %v3082 = vpack.c.b16 %v2959, %v2958
      %v3083 = vpack.c.b16 %v2961, %v2960
      %v3084 = vpack.c.b16 %v2963, %v2962
      %v3085 = vpack.c.b16 %v2965, %v2964
      %v3086 = vpack.c.b16 %v2967, %v2966
      %v3087 = vpack.c.b16 %v2969, %v2968
      %v3088 = vpack.c.b16 %v2971, %v2970
      %v3089 = vpack.c.b16 %v2973, %v2972
      %v3090 = vpack.c.b16 %v2975, %v2974
      %v3091 = vpack.c.b16 %v2977, %v2976
      %v3092 = vpack.c.b16 %v2979, %v2978
      %v3093 = vpack.c.b16 %v2981, %v2980
      %v3094 = vpack.c.b16 %v2983, %v2982
      %v3095 = vpack.c.b16 %v2985, %v2984
      %v3096 = vpack.c.b16 %v2987, %v2986
      %v3097 = vpack.c.b16 %v2989, %v2988
      %v3098 = vpack.c.b16 %v2991, %v2990
      %v3099 = vpack.c.b16 %v2993, %v2992
      %v3100 = vpack.c.b16 %v2995, %v2994
      %v3101 = vpack.c.b16 %v2997, %v2996
      %v3102 = vpack.c.b16 %v2999, %v2998
      %v3103 = vpack.c.b16 %v3001, %v3000
      %v3104 = vpack.c.b16 %v3003, %v3002
      %v3105 = vpack.c.b16 %v3005, %v3004
      %v3106 = vpack.c.b16 %v3007, %v3006
      %v3107 = vpack.c.b16 %v3009, %v3008
      %v3108 = vpack.c.b16 %v3011, %v3010
      %v3109 = vpack.c.b16 %v3013, %v3012
      %v3110 = vpack.c.b16 %v3015, %v3014
      %v3111 = vpack.c.b16 %v3017, %v3016
      %v3112 = vpack.c.b16 %v3019, %v3018
      %v3113 = vpack.c.b16 %v3021, %v3020
      %v3114 = vpack.c.b16 %v3023, %v3022
      %v3115 = vpack.c.b16 %v3025, %v3024
      %v3116 = vpack.c.b16 %v3027, %v3026
      %v3117 = vpack.c.b16 %v3029, %v3028
      %v3118 = vpack.c.b16 %v3031, %v3030
      %v3119 = vpack.c.b16 %v3033, %v3032
      %v3120 = vpack.c.b16 %v3035, %v3034
      %v3121 = vpack.c.b16 %v3037, %v3036
      %v3122 = vpack.c.b16 %v3039, %v3038
      %v3123 = vpack.c.b16 %v3041, %v3040
      %v3124 = vpack.c.b16 %v3043, %v3042
      %v3125 = vpack.c.b16 %v3045, %v3044
      %v3126 = vpack.c.b16 %v3047, %v3046
      %v3127 = vpack.c.b16 %v3049, %v3048
      %v3128 = vpack.c.b16 %v3051, %v3050
      %v3129 = vpack.c.b16 %v3053, %v3052
      %v3130 = vpack.c.b16 %v3055, %v3054
      %v3131 = vpack.c.b16 %v3057, %v3056
      %v3132 = vpack.c.b16 %v3059, %v3058
      %v3133 = vpack.c.b16 %v3061, %v3060
      %vm3205 = vcmask 1022976
      %v3207 = vsel %vm3205, %v2620, 0
      %v3210 = vsel %vm3205, %v2629, 0
      %vm3212 = vcmask 1045504
      %vm3213 = vcmask 1046528
      %v3214 = vsel %vm3212, 4294967295, 65535
      %v3215 = vsel %vm3213, %v3214, 0
      %v3217 = vand.u32 %v3133, %v3215
      %3219 = vmatprep.subr.bf16.mxu0 0
      %3220 = vmatpush1.bf16.msra.mxu0 %v3069
      %3221 = vmatprep.subr.bf16.mxu0 0
      %3222 = vmatpush1.bf16.msra.mxu0 %v3068
      %3223 = vmatprep.subr.bf16.mxu0 0
      %3224 = vmatpush1.bf16.msra.mxu0 %v3067
      %3225 = vmatprep.subr.bf16.mxu0 0
      %3226 = vmatpush1.bf16.msra.mxu0 %v3066
      %3227 = vmatprep.subr.bf16.mxu0 0
      %3228 = vmatpush1.bf16.msra.mxu0 %v3065
      %3229 = vmatprep.subr.bf16.mxu0 0
      %3230 = vmatpush1.bf16.msra.mxu0 %v3064
      %3231 = vmatprep.subr.bf16.mxu0 0
      %3232 = vmatpush1.bf16.msra.mxu0 %v3063
      %3233 = vmatprep.subr.bf16.mxu0 0
      %3234 = vmatpush1.bf16.msra.mxu0 %v3062
      %3235 = vmatprep.subr.bf16.mxu0 0
      %3236 = vmatpush2.bf16.msra.mxu0 %v3077
      %3237 = vmatprep.subr.bf16.mxu0 0
      %3238 = vmatpush2.bf16.msra.mxu0 %v3076
      %3239 = vmatprep.subr.bf16.mxu0 0
      %3240 = vmatpush2.bf16.msra.mxu0 %v3075
      %3241 = vmatprep.subr.bf16.mxu0 0
      %3242 = vmatpush2.bf16.msra.mxu0 %v3074
      %3243 = vmatprep.subr.bf16.mxu0 0
      %3244 = vmatpush2.bf16.msra.mxu0 %v3073
      %3245 = vmatprep.subr.bf16.mxu0 0
      %3246 = vmatpush2.bf16.msra.mxu0 %v3072
      %3247 = vmatprep.subr.bf16.mxu0 0
      %3248 = vmatpush2.bf16.msra.mxu0 %v3071
      %3249 = vmatprep.subr.bf16.mxu0 0
      %3250 = vmatpush2.bf16.msra.mxu0 %v3070
      %3251 = vmatprep.mubr.bf16.mxu0 %v2613
      %3252 = vmatmul.mubr.bf16.gmra.mxu0 %v2612
      %v3253 = vpop.f32.mrf.mxu0
      %v3254 = vadd.f32 0.0, %v3253
      %v3255 = vpop.f32.mrf.mxu0
      %v3256 = vpop.f32.mrf.mxu0
      %v3257 = vadd.f32 0.0, %v3256
      %v3258 = vpop.f32.mrf.mxu0
      %3259 = vmatprep.mubr.bf16.mxu0 %v2622
      %3260 = vmatmul.mubr.bf16.gmra.mxu0 %v2621
      %v3261 = vpop.f32.mrf.mxu0
      %v3262 = vadd.f32 0.0, %v3261
      %v3263 = vpop.f32.mrf.mxu0
      %v3264 = vpop.f32.mrf.mxu0
      %v3265 = vadd.f32 0.0, %v3264
      %v3266 = vpop.f32.mrf.mxu0
      %3267 = vdwg.mxu0
      %3268 = vmatprep.subr.bf16.mxu0 0
      %3269 = vmatpush1.bf16.msra.mxu0 %v3085
      %3270 = vmatprep.subr.bf16.mxu0 0
      %3271 = vmatpush1.bf16.msra.mxu0 %v3084
      %3272 = vmatprep.subr.bf16.mxu0 0
      %3273 = vmatpush1.bf16.msra.mxu0 %v3083
      %3274 = vmatprep.subr.bf16.mxu0 0
      %3275 = vmatpush1.bf16.msra.mxu0 %v3082
      %3276 = vmatprep.subr.bf16.mxu0 0
      %3277 = vmatpush1.bf16.msra.mxu0 %v3081
      %3278 = vmatprep.subr.bf16.mxu0 0
      %3279 = vmatpush1.bf16.msra.mxu0 %v3080
      %3280 = vmatprep.subr.bf16.mxu0 0
      %3281 = vmatpush1.bf16.msra.mxu0 %v3079
      %3282 = vmatprep.subr.bf16.mxu0 0
      %3283 = vmatpush1.bf16.msra.mxu0 %v3078
      %3284 = vmatprep.subr.bf16.mxu0 0
      %3285 = vmatpush2.bf16.msra.mxu0 %v3093
      %3286 = vmatprep.subr.bf16.mxu0 0
      %3287 = vmatpush2.bf16.msra.mxu0 %v3092
      %3288 = vmatprep.subr.bf16.mxu0 0
      %3289 = vmatpush2.bf16.msra.mxu0 %v3091
      %3290 = vmatprep.subr.bf16.mxu0 0
      %3291 = vmatpush2.bf16.msra.mxu0 %v3090
      %3292 = vmatprep.subr.bf16.mxu0 0
      %3293 = vmatpush2.bf16.msra.mxu0 %v3089
      %3294 = vmatprep.subr.bf16.mxu0 0
      %3295 = vmatpush2.bf16.msra.mxu0 %v3088
      %3296 = vmatprep.subr.bf16.mxu0 0
      %3297 = vmatpush2.bf16.msra.mxu0 %v3087
      %3298 = vmatprep.subr.bf16.mxu0 0
      %3299 = vmatpush2.bf16.msra.mxu0 %v3086
      %3300 = vmatprep.mubr.bf16.mxu0 %v2615
      %3301 = vmatmul.mubr.bf16.gmra.mxu0 %v2614
      %v3302 = vpop.f32.mrf.mxu0
      %v3303 = vadd.f32 %v3254, %v3302
      %v3304 = vpop.f32.mrf.mxu0
      %v3305 = vpop.f32.mrf.mxu0
      %v3306 = vadd.f32 %v3257, %v3305
      %v3307 = vpop.f32.mrf.mxu0
      %3308 = vmatprep.mubr.bf16.mxu0 %v2624
      %3309 = vmatmul.mubr.bf16.gmra.mxu0 %v2623
      %v3310 = vpop.f32.mrf.mxu0
      %v3311 = vadd.f32 %v3262, %v3310
      %v3312 = vpop.f32.mrf.mxu0
      %v3313 = vpop.f32.mrf.mxu0
      %v3314 = vadd.f32 %v3265, %v3313
      %v3315 = vpop.f32.mrf.mxu0
      %3316 = vdwg.mxu0
      %3317 = vmatprep.subr.bf16.mxu0 0
      %3318 = vmatpush1.bf16.msra.mxu0 %v3101
      %3319 = vmatprep.subr.bf16.mxu0 0
      %3320 = vmatpush1.bf16.msra.mxu0 %v3100
      %3321 = vmatprep.subr.bf16.mxu0 0
      %3322 = vmatpush1.bf16.msra.mxu0 %v3099
      %3323 = vmatprep.subr.bf16.mxu0 0
      %3324 = vmatpush1.bf16.msra.mxu0 %v3098
      %3325 = vmatprep.subr.bf16.mxu0 0
      %3326 = vmatpush1.bf16.msra.mxu0 %v3097
      %3327 = vmatprep.subr.bf16.mxu0 0
      %3328 = vmatpush1.bf16.msra.mxu0 %v3096
      %3329 = vmatprep.subr.bf16.mxu0 0
      %3330 = vmatpush1.bf16.msra.mxu0 %v3095
      %3331 = vmatprep.subr.bf16.mxu0 0
      %3332 = vmatpush1.bf16.msra.mxu0 %v3094
      %3333 = vmatprep.subr.bf16.mxu0 0
      %3334 = vmatpush2.bf16.msra.mxu0 %v3109
      %3335 = vmatprep.subr.bf16.mxu0 0
      %3336 = vmatpush2.bf16.msra.mxu0 %v3108
      %3337 = vmatprep.subr.bf16.mxu0 0
      %3338 = vmatpush2.bf16.msra.mxu0 %v3107
      %3339 = vmatprep.subr.bf16.mxu0 0
      %3340 = vmatpush2.bf16.msra.mxu0 %v3106
      %3341 = vmatprep.subr.bf16.mxu0 0
      %3342 = vmatpush2.bf16.msra.mxu0 %v3105
      %3343 = vmatprep.subr.bf16.mxu0 0
      %3344 = vmatpush2.bf16.msra.mxu0 %v3104
      %3345 = vmatprep.subr.bf16.mxu0 0
      %3346 = vmatpush2.bf16.msra.mxu0 %v3103
      %3347 = vmatprep.subr.bf16.mxu0 0
      %3348 = vmatpush2.bf16.msra.mxu0 %v3102
      %3349 = vmatprep.mubr.bf16.mxu0 %v2617
      %3350 = vmatmul.mubr.bf16.gmra.mxu0 %v2616
      %v3351 = vpop.f32.mrf.mxu0
      %v3352 = vadd.f32 %v3303, %v3351
      %v3353 = vpop.f32.mrf.mxu0
      %v3354 = vpop.f32.mrf.mxu0
      %v3355 = vadd.f32 %v3306, %v3354
      %v3356 = vpop.f32.mrf.mxu0
      %3357 = vmatprep.mubr.bf16.mxu0 %v2626
      %3358 = vmatmul.mubr.bf16.gmra.mxu0 %v2625
      %v3359 = vpop.f32.mrf.mxu0
      %v3360 = vadd.f32 %v3311, %v3359
      %v3361 = vpop.f32.mrf.mxu0
      %v3362 = vpop.f32.mrf.mxu0
      %v3363 = vadd.f32 %v3314, %v3362
      %v3364 = vpop.f32.mrf.mxu0
      %3365 = vdwg.mxu0
      %3366 = vmatprep.subr.bf16.mxu0 0
      %3367 = vmatpush1.bf16.msra.mxu0 %v3117
      %3368 = vmatprep.subr.bf16.mxu0 0
      %3369 = vmatpush1.bf16.msra.mxu0 %v3116
      %3370 = vmatprep.subr.bf16.mxu0 0
      %3371 = vmatpush1.bf16.msra.mxu0 %v3115
      %3372 = vmatprep.subr.bf16.mxu0 0
      %3373 = vmatpush1.bf16.msra.mxu0 %v3114
      %3374 = vmatprep.subr.bf16.mxu0 0
      %3375 = vmatpush1.bf16.msra.mxu0 %v3113
      %3376 = vmatprep.subr.bf16.mxu0 0
      %3377 = vmatpush1.bf16.msra.mxu0 %v3112
      %3378 = vmatprep.subr.bf16.mxu0 0
      %3379 = vmatpush1.bf16.msra.mxu0 %v3111
      %3380 = vmatprep.subr.bf16.mxu0 0
      %3381 = vmatpush1.bf16.msra.mxu0 %v3110
      %3382 = vmatprep.subr.bf16.mxu0 0
      %3383 = vmatpush2.bf16.msra.mxu0 %v3125
      %3384 = vmatprep.subr.bf16.mxu0 0
      %3385 = vmatpush2.bf16.msra.mxu0 %v3124
      %3386 = vmatprep.subr.bf16.mxu0 0
      %3387 = vmatpush2.bf16.msra.mxu0 %v3123
      %3388 = vmatprep.subr.bf16.mxu0 0
      %3389 = vmatpush2.bf16.msra.mxu0 %v3122
      %3390 = vmatprep.subr.bf16.mxu0 0
      %3391 = vmatpush2.bf16.msra.mxu0 %v3121
      %3392 = vmatprep.subr.bf16.mxu0 0
      %3393 = vmatpush2.bf16.msra.mxu0 %v3120
      %3394 = vmatprep.subr.bf16.mxu0 0
      %3395 = vmatpush2.bf16.msra.mxu0 %v3119
      %3396 = vmatprep.subr.bf16.mxu0 0
      %3397 = vmatpush2.bf16.msra.mxu0 %v3118
      %3398 = vmatprep.mubr.bf16.mxu0 %v2619
      %3399 = vmatmul.mubr.bf16.gmra.mxu0 %v2618
      %v3400 = vpop.f32.mrf.mxu0
      %v3401 = vadd.f32 %v3352, %v3400
      %v3402 = vpop.f32.mrf.mxu0
      %v3403 = vpop.f32.mrf.mxu0
      %v3404 = vadd.f32 %v3355, %v3403
      %v3405 = vpop.f32.mrf.mxu0
      %3406 = vmatprep.mubr.bf16.mxu0 %v2628
      %3407 = vmatmul.mubr.bf16.gmra.mxu0 %v2627
      %v3408 = vpop.f32.mrf.mxu0
      %v3409 = vadd.f32 %v3360, %v3408
      %v3410 = vpop.f32.mrf.mxu0
      %v3411 = vpop.f32.mrf.mxu0
      %v3412 = vadd.f32 %v3363, %v3411
      %v3413 = vpop.f32.mrf.mxu0
      %3414 = vdwg.mxu0
      %3415 = vmatprep.subr.bf16.mxu0 0
      %3416 = vmatpush1.bf16.msra.mxu0 %v3217
      %3417 = vmatprep.subr.bf16.mxu0 0
      %3418 = vmatpush1.bf16.msra.mxu0 %v3132
      %3419 = vmatprep.subr.bf16.mxu0 0
      %3420 = vmatpush1.bf16.msra.mxu0 %v3131
      %3421 = vmatprep.subr.bf16.mxu0 0
      %3422 = vmatpush1.bf16.msra.mxu0 %v3130
      %3423 = vmatprep.subr.bf16.mxu0 0
      %3424 = vmatpush1.bf16.msra.mxu0 %v3129
      %3425 = vmatprep.subr.bf16.mxu0 0
      %3426 = vmatpush1.bf16.msra.mxu0 %v3128
      %3427 = vmatprep.subr.bf16.mxu0 0
      %3428 = vmatpush1.bf16.msra.mxu0 %v3127
      %3429 = vmatprep.subr.bf16.mxu0 0
      %3430 = vmatpush1.bf16.msra.mxu0 %v3126
      %3431 = vmatprep.subr.bf16.mxu0 0
      %3432 = vmatpush2.bf16.msra.mxu0 0
      %3433 = vmatprep.subr.bf16.mxu0 0
      %3434 = vmatpush2.bf16.msra.mxu0 0
      %3435 = vmatprep.subr.bf16.mxu0 0
      %3436 = vmatpush2.bf16.msra.mxu0 0
      %3437 = vmatprep.subr.bf16.mxu0 0
      %3438 = vmatpush2.bf16.msra.mxu0 0
      %3439 = vmatprep.subr.bf16.mxu0 0
      %3440 = vmatpush2.bf16.msra.mxu0 0
      %3441 = vmatprep.subr.bf16.mxu0 0
      %3442 = vmatpush2.bf16.msra.mxu0 0
      %3443 = vmatprep.subr.bf16.mxu0 0
      %3444 = vmatpush2.bf16.msra.mxu0 0
      %3445 = vmatprep.subr.bf16.mxu0 0
      %3446 = vmatpush2.bf16.msra.mxu0 0
      %3447 = vmatprep.mubr.bf16.mxu0 0
      %3448 = vmatmul.mubr.bf16.gmra.mxu0 %v3207
      %v3449 = vpop.f32.mrf.mxu0
      %v3450 = vadd.f32 %v3401, %v3449
      %v3451 = vpop.f32.mrf.mxu0
      %v3452 = vpop.f32.mrf.mxu0
      %v3453 = vadd.f32 %v3404, %v3452
      %v3454 = vpop.f32.mrf.mxu0
      %3455 = vmatprep.mubr.bf16.mxu0 0
      %3456 = vmatmul.mubr.bf16.gmra.mxu0 %v3210
      %v3457 = vpop.f32.mrf.mxu0
      %v3458 = vadd.f32 %v3409, %v3457
      %v3459 = vpop.f32.mrf.mxu0
      %v3460 = vpop.f32.mrf.mxu0
      %v3461 = vadd.f32 %v3412, %v3460
      %v3462 = vpop.f32.mrf.mxu0
      %3463 = vdwg.mxu0
      %v3464 = vpack.c.bf16 %v3453, %v3450
      %v3465 = vpack.c.bf16 %v3461, %v3458
      %v3468 = vunpack.c.l.b16 %v3464
      %v3469 = vunpack.c.h.b16 %v3464
      %v3470 = vunpack.c.l.b16 %v3465
      %v3471 = vunpack.c.h.b16 %v3465
      %v3472 = vpack.c.b16 %v3468, %v3468
      %v3473 = vpack.c.b16 %v3469, %v3469
      %v3474 = vpack.c.b16 %v3470, %v3470
      %v3475 = vpack.c.b16 %v3471, %v3471
      %s3480 = smul.u32 %s44, 4
      %s3481 = smul.addr %s3480, 4
      %s3482 = scalar_lea.vmem [#allocation2], %s3481
      %3483 = vst [vmem:[%s3482] sm:$0xf] %v3472
      %3484 = vst [vmem:[%s3482 + $0x4] sm:$0xf] %v3473
      %3485 = vst [vmem:[%s3482 + $0x8] sm:$0xf] %v3474
      %3486 = vst [vmem:[%s3482 + $0xc] sm:$0xf] %v3475
    $region54: #{switchnet_forward.1} parent=1 // loop_footer
      %s48 = sadd.s32 1, %s44
    $region55: #{switchnet_forward.1} parent=1 // loop_footer_branch
      %43 = sbr.rel target = $region51
    $region56: #{switchnet_forward.1} parent=1 // loop_exit
      _
    %v3487 = vld [vmem:[#allocation2] sm:$0xf]
    %v3488 = vld [vmem:[#allocation2 + $0x4] sm:$0xf]
    %v3489 = vld [vmem:[#allocation2 + $0x8] sm:$0xf]
    %v3490 = vld [vmem:[#allocation2 + $0xc] sm:$0xf]
    %v3491 = vld [vmem:[#allocation2 + $0x10] sm:$0xf]
    %v3492 = vld [vmem:[#allocation2 + $0x14] sm:$0xf]
    %v3493 = vld [vmem:[#allocation2 + $0x18] sm:$0xf]
    %v3494 = vld [vmem:[#allocation2 + $0x1c] sm:$0xf]
    %v3497 = vpack.i.b16 %v3491, %v3487
    %v3498 = vshrl.u32 %v3487, 16
    %v3499 = vshrl.u32 %v3491, 16
    %v3500 = vpack.i.b16 %v3499, %v3498
    %v3503 = vpack.i.b16 %v3492, %v3488
    %v3504 = vshrl.u32 %v3488, 16
    %v3505 = vshrl.u32 %v3492, 16
    %v3506 = vpack.i.b16 %v3505, %v3504
    %v3509 = vpack.i.b16 %v3493, %v3489
    %v3510 = vshrl.u32 %v3489, 16
    %v3511 = vshrl.u32 %v3493, 16
    %v3512 = vpack.i.b16 %v3511, %v3510
    %v3515 = vpack.i.b16 %v3494, %v3490
    %v3516 = vshrl.u32 %v3490, 16
    %v3517 = vshrl.u32 %v3494, 16
    %v3518 = vpack.i.b16 %v3517, %v3516
    %v3521 = vunpack.c.l.s4 1983009808
    %v3522 = vunpack.c.0.s8 %v3521
    %v3523 = vlaneseq
    %v3524 = vshrl.u32 %v3523, 7
    %v3525 = vsub.s32 %v3522, %v3524
    %v3526 = vrot.slane %v3497, %v3525
    %v3527 = vcombine.high %v3526, 0
    %v3529 = vunpack.c.l.s4 1934713408
    %v3530 = vunpack.c.0.s8 %v3529
    %v3531 = vlaneseq
    %v3532 = vshrl.u32 %v3531, 7
    %v3533 = vsub.s32 %v3530, %v3532
    %v3534 = vrot.slane %v3526, %v3533
    %v3536 = vunpack.c.l.s4 1934713408
    %v3537 = vunpack.c.0.s8 %v3536
    %v3538 = vlaneseq
    %v3539 = vshrl.u32 %v3538, 7
    %v3540 = vsub.s32 %v3537, %v3539
    %v3541 = vrot.slane %v3527, %v3540
    %v3542 = vcombine.high %v3534, 0
    %v3543 = vcombine.high %v3541, 0
    %v3546 = vunpack.c.l.s4 1983009808
    %v3547 = vunpack.c.0.s8 %v3546
    %v3548 = vlaneseq
    %v3549 = vshrl.u32 %v3548, 7
    %v3550 = vsub.s32 %v3547, %v3549
    %v3551 = vrot.slane %v3500, %v3550
    %v3552 = vcombine.high %v3551, 0
    %v3554 = vunpack.c.l.s4 1934713408
    %v3555 = vunpack.c.0.s8 %v3554
    %v3556 = vlaneseq
    %v3557 = vshrl.u32 %v3556, 7
    %v3558 = vsub.s32 %v3555, %v3557
    %v3559 = vrot.slane %v3551, %v3558
    %v3561 = vunpack.c.l.s4 1934713408
    %v3562 = vunpack.c.0.s8 %v3561
    %v3563 = vlaneseq
    %v3564 = vshrl.u32 %v3563, 7
    %v3565 = vsub.s32 %v3562, %v3564
    %v3566 = vrot.slane %v3552, %v3565
    %v3567 = vcombine.high %v3559, 0
    %v3568 = vcombine.high %v3566, 0
    %v3571 = vunpack.c.l.s4 1983009808
    %v3572 = vunpack.c.0.s8 %v3571
    %v3573 = vlaneseq
    %v3574 = vshrl.u32 %v3573, 7
    %v3575 = vsub.s32 %v3572, %v3574
    %v3576 = vrot.slane %v3503, %v3575
    %v3577 = vcombine.high %v3576, 0
    %v3579 = vunpack.c.l.s4 1934713408
    %v3580 = vunpack.c.0.s8 %v3579
    %v3581 = vlaneseq
    %v3582 = vshrl.u32 %v3581, 7
    %v3583 = vsub.s32 %v3580, %v3582
    %v3584 = vrot.slane %v3576, %v3583
    %v3586 = vunpack.c.l.s4 1934713408
    %v3587 = vunpack.c.0.s8 %v3586
    %v3588 = vlaneseq
    %v3589 = vshrl.u32 %v3588, 7
    %v3590 = vsub.s32 %v3587, %v3589
    %v3591 = vrot.slane %v3577, %v3590
    %v3592 = vcombine.high %v3584, 0
    %v3593 = vcombine.high %v3591, 0
    %v3596 = vunpack.c.l.s4 1983009808
    %v3597 = vunpack.c.0.s8 %v3596
    %v3598 = vlaneseq
    %v3599 = vshrl.u32 %v3598, 7
    %v3600 = vsub.s32 %v3597, %v3599
    %v3601 = vrot.slane %v3506, %v3600
    %v3602 = vcombine.high %v3601, 0
    %v3604 = vunpack.c.l.s4 1934713408
    %v3605 = vunpack.c.0.s8 %v3604
    %v3606 = vlaneseq
    %v3607 = vshrl.u32 %v3606, 7
    %v3608 = vsub.s32 %v3605, %v3607
    %v3609 = vrot.slane %v3601, %v3608
    %v3611 = vunpack.c.l.s4 1934713408
    %v3612 = vunpack.c.0.s8 %v3611
    %v3613 = vlaneseq
    %v3614 = vshrl.u32 %v3613, 7
    %v3615 = vsub.s32 %v3612, %v3614
    %v3616 = vrot.slane %v3602, %v3615
    %v3617 = vcombine.high %v3609, 0
    %v3618 = vcombine.high %v3616, 0
    %v3621 = vunpack.c.l.s4 1983009808
    %v3622 = vunpack.c.0.s8 %v3621
    %v3623 = vlaneseq
    %v3624 = vshrl.u32 %v3623, 7
    %v3625 = vsub.s32 %v3622, %v3624
    %v3626 = vrot.slane %v3509, %v3625
    %v3627 = vcombine.high %v3626, 0
    %v3629 = vunpack.c.l.s4 1934713408
    %v3630 = vunpack.c.0.s8 %v3629
    %v3631 = vlaneseq
    %v3632 = vshrl.u32 %v3631, 7
    %v3633 = vsub.s32 %v3630, %v3632
    %v3634 = vrot.slane %v3626, %v3633
    %v3636 = vunpack.c.l.s4 1934713408
    %v3637 = vunpack.c.0.s8 %v3636
    %v3638 = vlaneseq
    %v3639 = vshrl.u32 %v3638, 7
    %v3640 = vsub.s32 %v3637, %v3639
    %v3641 = vrot.slane %v3627, %v3640
    %v3642 = vcombine.high %v3634, 0
    %v3643 = vcombine.high %v3641, 0
    %v3646 = vunpack.c.l.s4 1983009808
    %v3647 = vunpack.c.0.s8 %v3646
    %v3648 = vlaneseq
    %v3649 = vshrl.u32 %v3648, 7
    %v3650 = vsub.s32 %v3647, %v3649
    %v3651 = vrot.slane %v3512, %v3650
    %v3652 = vcombine.high %v3651, 0
    %v3654 = vunpack.c.l.s4 1934713408
    %v3655 = vunpack.c.0.s8 %v3654
    %v3656 = vlaneseq
    %v3657 = vshrl.u32 %v3656, 7
    %v3658 = vsub.s32 %v3655, %v3657
    %v3659 = vrot.slane %v3651, %v3658
    %v3661 = vunpack.c.l.s4 1934713408
    %v3662 = vunpack.c.0.s8 %v3661
    %v3663 = vlaneseq
    %v3664 = vshrl.u32 %v3663, 7
    %v3665 = vsub.s32 %v3662, %v3664
    %v3666 = vrot.slane %v3652, %v3665
    %v3667 = vcombine.high %v3659, 0
    %v3668 = vcombine.high %v3666, 0
    %v3671 = vunpack.c.l.s4 1983009808
    %v3672 = vunpack.c.0.s8 %v3671
    %v3673 = vlaneseq
    %v3674 = vshrl.u32 %v3673, 7
    %v3675 = vsub.s32 %v3672, %v3674
    %v3676 = vrot.slane %v3515, %v3675
    %v3677 = vcombine.high %v3676, 0
    %v3679 = vunpack.c.l.s4 1934713408
    %v3680 = vunpack.c.0.s8 %v3679
    %v3681 = vlaneseq
    %v3682 = vshrl.u32 %v3681, 7
    %v3683 = vsub.s32 %v3680, %v3682
    %v3684 = vrot.slane %v3676, %v3683
    %v3686 = vunpack.c.l.s4 1934713408
    %v3687 = vunpack.c.0.s8 %v3686
    %v3688 = vlaneseq
    %v3689 = vshrl.u32 %v3688, 7
    %v3690 = vsub.s32 %v3687, %v3689
    %v3691 = vrot.slane %v3677, %v3690
    %v3692 = vcombine.high %v3684, 0
    %v3693 = vcombine.high %v3691, 0
    %v3696 = vunpack.c.l.s4 1983009808
    %v3697 = vunpack.c.0.s8 %v3696
    %v3698 = vlaneseq
    %v3699 = vshrl.u32 %v3698, 7
    %v3700 = vsub.s32 %v3697, %v3699
    %v3701 = vrot.slane %v3518, %v3700
    %v3702 = vcombine.high %v3701, 0
    %v3704 = vunpack.c.l.s4 1934713408
    %v3705 = vunpack.c.0.s8 %v3704
    %v3706 = vlaneseq
    %v3707 = vshrl.u32 %v3706, 7
    %v3708 = vsub.s32 %v3705, %v3707
    %v3709 = vrot.slane %v3701, %v3708
    %v3711 = vunpack.c.l.s4 1934713408
    %v3712 = vunpack.c.0.s8 %v3711
    %v3713 = vlaneseq
    %v3714 = vshrl.u32 %v3713, 7
    %v3715 = vsub.s32 %v3712, %v3714
    %v3716 = vrot.slane %v3702, %v3715
    %v3717 = vcombine.high %v3709, 0
    %v3718 = vcombine.high %v3716, 0
    %v3719 = vld [vmem:[%s8] sm:$0xf]
    %v3720 = vld [vmem:[%s8 + $0x4] sm:$0xf]
    %v3721 = vld [vmem:[%s8 + $0x8] sm:$0xf]
    %v3722 = vld [vmem:[%s8 + $0xc] sm:$0xf]
    %v3723 = vld [vmem:[%s8 + $0x10] sm:$0xf]
    %v3724 = vld [vmem:[%s8 + $0x14] sm:$0xf]
    %v3725 = vld [vmem:[%s8 + $0x18] sm:$0xf]
    %v3726 = vld [vmem:[%s8 + $0x1c] sm:$0xf]
    %v3727 = vld [vmem:[%s8 + $0x20] sm:$0xf]
    %v3728 = vld [vmem:[%s8 + $0x24] sm:$0xf]
    %v3729 = vld [vmem:[%s8 + $0x28] sm:$0xf]
    %v3730 = vld [vmem:[%s8 + $0x2c] sm:$0xf]
    %v3731 = vld [vmem:[%s8 + $0x30] sm:$0xf]
    %v3732 = vld [vmem:[%s8 + $0x34] sm:$0xf]
    %v3733 = vld [vmem:[%s8 + $0x38] sm:$0xf]
    %v3734 = vld [vmem:[%s8 + $0x3c] sm:$0xf]
    %v3735 = vld [vmem:[%s8 + $0x40] sm:$0xf]
    %v3736 = vld [vmem:[%s8 + $0x44] sm:$0xf]
    %v3737 = vld [vmem:[%s8 + $0x48] sm:$0xf]
    %v3738 = vld [vmem:[%s8 + $0x4c] sm:$0xf]
    %v3739 = vld [vmem:[%s8 + $0x50] sm:$0xf]
    %v3740 = vld [vmem:[%s8 + $0x54] sm:$0xf]
    %v3741 = vld [vmem:[%s8 + $0x58] sm:$0xf]
    %v3742 = vld [vmem:[%s8 + $0x5c] sm:$0xf]
    %v3743 = vld [vmem:[%s8 + $0x60] sm:$0xf]
    %v3744 = vld [vmem:[%s8 + $0x64] sm:$0xf]
    %v3745 = vld [vmem:[%s8 + $0x68] sm:$0xf]
    %v3746 = vld [vmem:[%s8 + $0x6c] sm:$0xf]
    %v3747 = vld [vmem:[%s8 + $0x70] sm:$0xf]
    %v3748 = vld [vmem:[%s8 + $0x74] sm:$0xf]
    %v3749 = vld [vmem:[%s8 + $0x78] sm:$0xf]
    %v3750 = vld [vmem:[%s8 + $0x7c] sm:$0xf]
    %v3751 = vld [vmem:[%s8 + $0x80] sm:$0xf]
    %v3752 = vld [vmem:[%s8 + $0x84] sm:$0xf]
    %v3753 = vld [vmem:[%s8 + $0x88] sm:$0xf]
    %v3754 = vld [vmem:[%s8 + $0x8c] sm:$0xf]
    %v3755 = vld [vmem:[%s8 + $0x90] sm:$0xf]
    %v3756 = vld [vmem:[%s8 + $0x94] sm:$0xf]
    %v3757 = vld [vmem:[%s8 + $0x98] sm:$0xf]
    %v3758 = vld [vmem:[%s8 + $0x9c] sm:$0xf]
    %v3759 = vld [vmem:[%s8 + $0xa0] sm:$0xf]
    %v3760 = vld [vmem:[%s8 + $0xa4] sm:$0xf]
    %v3761 = vld [vmem:[%s8 + $0xa8] sm:$0xf]
    %v3762 = vld [vmem:[%s8 + $0xac] sm:$0xf]
    %v3763 = vld [vmem:[%s8 + $0xb0] sm:$0xf]
    %v3764 = vld [vmem:[%s8 + $0xb4] sm:$0xf]
    %v3765 = vld [vmem:[%s8 + $0xb8] sm:$0xf]
    %v3766 = vld [vmem:[%s8 + $0xbc] sm:$0xf]
    %v3767 = vld [vmem:[%s8 + $0xc0] sm:$0xf]
    %v3768 = vld [vmem:[%s8 + $0xc4] sm:$0xf]
    %v3769 = vld [vmem:[%s8 + $0xc8] sm:$0xf]
    %v3770 = vld [vmem:[%s8 + $0xcc] sm:$0xf]
    %v3771 = vld [vmem:[%s8 + $0xd0] sm:$0xf]
    %v3772 = vld [vmem:[%s8 + $0xd4] sm:$0xf]
    %v3773 = vld [vmem:[%s8 + $0xd8] sm:$0xf]
    %v3774 = vld [vmem:[%s8 + $0xdc] sm:$0xf]
    %v3775 = vld [vmem:[%s8 + $0xe0] sm:$0xf]
    %v3776 = vld [vmem:[%s8 + $0xe4] sm:$0xf]
    %v3777 = vld [vmem:[%s8 + $0xe8] sm:$0xf]
    %v3778 = vld [vmem:[%s8 + $0xec] sm:$0xf]
    %v3779 = vld [vmem:[%s8 + $0xf0] sm:$0xf]
    %v3780 = vld [vmem:[%s8 + $0xf4] sm:$0xf]
    %v3781 = vld [vmem:[%s8 + $0xf8] sm:$0xf]
    %v3782 = vld [vmem:[%s8 + $0xfc] sm:$0xf]
    %v3783 = vld [vmem:[%s8 + $0x100] sm:$0xf]
    %v3784 = vld [vmem:[%s8 + $0x104] sm:$0xf]
    %v3785 = vld [vmem:[%s8 + $0x108] sm:$0xf]
    %v3786 = vld [vmem:[%s8 + $0x10c] sm:$0xf]
    %v3787 = vld [vmem:[%s8 + $0x110] sm:$0xf]
    %v3788 = vld [vmem:[%s8 + $0x114] sm:$0xf]
    %v3789 = vld [vmem:[%s8 + $0x118] sm:$0xf]
    %v3790 = vld [vmem:[%s8 + $0x11c] sm:$0xf]
    %v3791 = vld [vmem:[%s8 + $0x120] sm:$0xf]
    %v3792 = vld [vmem:[%s8 + $0x124] sm:$0xf]
    %v3793 = vld [vmem:[%s8 + $0x128] sm:$0xf]
    %v3794 = vld [vmem:[%s8 + $0x12c] sm:$0xf]
    %v3795 = vld [vmem:[%s8 + $0x130] sm:$0xf]
    %v3796 = vld [vmem:[%s8 + $0x134] sm:$0xf]
    %v3797 = vld [vmem:[%s8 + $0x138] sm:$0xf]
    %v3798 = vld [vmem:[%s8 + $0x13c] sm:$0xf]
    %v3799 = vld [vmem:[%s8 + $0x140] sm:$0xf]
    %v3800 = vld [vmem:[%s8 + $0x144] sm:$0xf]
    %v3801 = vld [vmem:[%s8 + $0x148] sm:$0xf]
    %v3802 = vld [vmem:[%s8 + $0x14c] sm:$0xf]
    %v3803 = vld [vmem:[%s8 + $0x150] sm:$0xf]
    %v3804 = vld [vmem:[%s8 + $0x154] sm:$0xf]
    %v3805 = vld [vmem:[%s8 + $0x158] sm:$0xf]
    %v3806 = vld [vmem:[%s8 + $0x15c] sm:$0xf]
    %v3807 = vld [vmem:[%s8 + $0x160] sm:$0xf]
    %v3808 = vld [vmem:[%s8 + $0x164] sm:$0xf]
    %v3809 = vld [vmem:[%s8 + $0x168] sm:$0xf]
    %v3810 = vld [vmem:[%s8 + $0x16c] sm:$0xf]
    %v3811 = vld [vmem:[%s8 + $0x170] sm:$0xf]
    %v3812 = vld [vmem:[%s8 + $0x174] sm:$0xf]
    %v3813 = vld [vmem:[%s8 + $0x178] sm:$0xf]
    %v3814 = vld [vmem:[%s8 + $0x17c] sm:$0xf]
    %v3815 = vld [vmem:[%s8 + $0x180] sm:$0xf]
    %v3816 = vld [vmem:[%s8 + $0x184] sm:$0xf]
    %v3817 = vld [vmem:[%s8 + $0x188] sm:$0xf]
    %v3818 = vld [vmem:[%s8 + $0x18c] sm:$0xf]
    %v3819 = vld [vmem:[%s8 + $0x190] sm:$0xf]
    %v3820 = vld [vmem:[%s8 + $0x194] sm:$0xf]
    %v3821 = vld [vmem:[%s8 + $0x198] sm:$0xf]
    %v3822 = vld [vmem:[%s8 + $0x19c] sm:$0xf]
    %v3823 = vld [vmem:[%s8 + $0x1a0] sm:$0xf]
    %v3824 = vld [vmem:[%s8 + $0x1a4] sm:$0xf]
    %v3825 = vld [vmem:[%s8 + $0x1a8] sm:$0xf]
    %v3826 = vld [vmem:[%s8 + $0x1ac] sm:$0xf]
    %v3827 = vld [vmem:[%s8 + $0x1b0] sm:$0xf]
    %v3828 = vld [vmem:[%s8 + $0x1b4] sm:$0xf]
    %v3829 = vld [vmem:[%s8 + $0x1b8] sm:$0xf]
    %v3830 = vld [vmem:[%s8 + $0x1bc] sm:$0xf]
    %v3831 = vld [vmem:[%s8 + $0x1c0] sm:$0xf]
    %v3832 = vld [vmem:[%s8 + $0x1c4] sm:$0xf]
    %v3833 = vld [vmem:[%s8 + $0x1c8] sm:$0xf]
    %v3834 = vld [vmem:[%s8 + $0x1cc] sm:$0xf]
    %v3835 = vld [vmem:[%s8 + $0x1d0] sm:$0xf]
    %v3836 = vld [vmem:[%s8 + $0x1d4] sm:$0xf]
    %v3837 = vld [vmem:[%s8 + $0x1d8] sm:$0xf]
    %v3838 = vld [vmem:[%s8 + $0x1dc] sm:$0xf]
    %v3839 = vld [vmem:[%s8 + $0x1e0] sm:$0xf]
    %v3840 = vld [vmem:[%s8 + $0x1e4] sm:$0xf]
    %v3841 = vld [vmem:[%s8 + $0x1e8] sm:$0xf]
    %v3842 = vld [vmem:[%s8 + $0x1ec] sm:$0xf]
    %v3843 = vld [vmem:[%s8 + $0x1f0] sm:$0xf]
    %v3844 = vld [vmem:[%s8 + $0x1f4] sm:$0xf]
    %v3845 = vld [vmem:[%s8 + $0x1f8] sm:$0xf]
    %v3846 = vld [vmem:[%s8 + $0x1fc] sm:$0xf]
    %v3847 = vld [vmem:[%s8 + $0x200] sm:$0xf]
    %v3848 = vld [vmem:[%s8 + $0x204] sm:$0xf]
    %v3849 = vld [vmem:[%s8 + $0x208] sm:$0xf]
    %v3850 = vld [vmem:[%s8 + $0x20c] sm:$0xf]
    %v3851 = vld [vmem:[%s8 + $0x210] sm:$0xf]
    %v3852 = vld [vmem:[%s8 + $0x214] sm:$0xf]
    %v3853 = vld [vmem:[%s8 + $0x218] sm:$0xf]
    %v3854 = vld [vmem:[%s8 + $0x21c] sm:$0xf]
    %v3855 = vld [vmem:[%s8 + $0x220] sm:$0xf]
    %v3856 = vld [vmem:[%s8 + $0x224] sm:$0xf]
    %v3857 = vld [vmem:[%s8 + $0x228] sm:$0xf]
    %v3858 = vld [vmem:[%s8 + $0x22c] sm:$0xf]
    %v3859 = vld [vmem:[%s8 + $0x230] sm:$0xf]
    %v3860 = vld [vmem:[%s8 + $0x234] sm:$0xf]
    %v3861 = vld [vmem:[%s8 + $0x238] sm:$0xf]
    %v3862 = vld [vmem:[%s8 + $0x23c] sm:$0xf]
    %v3863 = vld [vmem:[%s8 + $0x240] sm:$0xf]
    %v3864 = vld [vmem:[%s8 + $0x244] sm:$0xf]
    %v3865 = vld [vmem:[%s8 + $0x248] sm:$0xf]
    %v3866 = vld [vmem:[%s8 + $0x24c] sm:$0xf]
    %v3867 = vld [vmem:[%s8 + $0x250] sm:$0xf]
    %v3868 = vld [vmem:[%s8 + $0x254] sm:$0xf]
    %v3869 = vld [vmem:[%s8 + $0x258] sm:$0xf]
    %v3870 = vld [vmem:[%s8 + $0x25c] sm:$0xf]
    %v3871 = vld [vmem:[%s8 + $0x260] sm:$0xf]
    %v3872 = vld [vmem:[%s8 + $0x264] sm:$0xf]
    %v3873 = vld [vmem:[%s8 + $0x268] sm:$0xf]
    %v3874 = vld [vmem:[%s8 + $0x26c] sm:$0xf]
    %v3875 = vld [vmem:[%s8 + $0x270] sm:$0xf]
    %v3876 = vld [vmem:[%s8 + $0x274] sm:$0xf]
    %v3877 = vld [vmem:[%s8 + $0x278] sm:$0xf]
    %v3878 = vld [vmem:[%s8 + $0x27c] sm:$0xf]
    %v3879 = vld [vmem:[%s8 + $0x280] sm:$0xf]
    %v3880 = vld [vmem:[%s8 + $0x284] sm:$0xf]
    %v3881 = vld [vmem:[%s8 + $0x288] sm:$0xf]
    %v3882 = vld [vmem:[%s8 + $0x28c] sm:$0xf]
    %v3883 = vld [vmem:[%s8 + $0x290] sm:$0xf]
    %v3884 = vld [vmem:[%s8 + $0x294] sm:$0xf]
    %v3885 = vld [vmem:[%s8 + $0x298] sm:$0xf]
    %v3886 = vld [vmem:[%s8 + $0x29c] sm:$0xf]
    %v3887 = vld [vmem:[%s8 + $0x2a0] sm:$0xf]
    %v3888 = vld [vmem:[%s8 + $0x2a4] sm:$0xf]
    %v3889 = vld [vmem:[%s8 + $0x2a8] sm:$0xf]
    %v3890 = vld [vmem:[%s8 + $0x2ac] sm:$0xf]
    %v3891 = vld [vmem:[%s8 + $0x2b0] sm:$0xf]
    %v3892 = vld [vmem:[%s8 + $0x2b4] sm:$0xf]
    %v3893 = vld [vmem:[%s8 + $0x2b8] sm:$0xf]
    %v3894 = vld [vmem:[%s8 + $0x2bc] sm:$0xf]
    %v3895 = vld [vmem:[%s8 + $0x2c0] sm:$0xf]
    %v3896 = vld [vmem:[%s8 + $0x2c4] sm:$0xf]
    %v3897 = vld [vmem:[%s8 + $0x2c8] sm:$0xf]
    %v3898 = vld [vmem:[%s8 + $0x2cc] sm:$0xf]
    %v3899 = vld [vmem:[%s8 + $0x2d0] sm:$0xf]
    %v3900 = vld [vmem:[%s8 + $0x2d4] sm:$0xf]
    %v3901 = vld [vmem:[%s8 + $0x2d8] sm:$0xf]
    %v3902 = vld [vmem:[%s8 + $0x2dc] sm:$0xf]
    %v3903 = vld [vmem:[%s8 + $0x2e0] sm:$0xf]
    %v3904 = vld [vmem:[%s8 + $0x2e4] sm:$0xf]
    %v3905 = vld [vmem:[%s8 + $0x2e8] sm:$0xf]
    %v3906 = vld [vmem:[%s8 + $0x2ec] sm:$0xf]
    %v3907 = vld [vmem:[%s8 + $0x2f0] sm:$0xf]
    %v3908 = vld [vmem:[%s8 + $0x2f4] sm:$0xf]
    %v3909 = vld [vmem:[%s8 + $0x2f8] sm:$0xf]
    %v3910 = vld [vmem:[%s8 + $0x2fc] sm:$0xf]
    %v3911 = vld [vmem:[%s8 + $0x300] sm:$0xf]
    %v3912 = vld [vmem:[%s8 + $0x304] sm:$0xf]
    %v3913 = vld [vmem:[%s8 + $0x308] sm:$0xf]
    %v3914 = vld [vmem:[%s8 + $0x30c] sm:$0xf]
    %v3915 = vld [vmem:[%s8 + $0x310] sm:$0xf]
    %v3916 = vld [vmem:[%s8 + $0x314] sm:$0xf]
    %v3917 = vld [vmem:[%s8 + $0x318] sm:$0xf]
    %v3918 = vld [vmem:[%s8 + $0x31c] sm:$0xf]
    %v3919 = vld [vmem:[%s8 + $0x320] sm:$0xf]
    %v3920 = vld [vmem:[%s8 + $0x324] sm:$0xf]
    %v3921 = vld [vmem:[%s8 + $0x328] sm:$0xf]
    %v3922 = vld [vmem:[%s8 + $0x32c] sm:$0xf]
    %v3923 = vld [vmem:[%s8 + $0x330] sm:$0xf]
    %v3924 = vld [vmem:[%s8 + $0x334] sm:$0xf]
    %v3925 = vld [vmem:[%s8 + $0x338] sm:$0xf]
    %v3926 = vld [vmem:[%s8 + $0x33c] sm:$0xf]
    %v3927 = vld [vmem:[%s8 + $0x340] sm:$0xf]
    %v3928 = vld [vmem:[%s8 + $0x344] sm:$0xf]
    %v3929 = vld [vmem:[%s8 + $0x348] sm:$0xf]
    %v3930 = vld [vmem:[%s8 + $0x34c] sm:$0xf]
    %v3931 = vld [vmem:[%s8 + $0x350] sm:$0xf]
    %v3932 = vld [vmem:[%s8 + $0x354] sm:$0xf]
    %v3933 = vld [vmem:[%s8 + $0x358] sm:$0xf]
    %v3934 = vld [vmem:[%s8 + $0x35c] sm:$0xf]
    %v3935 = vld [vmem:[%s8 + $0x360] sm:$0xf]
    %v3936 = vld [vmem:[%s8 + $0x364] sm:$0xf]
    %v3937 = vld [vmem:[%s8 + $0x368] sm:$0xf]
    %v3938 = vld [vmem:[%s8 + $0x36c] sm:$0xf]
    %v3939 = vld [vmem:[%s8 + $0x370] sm:$0xf]
    %v3940 = vld [vmem:[%s8 + $0x374] sm:$0xf]
    %v3941 = vld [vmem:[%s8 + $0x378] sm:$0xf]
    %v3942 = vld [vmem:[%s8 + $0x37c] sm:$0xf]
    %v3943 = vld [vmem:[%s8 + $0x380] sm:$0xf]
    %v3944 = vld [vmem:[%s8 + $0x384] sm:$0xf]
    %v3945 = vld [vmem:[%s8 + $0x388] sm:$0xf]
    %v3946 = vld [vmem:[%s8 + $0x38c] sm:$0xf]
    %v3947 = vld [vmem:[%s8 + $0x390] sm:$0xf]
    %v3948 = vld [vmem:[%s8 + $0x394] sm:$0xf]
    %v3949 = vld [vmem:[%s8 + $0x398] sm:$0xf]
    %v3950 = vld [vmem:[%s8 + $0x39c] sm:$0xf]
    %v3951 = vld [vmem:[%s8 + $0x3a0] sm:$0xf]
    %v3952 = vld [vmem:[%s8 + $0x3a4] sm:$0xf]
    %v3953 = vld [vmem:[%s8 + $0x3a8] sm:$0xf]
    %v3954 = vld [vmem:[%s8 + $0x3ac] sm:$0xf]
    %v3955 = vld [vmem:[%s8 + $0x3b0] sm:$0xf]
    %v3956 = vld [vmem:[%s8 + $0x3b4] sm:$0xf]
    %v3957 = vld [vmem:[%s8 + $0x3b8] sm:$0xf]
    %v3958 = vld [vmem:[%s8 + $0x3bc] sm:$0xf]
    %v3959 = vld [vmem:[%s8 + $0x3c0] sm:$0xf]
    %v3960 = vld [vmem:[%s8 + $0x3c4] sm:$0xf]
    %v3961 = vld [vmem:[%s8 + $0x3c8] sm:$0xf]
    %v3962 = vld [vmem:[%s8 + $0x3cc] sm:$0xf]
    %v3963 = vld [vmem:[%s8 + $0x3d0] sm:$0xf]
    %v3964 = vld [vmem:[%s8 + $0x3d4] sm:$0xf]
    %v3965 = vld [vmem:[%s8 + $0x3d8] sm:$0xf]
    %v3966 = vld [vmem:[%s8 + $0x3dc] sm:$0xf]
    %v3967 = vld [vmem:[%s8 + $0x3e0] sm:$0xf]
    %v3968 = vld [vmem:[%s8 + $0x3e4] sm:$0xf]
    %v3969 = vld [vmem:[%s8 + $0x3e8] sm:$0xf]
    %v3970 = vld [vmem:[%s8 + $0x3ec] sm:$0xf]
    %v3971 = vld [vmem:[%s8 + $0x3f0] sm:$0xf]
    %v3972 = vld [vmem:[%s8 + $0x3f4] sm:$0xf]
    %v3973 = vld [vmem:[%s8 + $0x3f8] sm:$0xf]
    %v3974 = vld [vmem:[%s8 + $0x3fc] sm:$0xf]
    %v3975 = vld [vmem:[%s8 + $0x400] sm:$0xf]
    %v3976 = vld [vmem:[%s8 + $0x404] sm:$0xf]
    %v3977 = vld [vmem:[%s8 + $0x408] sm:$0xf]
    %v3978 = vld [vmem:[%s8 + $0x40c] sm:$0xf]
    %v3979 = vld [vmem:[%s8 + $0x410] sm:$0xf]
    %v3980 = vld [vmem:[%s8 + $0x414] sm:$0xf]
    %v3981 = vld [vmem:[%s8 + $0x418] sm:$0xf]
    %v3982 = vld [vmem:[%s8 + $0x41c] sm:$0xf]
    %v3983 = vld [vmem:[%s8 + $0x420] sm:$0xf]
    %v3984 = vld [vmem:[%s8 + $0x424] sm:$0xf]
    %v3985 = vld [vmem:[%s8 + $0x428] sm:$0xf]
    %v3986 = vld [vmem:[%s8 + $0x42c] sm:$0xf]
    %v3987 = vld [vmem:[%s8 + $0x430] sm:$0xf]
    %v3988 = vld [vmem:[%s8 + $0x434] sm:$0xf]
    %v3989 = vld [vmem:[%s8 + $0x438] sm:$0xf]
    %v3990 = vld [vmem:[%s8 + $0x43c] sm:$0xf]
    %v3991 = vld [vmem:[%s8 + $0x440] sm:$0xf]
    %v3992 = vld [vmem:[%s8 + $0x444] sm:$0xf]
    %v3993 = vld [vmem:[%s8 + $0x448] sm:$0xf]
    %v3994 = vld [vmem:[%s8 + $0x44c] sm:$0xf]
    %v3995 = vld [vmem:[%s8 + $0x450] sm:$0xf]
    %v3996 = vld [vmem:[%s8 + $0x454] sm:$0xf]
    %v3997 = vld [vmem:[%s8 + $0x458] sm:$0xf]
    %v3998 = vld [vmem:[%s8 + $0x45c] sm:$0xf]
    %v3999 = vld [vmem:[%s8 + $0x460] sm:$0xf]
    %v4000 = vld [vmem:[%s8 + $0x464] sm:$0xf]
    %v4001 = vld [vmem:[%s8 + $0x468] sm:$0xf]
    %v4002 = vld [vmem:[%s8 + $0x46c] sm:$0xf]
    %v4003 = vld [vmem:[%s8 + $0x470] sm:$0xf]
    %v4004 = vld [vmem:[%s8 + $0x474] sm:$0xf]
    %v4005 = vld [vmem:[%s8 + $0x478] sm:$0xf]
    %v4006 = vld [vmem:[%s8 + $0x47c] sm:$0xf]
    %v4007 = vld [vmem:[%s8 + $0x480] sm:$0xf]
    %v4008 = vld [vmem:[%s8 + $0x484] sm:$0xf]
    %v4009 = vld [vmem:[%s8 + $0x488] sm:$0xf]
    %v4010 = vld [vmem:[%s8 + $0x48c] sm:$0xf]
    %v4011 = vld [vmem:[%s8 + $0x490] sm:$0xf]
    %v4012 = vld [vmem:[%s8 + $0x494] sm:$0xf]
    %v4013 = vld [vmem:[%s8 + $0x498] sm:$0xf]
    %v4014 = vld [vmem:[%s8 + $0x49c] sm:$0xf]
    %v4015 = vld [vmem:[%s8 + $0x4a0] sm:$0xf]
    %v4016 = vld [vmem:[%s8 + $0x4a4] sm:$0xf]
    %v4017 = vld [vmem:[%s8 + $0x4a8] sm:$0xf]
    %v4018 = vld [vmem:[%s8 + $0x4ac] sm:$0xf]
    %v4019 = vld [vmem:[%s8 + $0x4b0] sm:$0xf]
    %v4020 = vld [vmem:[%s8 + $0x4b4] sm:$0xf]
    %v4021 = vld [vmem:[%s8 + $0x4b8] sm:$0xf]
    %v4022 = vld [vmem:[%s8 + $0x4bc] sm:$0xf]
    %v4023 = vld [vmem:[%s8 + $0x4c0] sm:$0xf]
    %v4024 = vld [vmem:[%s8 + $0x4c4] sm:$0xf]
    %v4025 = vld [vmem:[%s8 + $0x4c8] sm:$0xf]
    %v4026 = vld [vmem:[%s8 + $0x4cc] sm:$0xf]
    %v4027 = vld [vmem:[%s8 + $0x4d0] sm:$0xf]
    %v4028 = vld [vmem:[%s8 + $0x4d4] sm:$0xf]
    %v4029 = vld [vmem:[%s8 + $0x4d8] sm:$0xf]
    %v4030 = vld [vmem:[%s8 + $0x4dc] sm:$0xf]
    %v4031 = vld [vmem:[%s8 + $0x4e0] sm:$0xf]
    %v4032 = vld [vmem:[%s8 + $0x4e4] sm:$0xf]
    %v4033 = vld [vmem:[%s8 + $0x4e8] sm:$0xf]
    %v4034 = vld [vmem:[%s8 + $0x4ec] sm:$0xf]
    %v4035 = vld [vmem:[%s8 + $0x4f0] sm:$0xf]
    %v4036 = vld [vmem:[%s8 + $0x4f4] sm:$0xf]
    %v4037 = vld [vmem:[%s8 + $0x4f8] sm:$0xf]
    %v4038 = vld [vmem:[%s8 + $0x4fc] sm:$0xf]
    %v4039 = vld [vmem:[%s8 + $0x500] sm:$0xf]
    %v4040 = vld [vmem:[%s8 + $0x504] sm:$0xf]
    %v4041 = vld [vmem:[%s8 + $0x508] sm:$0xf]
    %v4042 = vld [vmem:[%s8 + $0x50c] sm:$0xf]
    %v4043 = vld [vmem:[%s8 + $0x510] sm:$0xf]
    %v4044 = vld [vmem:[%s8 + $0x514] sm:$0xf]
    %v4045 = vld [vmem:[%s8 + $0x518] sm:$0xf]
    %v4046 = vld [vmem:[%s8 + $0x51c] sm:$0xf]
    %v4047 = vld [vmem:[%s8 + $0x520] sm:$0xf]
    %v4048 = vld [vmem:[%s8 + $0x524] sm:$0xf]
    %v4049 = vld [vmem:[%s8 + $0x528] sm:$0xf]
    %v4050 = vld [vmem:[%s8 + $0x52c] sm:$0xf]
    %v4051 = vld [vmem:[%s8 + $0x530] sm:$0xf]
    %v4052 = vld [vmem:[%s8 + $0x534] sm:$0xf]
    %v4053 = vld [vmem:[%s8 + $0x538] sm:$0xf]
    %v4054 = vld [vmem:[%s8 + $0x53c] sm:$0xf]
    %v4055 = vld [vmem:[%s8 + $0x540] sm:$0xf]
    %v4056 = vld [vmem:[%s8 + $0x544] sm:$0xf]
    %v4057 = vld [vmem:[%s8 + $0x548] sm:$0xf]
    %v4058 = vld [vmem:[%s8 + $0x54c] sm:$0xf]
    %v4059 = vld [vmem:[%s8 + $0x550] sm:$0xf]
    %v4060 = vld [vmem:[%s8 + $0x554] sm:$0xf]
    %v4061 = vld [vmem:[%s8 + $0x558] sm:$0xf]
    %v4062 = vld [vmem:[%s8 + $0x55c] sm:$0xf]
    %v4063 = vld [vmem:[%s8 + $0x560] sm:$0xf]
    %v4064 = vld [vmem:[%s8 + $0x564] sm:$0xf]
    %v4065 = vld [vmem:[%s8 + $0x568] sm:$0xf]
    %v4066 = vld [vmem:[%s8 + $0x56c] sm:$0xf]
    %v4067 = vld [vmem:[%s8 + $0x570] sm:$0xf]
    %v4068 = vld [vmem:[%s8 + $0x574] sm:$0xf]
    %v4069 = vld [vmem:[%s8 + $0x578] sm:$0xf]
    %v4070 = vld [vmem:[%s8 + $0x57c] sm:$0xf]
    %v4071 = vld [vmem:[%s8 + $0x580] sm:$0xf]
    %v4072 = vld [vmem:[%s8 + $0x584] sm:$0xf]
    %v4073 = vld [vmem:[%s8 + $0x588] sm:$0xf]
    %v4074 = vld [vmem:[%s8 + $0x58c] sm:$0xf]
    %v4075 = vld [vmem:[%s8 + $0x590] sm:$0xf]
    %v4076 = vld [vmem:[%s8 + $0x594] sm:$0xf]
    %v4077 = vld [vmem:[%s8 + $0x598] sm:$0xf]
    %v4078 = vld [vmem:[%s8 + $0x59c] sm:$0xf]
    %v4079 = vld [vmem:[%s8 + $0x5a0] sm:$0xf]
    %v4080 = vld [vmem:[%s8 + $0x5a4] sm:$0xf]
    %v4081 = vld [vmem:[%s8 + $0x5a8] sm:$0xf]
    %v4082 = vld [vmem:[%s8 + $0x5ac] sm:$0xf]
    %v4083 = vld [vmem:[%s8 + $0x5b0] sm:$0xf]
    %v4084 = vld [vmem:[%s8 + $0x5b4] sm:$0xf]
    %v4085 = vld [vmem:[%s8 + $0x5b8] sm:$0xf]
    %v4086 = vld [vmem:[%s8 + $0x5bc] sm:$0xf]
    %v4087 = vld [vmem:[%s8 + $0x5c0] sm:$0xf]
    %v4088 = vld [vmem:[%s8 + $0x5c4] sm:$0xf]
    %v4089 = vld [vmem:[%s8 + $0x5c8] sm:$0xf]
    %v4090 = vld [vmem:[%s8 + $0x5cc] sm:$0xf]
    %v4091 = vld [vmem:[%s8 + $0x5d0] sm:$0xf]
    %v4092 = vld [vmem:[%s8 + $0x5d4] sm:$0xf]
    %v4093 = vld [vmem:[%s8 + $0x5d8] sm:$0xf]
    %v4094 = vld [vmem:[%s8 + $0x5dc] sm:$0xf]
    %v4095 = vld [vmem:[%s8 + $0x5e0] sm:$0xf]
    %v4096 = vld [vmem:[%s8 + $0x5e4] sm:$0xf]
    %v4097 = vld [vmem:[%s8 + $0x5e8] sm:$0xf]
    %v4098 = vld [vmem:[%s8 + $0x5ec] sm:$0xf]
    %v4099 = vld [vmem:[%s8 + $0x5f0] sm:$0xf]
    %v4100 = vld [vmem:[%s8 + $0x5f4] sm:$0xf]
    %v4101 = vld [vmem:[%s8 + $0x5f8] sm:$0xf]
    %v4102 = vld [vmem:[%s8 + $0x5fc] sm:$0xf]
    %v4103 = vld [vmem:[%s8 + $0x600] sm:$0xf]
    %v4104 = vld [vmem:[%s8 + $0x604] sm:$0xf]
    %v4105 = vld [vmem:[%s8 + $0x608] sm:$0xf]
    %v4106 = vld [vmem:[%s8 + $0x60c] sm:$0xf]
    %v4107 = vld [vmem:[%s8 + $0x610] sm:$0xf]
    %v4108 = vld [vmem:[%s8 + $0x614] sm:$0xf]
    %v4109 = vld [vmem:[%s8 + $0x618] sm:$0xf]
    %v4110 = vld [vmem:[%s8 + $0x61c] sm:$0xf]
    %v4111 = vld [vmem:[%s8 + $0x620] sm:$0xf]
    %v4112 = vld [vmem:[%s8 + $0x624] sm:$0xf]
    %v4113 = vld [vmem:[%s8 + $0x628] sm:$0xf]
    %v4114 = vld [vmem:[%s8 + $0x62c] sm:$0xf]
    %v4115 = vld [vmem:[%s8 + $0x630] sm:$0xf]
    %v4116 = vld [vmem:[%s8 + $0x634] sm:$0xf]
    %v4117 = vld [vmem:[%s8 + $0x638] sm:$0xf]
    %v4118 = vld [vmem:[%s8 + $0x63c] sm:$0xf]
    %v4119 = vld [vmem:[%s8 + $0x640] sm:$0xf]
    %v4120 = vld [vmem:[%s8 + $0x644] sm:$0xf]
    %v4121 = vld [vmem:[%s8 + $0x648] sm:$0xf]
    %v4122 = vld [vmem:[%s8 + $0x64c] sm:$0xf]
    %v4123 = vld [vmem:[%s8 + $0x650] sm:$0xf]
    %v4124 = vld [vmem:[%s8 + $0x654] sm:$0xf]
    %v4125 = vld [vmem:[%s8 + $0x658] sm:$0xf]
    %v4126 = vld [vmem:[%s8 + $0x65c] sm:$0xf]
    %v4127 = vld [vmem:[%s8 + $0x660] sm:$0xf]
    %v4128 = vld [vmem:[%s8 + $0x664] sm:$0xf]
    %v4129 = vld [vmem:[%s8 + $0x668] sm:$0xf]
    %v4130 = vld [vmem:[%s8 + $0x66c] sm:$0xf]
    %v4131 = vld [vmem:[%s8 + $0x670] sm:$0xf]
    %v4132 = vld [vmem:[%s8 + $0x674] sm:$0xf]
    %v4133 = vld [vmem:[%s8 + $0x678] sm:$0xf]
    %v4134 = vld [vmem:[%s8 + $0x67c] sm:$0xf]
    %v4135 = vld [vmem:[%s8 + $0x680] sm:$0xf]
    %v4136 = vld [vmem:[%s8 + $0x684] sm:$0xf]
    %v4137 = vld [vmem:[%s8 + $0x688] sm:$0xf]
    %v4138 = vld [vmem:[%s8 + $0x68c] sm:$0xf]
    %v4139 = vld [vmem:[%s8 + $0x690] sm:$0xf]
    %v4140 = vld [vmem:[%s8 + $0x694] sm:$0xf]
    %v4141 = vld [vmem:[%s8 + $0x698] sm:$0xf]
    %v4142 = vld [vmem:[%s8 + $0x69c] sm:$0xf]
    %v4143 = vld [vmem:[%s8 + $0x6a0] sm:$0xf]
    %v4144 = vld [vmem:[%s8 + $0x6a4] sm:$0xf]
    %v4145 = vld [vmem:[%s8 + $0x6a8] sm:$0xf]
    %v4146 = vld [vmem:[%s8 + $0x6ac] sm:$0xf]
    %v4147 = vld [vmem:[%s8 + $0x6b0] sm:$0xf]
    %v4148 = vld [vmem:[%s8 + $0x6b4] sm:$0xf]
    %v4149 = vld [vmem:[%s8 + $0x6b8] sm:$0xf]
    %v4150 = vld [vmem:[%s8 + $0x6bc] sm:$0xf]
    %v4151 = vld [vmem:[%s8 + $0x6c0] sm:$0xf]
    %v4152 = vld [vmem:[%s8 + $0x6c4] sm:$0xf]
    %v4153 = vld [vmem:[%s8 + $0x6c8] sm:$0xf]
    %v4154 = vld [vmem:[%s8 + $0x6cc] sm:$0xf]
    %v4155 = vld [vmem:[%s8 + $0x6d0] sm:$0xf]
    %v4156 = vld [vmem:[%s8 + $0x6d4] sm:$0xf]
    %v4157 = vld [vmem:[%s8 + $0x6d8] sm:$0xf]
    %v4158 = vld [vmem:[%s8 + $0x6dc] sm:$0xf]
    %v4159 = vld [vmem:[%s8 + $0x6e0] sm:$0xf]
    %v4160 = vld [vmem:[%s8 + $0x6e4] sm:$0xf]
    %v4161 = vld [vmem:[%s8 + $0x6e8] sm:$0xf]
    %v4162 = vld [vmem:[%s8 + $0x6ec] sm:$0xf]
    %v4163 = vld [vmem:[%s8 + $0x6f0] sm:$0xf]
    %v4164 = vld [vmem:[%s8 + $0x6f4] sm:$0xf]
    %v4165 = vld [vmem:[%s8 + $0x6f8] sm:$0xf]
    %v4166 = vld [vmem:[%s8 + $0x6fc] sm:$0xf]
    %v4167 = vld [vmem:[%s8 + $0x700] sm:$0xf]
    %v4168 = vld [vmem:[%s8 + $0x704] sm:$0xf]
    %v4169 = vld [vmem:[%s8 + $0x708] sm:$0xf]
    %v4170 = vld [vmem:[%s8 + $0x70c] sm:$0xf]
    %v4171 = vld [vmem:[%s8 + $0x710] sm:$0xf]
    %v4172 = vld [vmem:[%s8 + $0x714] sm:$0xf]
    %v4173 = vld [vmem:[%s8 + $0x718] sm:$0xf]
    %v4174 = vld [vmem:[%s8 + $0x71c] sm:$0xf]
    %v4175 = vld [vmem:[%s8 + $0x720] sm:$0xf]
    %v4176 = vld [vmem:[%s8 + $0x724] sm:$0xf]
    %v4177 = vld [vmem:[%s8 + $0x728] sm:$0xf]
    %v4178 = vld [vmem:[%s8 + $0x72c] sm:$0xf]
    %v4179 = vld [vmem:[%s8 + $0x730] sm:$0xf]
    %v4180 = vld [vmem:[%s8 + $0x734] sm:$0xf]
    %v4181 = vld [vmem:[%s8 + $0x738] sm:$0xf]
    %v4182 = vld [vmem:[%s8 + $0x73c] sm:$0xf]
    %v4183 = vld [vmem:[%s8 + $0x740] sm:$0xf]
    %v4184 = vld [vmem:[%s8 + $0x744] sm:$0xf]
    %v4185 = vld [vmem:[%s8 + $0x748] sm:$0xf]
    %v4186 = vld [vmem:[%s8 + $0x74c] sm:$0xf]
    %v4187 = vld [vmem:[%s8 + $0x750] sm:$0xf]
    %v4188 = vld [vmem:[%s8 + $0x754] sm:$0xf]
    %v4189 = vld [vmem:[%s8 + $0x758] sm:$0xf]
    %v4190 = vld [vmem:[%s8 + $0x75c] sm:$0xf]
    %v4191 = vld [vmem:[%s8 + $0x760] sm:$0xf]
    %v4192 = vld [vmem:[%s8 + $0x764] sm:$0xf]
    %v4193 = vld [vmem:[%s8 + $0x768] sm:$0xf]
    %v4194 = vld [vmem:[%s8 + $0x76c] sm:$0xf]
    %v4195 = vld [vmem:[%s8 + $0x770] sm:$0xf]
    %v4196 = vld [vmem:[%s8 + $0x774] sm:$0xf]
    %v4197 = vld [vmem:[%s8 + $0x778] sm:$0xf]
    %v4198 = vld [vmem:[%s8 + $0x77c] sm:$0xf]
    %v4199 = vld [vmem:[%s8 + $0x780] sm:$0xf]
    %v4200 = vld [vmem:[%s8 + $0x784] sm:$0xf]
    %v4201 = vld [vmem:[%s8 + $0x788] sm:$0xf]
    %v4202 = vld [vmem:[%s8 + $0x78c] sm:$0xf]
    %v4203 = vld [vmem:[%s8 + $0x790] sm:$0xf]
    %v4204 = vld [vmem:[%s8 + $0x794] sm:$0xf]
    %v4205 = vld [vmem:[%s8 + $0x798] sm:$0xf]
    %v4206 = vld [vmem:[%s8 + $0x79c] sm:$0xf]
    %v4207 = vld [vmem:[%s8 + $0x7a0] sm:$0xf]
    %v4208 = vld [vmem:[%s8 + $0x7a4] sm:$0xf]
    %v4209 = vld [vmem:[%s8 + $0x7a8] sm:$0xf]
    %v4210 = vld [vmem:[%s8 + $0x7ac] sm:$0xf]
    %v4211 = vld [vmem:[%s8 + $0x7b0] sm:$0xf]
    %v4212 = vld [vmem:[%s8 + $0x7b4] sm:$0xf]
    %v4213 = vld [vmem:[%s8 + $0x7b8] sm:$0xf]
    %v4214 = vld [vmem:[%s8 + $0x7bc] sm:$0xf]
    %v4215 = vld [vmem:[%s8 + $0x7c0] sm:$0xf]
    %v4216 = vld [vmem:[%s8 + $0x7c4] sm:$0xf]
    %v4217 = vld [vmem:[%s8 + $0x7c8] sm:$0xf]
    %v4218 = vld [vmem:[%s8 + $0x7cc] sm:$0xf]
    %v4219 = vld [vmem:[%s8 + $0x7d0] sm:$0xf]
    %v4220 = vld [vmem:[%s8 + $0x7d4] sm:$0xf]
    %v4221 = vld [vmem:[%s8 + $0x7d8] sm:$0xf]
    %v4222 = vld [vmem:[%s8 + $0x7dc] sm:$0xf]
    %v4223 = vld [vmem:[%s8 + $0x7e0] sm:$0xf]
    %v4224 = vld [vmem:[%s8 + $0x7e4] sm:$0xf]
    %v4225 = vld [vmem:[%s8 + $0x7e8] sm:$0xf]
    %v4226 = vld [vmem:[%s8 + $0x7ec] sm:$0xf]
    %v4227 = vld [vmem:[%s8 + $0x7f0] sm:$0xf]
    %v4228 = vld [vmem:[%s8 + $0x7f4] sm:$0xf]
    %v4229 = vld [vmem:[%s8 + $0x7f8] sm:$0xf]
    %v4230 = vld [vmem:[%s8 + $0x7fc] sm:$0xf]
    %v4231 = vld [vmem:[%s9] sm:$0x1]
    %v4233 = vlaneseq
    %v4234 = vshrl.u32 %v4233, 7
    %v4235 = vsub.s32 0, %v4234
    %v4236 = vrot.slane %v4231, %v4235
    %v4750 = vunpack.c.l.b16 %v3719
    %v4751 = vunpack.c.l.b16 %v3720
    %v4752 = vunpack.c.l.b16 %v3721
    %v4753 = vunpack.c.l.b16 %v3722
    %v4754 = vunpack.c.l.b16 %v3723
    %v4755 = vunpack.c.l.b16 %v3724
    %v4756 = vunpack.c.l.b16 %v3725
    %v4757 = vunpack.c.l.b16 %v3726
    %v4758 = vunpack.c.l.b16 %v3727
    %v4759 = vunpack.c.l.b16 %v3728
    %v4760 = vunpack.c.l.b16 %v3729
    %v4761 = vunpack.c.l.b16 %v3730
    %v4762 = vunpack.c.l.b16 %v3731
    %v4763 = vunpack.c.l.b16 %v3732
    %v4764 = vunpack.c.l.b16 %v3733
    %v4765 = vunpack.c.l.b16 %v3734
    %v4766 = vunpack.c.l.b16 %v3735
    %v4767 = vunpack.c.l.b16 %v3736
    %v4768 = vunpack.c.l.b16 %v3737
    %v4769 = vunpack.c.l.b16 %v3738
    %v4770 = vunpack.c.l.b16 %v3739
    %v4771 = vunpack.c.l.b16 %v3740
    %v4772 = vunpack.c.l.b16 %v3741
    %v4773 = vunpack.c.l.b16 %v3742
    %v4774 = vunpack.c.l.b16 %v3743
    %v4775 = vunpack.c.l.b16 %v3744
    %v4776 = vunpack.c.l.b16 %v3745
    %v4777 = vunpack.c.l.b16 %v3746
    %v4778 = vunpack.c.l.b16 %v3747
    %v4779 = vunpack.c.l.b16 %v3748
    %v4780 = vunpack.c.l.b16 %v3749
    %v4781 = vunpack.c.l.b16 %v3750
    %v4782 = vunpack.c.l.b16 %v3751
    %v4783 = vunpack.c.l.b16 %v3752
    %v4784 = vunpack.c.l.b16 %v3753
    %v4785 = vunpack.c.l.b16 %v3754
    %v4786 = vunpack.c.l.b16 %v3755
    %v4787 = vunpack.c.l.b16 %v3756
    %v4788 = vunpack.c.l.b16 %v3757
    %v4789 = vunpack.c.l.b16 %v3758
    %v4790 = vunpack.c.l.b16 %v3759
    %v4791 = vunpack.c.l.b16 %v3760
    %v4792 = vunpack.c.l.b16 %v3761
    %v4793 = vunpack.c.l.b16 %v3762
    %v4794 = vunpack.c.l.b16 %v3763
    %v4795 = vunpack.c.l.b16 %v3764
    %v4796 = vunpack.c.l.b16 %v3765
    %v4797 = vunpack.c.l.b16 %v3766
    %v4798 = vunpack.c.l.b16 %v3767
    %v4799 = vunpack.c.l.b16 %v3768
    %v4800 = vunpack.c.l.b16 %v3769
    %v4801 = vunpack.c.l.b16 %v3770
    %v4802 = vunpack.c.l.b16 %v3771
    %v4803 = vunpack.c.l.b16 %v3772
    %v4804 = vunpack.c.l.b16 %v3773
    %v4805 = vunpack.c.l.b16 %v3774
    %v4806 = vunpack.c.l.b16 %v3775
    %v4807 = vunpack.c.l.b16 %v3776
    %v4808 = vunpack.c.l.b16 %v3777
    %v4809 = vunpack.c.l.b16 %v3778
    %v4810 = vunpack.c.l.b16 %v3779
    %v4811 = vunpack.c.l.b16 %v3780
    %v4812 = vunpack.c.l.b16 %v3781
    %v4813 = vunpack.c.l.b16 %v3782
    %v4814 = vunpack.c.l.b16 %v3783
    %v4815 = vunpack.c.l.b16 %v3784
    %v4816 = vunpack.c.l.b16 %v3785
    %v4817 = vunpack.c.l.b16 %v3786
    %v4818 = vunpack.c.l.b16 %v3787
    %v4819 = vunpack.c.l.b16 %v3788
    %v4820 = vunpack.c.l.b16 %v3789
    %v4821 = vunpack.c.l.b16 %v3790
    %v4822 = vunpack.c.l.b16 %v3791
    %v4823 = vunpack.c.l.b16 %v3792
    %v4824 = vunpack.c.l.b16 %v3793
    %v4825 = vunpack.c.l.b16 %v3794
    %v4826 = vunpack.c.l.b16 %v3795
    %v4827 = vunpack.c.l.b16 %v3796
    %v4828 = vunpack.c.l.b16 %v3797
    %v4829 = vunpack.c.l.b16 %v3798
    %v4830 = vunpack.c.l.b16 %v3799
    %v4831 = vunpack.c.l.b16 %v3800
    %v4832 = vunpack.c.l.b16 %v3801
    %v4833 = vunpack.c.l.b16 %v3802
    %v4834 = vunpack.c.l.b16 %v3803
    %v4835 = vunpack.c.l.b16 %v3804
    %v4836 = vunpack.c.l.b16 %v3805
    %v4837 = vunpack.c.l.b16 %v3806
    %v4838 = vunpack.c.l.b16 %v3807
    %v4839 = vunpack.c.l.b16 %v3808
    %v4840 = vunpack.c.l.b16 %v3809
    %v4841 = vunpack.c.l.b16 %v3810
    %v4842 = vunpack.c.l.b16 %v3811
    %v4843 = vunpack.c.l.b16 %v3812
    %v4844 = vunpack.c.l.b16 %v3813
    %v4845 = vunpack.c.l.b16 %v3814
    %v4846 = vunpack.c.l.b16 %v3815
    %v4847 = vunpack.c.l.b16 %v3816
    %v4848 = vunpack.c.l.b16 %v3817
    %v4849 = vunpack.c.l.b16 %v3818
    %v4850 = vunpack.c.l.b16 %v3819
    %v4851 = vunpack.c.l.b16 %v3820
    %v4852 = vunpack.c.l.b16 %v3821
    %v4853 = vunpack.c.l.b16 %v3822
    %v4854 = vunpack.c.l.b16 %v3823
    %v4855 = vunpack.c.l.b16 %v3824
    %v4856 = vunpack.c.l.b16 %v3825
    %v4857 = vunpack.c.l.b16 %v3826
    %v4858 = vunpack.c.l.b16 %v3827
    %v4859 = vunpack.c.l.b16 %v3828
    %v4860 = vunpack.c.l.b16 %v3829
    %v4861 = vunpack.c.l.b16 %v3830
    %v4862 = vunpack.c.l.b16 %v3831
    %v4863 = vunpack.c.l.b16 %v3832
    %v4864 = vunpack.c.l.b16 %v3833
    %v4865 = vunpack.c.l.b16 %v3834
    %v4866 = vunpack.c.l.b16 %v3835
    %v4867 = vunpack.c.l.b16 %v3836
    %v4868 = vunpack.c.l.b16 %v3837
    %v4869 = vunpack.c.l.b16 %v3838
    %v4870 = vunpack.c.l.b16 %v3839
    %v4871 = vunpack.c.l.b16 %v3840
    %v4872 = vunpack.c.l.b16 %v3841
    %v4873 = vunpack.c.l.b16 %v3842
    %v4874 = vunpack.c.l.b16 %v3843
    %v4875 = vunpack.c.l.b16 %v3844
    %v4876 = vunpack.c.l.b16 %v3845
    %v4877 = vunpack.c.l.b16 %v3846
    %v4878 = vunpack.c.l.b16 %v3847
    %v4879 = vunpack.c.l.b16 %v3848
    %v4880 = vunpack.c.l.b16 %v3849
    %v4881 = vunpack.c.l.b16 %v3850
    %v4882 = vunpack.c.l.b16 %v3851
    %v4883 = vunpack.c.l.b16 %v3852
    %v4884 = vunpack.c.l.b16 %v3853
    %v4885 = vunpack.c.l.b16 %v3854
    %v4886 = vunpack.c.l.b16 %v3855
    %v4887 = vunpack.c.l.b16 %v3856
    %v4888 = vunpack.c.l.b16 %v3857
    %v4889 = vunpack.c.l.b16 %v3858
    %v4890 = vunpack.c.l.b16 %v3859
    %v4891 = vunpack.c.l.b16 %v3860
    %v4892 = vunpack.c.l.b16 %v3861
    %v4893 = vunpack.c.l.b16 %v3862
    %v4894 = vunpack.c.l.b16 %v3863
    %v4895 = vunpack.c.l.b16 %v3864
    %v4896 = vunpack.c.l.b16 %v3865
    %v4897 = vunpack.c.l.b16 %v3866
    %v4898 = vunpack.c.l.b16 %v3867
    %v4899 = vunpack.c.l.b16 %v3868
    %v4900 = vunpack.c.l.b16 %v3869
    %v4901 = vunpack.c.l.b16 %v3870
    %v4902 = vunpack.c.l.b16 %v3871
    %v4903 = vunpack.c.l.b16 %v3872
    %v4904 = vunpack.c.l.b16 %v3873
    %v4905 = vunpack.c.l.b16 %v3874
    %v4906 = vunpack.c.l.b16 %v3875
    %v4907 = vunpack.c.l.b16 %v3876
    %v4908 = vunpack.c.l.b16 %v3877
    %v4909 = vunpack.c.l.b16 %v3878
    %v4910 = vunpack.c.l.b16 %v3879
    %v4911 = vunpack.c.l.b16 %v3880
    %v4912 = vunpack.c.l.b16 %v3881
    %v4913 = vunpack.c.l.b16 %v3882
    %v4914 = vunpack.c.l.b16 %v3883
    %v4915 = vunpack.c.l.b16 %v3884
    %v4916 = vunpack.c.l.b16 %v3885
    %v4917 = vunpack.c.l.b16 %v3886
    %v4918 = vunpack.c.l.b16 %v3887
    %v4919 = vunpack.c.l.b16 %v3888
    %v4920 = vunpack.c.l.b16 %v3889
    %v4921 = vunpack.c.l.b16 %v3890
    %v4922 = vunpack.c.l.b16 %v3891
    %v4923 = vunpack.c.l.b16 %v3892
    %v4924 = vunpack.c.l.b16 %v3893
    %v4925 = vunpack.c.l.b16 %v3894
    %v4926 = vunpack.c.l.b16 %v3895
    %v4927 = vunpack.c.l.b16 %v3896
    %v4928 = vunpack.c.l.b16 %v3897
    %v4929 = vunpack.c.l.b16 %v3898
    %v4930 = vunpack.c.l.b16 %v3899
    %v4931 = vunpack.c.l.b16 %v3900
    %v4932 = vunpack.c.l.b16 %v3901
    %v4933 = vunpack.c.l.b16 %v3902
    %v4934 = vunpack.c.l.b16 %v3903
    %v4935 = vunpack.c.l.b16 %v3904
    %v4936 = vunpack.c.l.b16 %v3905
    %v4937 = vunpack.c.l.b16 %v3906
    %v4938 = vunpack.c.l.b16 %v3907
    %v4939 = vunpack.c.l.b16 %v3908
    %v4940 = vunpack.c.l.b16 %v3909
    %v4941 = vunpack.c.l.b16 %v3910
    %v4942 = vunpack.c.l.b16 %v3911
    %v4943 = vunpack.c.l.b16 %v3912
    %v4944 = vunpack.c.l.b16 %v3913
    %v4945 = vunpack.c.l.b16 %v3914
    %v4946 = vunpack.c.l.b16 %v3915
    %v4947 = vunpack.c.l.b16 %v3916
    %v4948 = vunpack.c.l.b16 %v3917
    %v4949 = vunpack.c.l.b16 %v3918
    %v4950 = vunpack.c.l.b16 %v3919
    %v4951 = vunpack.c.l.b16 %v3920
    %v4952 = vunpack.c.l.b16 %v3921
    %v4953 = vunpack.c.l.b16 %v3922
    %v4954 = vunpack.c.l.b16 %v3923
    %v4955 = vunpack.c.l.b16 %v3924
    %v4956 = vunpack.c.l.b16 %v3925
    %v4957 = vunpack.c.l.b16 %v3926
    %v4958 = vunpack.c.l.b16 %v3927
    %v4959 = vunpack.c.l.b16 %v3928
    %v4960 = vunpack.c.l.b16 %v3929
    %v4961 = vunpack.c.l.b16 %v3930
    %v4962 = vunpack.c.l.b16 %v3931
    %v4963 = vunpack.c.l.b16 %v3932
    %v4964 = vunpack.c.l.b16 %v3933
    %v4965 = vunpack.c.l.b16 %v3934
    %v4966 = vunpack.c.l.b16 %v3935
    %v4967 = vunpack.c.l.b16 %v3936
    %v4968 = vunpack.c.l.b16 %v3937
    %v4969 = vunpack.c.l.b16 %v3938
    %v4970 = vunpack.c.l.b16 %v3939
    %v4971 = vunpack.c.l.b16 %v3940
    %v4972 = vunpack.c.l.b16 %v3941
    %v4973 = vunpack.c.l.b16 %v3942
    %v4974 = vunpack.c.l.b16 %v3943
    %v4975 = vunpack.c.l.b16 %v3944
    %v4976 = vunpack.c.l.b16 %v3945
    %v4977 = vunpack.c.l.b16 %v3946
    %v4978 = vunpack.c.l.b16 %v3947
    %v4979 = vunpack.c.l.b16 %v3948
    %v4980 = vunpack.c.l.b16 %v3949
    %v4981 = vunpack.c.l.b16 %v3950
    %v4982 = vunpack.c.l.b16 %v3951
    %v4983 = vunpack.c.l.b16 %v3952
    %v4984 = vunpack.c.l.b16 %v3953
    %v4985 = vunpack.c.l.b16 %v3954
    %v4986 = vunpack.c.l.b16 %v3955
    %v4987 = vunpack.c.l.b16 %v3956
    %v4988 = vunpack.c.l.b16 %v3957
    %v4989 = vunpack.c.l.b16 %v3958
    %v4990 = vunpack.c.l.b16 %v3959
    %v4991 = vunpack.c.l.b16 %v3960
    %v4992 = vunpack.c.l.b16 %v3961
    %v4993 = vunpack.c.l.b16 %v3962
    %v4994 = vunpack.c.l.b16 %v3963
    %v4995 = vunpack.c.l.b16 %v3964
    %v4996 = vunpack.c.l.b16 %v3965
    %v4997 = vunpack.c.l.b16 %v3966
    %v4998 = vunpack.c.l.b16 %v3967
    %v4999 = vunpack.c.l.b16 %v3968
    %v5000 = vunpack.c.l.b16 %v3969
    %v5001 = vunpack.c.l.b16 %v3970
    %v5002 = vunpack.c.l.b16 %v3971
    %v5003 = vunpack.c.l.b16 %v3972
    %v5004 = vunpack.c.l.b16 %v3973
    %v5005 = vunpack.c.l.b16 %v3974
    %v5006 = vunpack.c.l.b16 %v3975
    %v5007 = vunpack.c.l.b16 %v3976
    %v5008 = vunpack.c.l.b16 %v3977
    %v5009 = vunpack.c.l.b16 %v3978
    %v5010 = vunpack.c.l.b16 %v3979
    %v5011 = vunpack.c.l.b16 %v3980
    %v5012 = vunpack.c.l.b16 %v3981
    %v5013 = vunpack.c.l.b16 %v3982
    %v5014 = vunpack.c.l.b16 %v3983
    %v5015 = vunpack.c.l.b16 %v3984
    %v5016 = vunpack.c.l.b16 %v3985
    %v5017 = vunpack.c.l.b16 %v3986
    %v5018 = vunpack.c.l.b16 %v3987
    %v5019 = vunpack.c.l.b16 %v3988
    %v5020 = vunpack.c.l.b16 %v3989
    %v5021 = vunpack.c.l.b16 %v3990
    %v5022 = vunpack.c.l.b16 %v3991
    %v5023 = vunpack.c.l.b16 %v3992
    %v5024 = vunpack.c.l.b16 %v3993
    %v5025 = vunpack.c.l.b16 %v3994
    %v5026 = vunpack.c.l.b16 %v3995
    %v5027 = vunpack.c.l.b16 %v3996
    %v5028 = vunpack.c.l.b16 %v3997
    %v5029 = vunpack.c.l.b16 %v3998
    %v5030 = vunpack.c.l.b16 %v3999
    %v5031 = vunpack.c.l.b16 %v4000
    %v5032 = vunpack.c.l.b16 %v4001
    %v5033 = vunpack.c.l.b16 %v4002
    %v5034 = vunpack.c.l.b16 %v4003
    %v5035 = vunpack.c.l.b16 %v4004
    %v5036 = vunpack.c.l.b16 %v4005
    %v5037 = vunpack.c.l.b16 %v4006
    %v5038 = vunpack.c.l.b16 %v4007
    %v5039 = vunpack.c.l.b16 %v4008
    %v5040 = vunpack.c.l.b16 %v4009
    %v5041 = vunpack.c.l.b16 %v4010
    %v5042 = vunpack.c.l.b16 %v4011
    %v5043 = vunpack.c.l.b16 %v4012
    %v5044 = vunpack.c.l.b16 %v4013
    %v5045 = vunpack.c.l.b16 %v4014
    %v5046 = vunpack.c.l.b16 %v4015
    %v5047 = vunpack.c.l.b16 %v4016
    %v5048 = vunpack.c.l.b16 %v4017
    %v5049 = vunpack.c.l.b16 %v4018
    %v5050 = vunpack.c.l.b16 %v4019
    %v5051 = vunpack.c.l.b16 %v4020
    %v5052 = vunpack.c.l.b16 %v4021
    %v5053 = vunpack.c.l.b16 %v4022
    %v5054 = vunpack.c.l.b16 %v4023
    %v5055 = vunpack.c.l.b16 %v4024
    %v5056 = vunpack.c.l.b16 %v4025
    %v5057 = vunpack.c.l.b16 %v4026
    %v5058 = vunpack.c.l.b16 %v4027
    %v5059 = vunpack.c.l.b16 %v4028
    %v5060 = vunpack.c.l.b16 %v4029
    %v5061 = vunpack.c.l.b16 %v4030
    %v5062 = vunpack.c.l.b16 %v4031
    %v5063 = vunpack.c.l.b16 %v4032
    %v5064 = vunpack.c.l.b16 %v4033
    %v5065 = vunpack.c.l.b16 %v4034
    %v5066 = vunpack.c.l.b16 %v4035
    %v5067 = vunpack.c.l.b16 %v4036
    %v5068 = vunpack.c.l.b16 %v4037
    %v5069 = vunpack.c.l.b16 %v4038
    %v5070 = vunpack.c.l.b16 %v4039
    %v5071 = vunpack.c.l.b16 %v4040
    %v5072 = vunpack.c.l.b16 %v4041
    %v5073 = vunpack.c.l.b16 %v4042
    %v5074 = vunpack.c.l.b16 %v4043
    %v5075 = vunpack.c.l.b16 %v4044
    %v5076 = vunpack.c.l.b16 %v4045
    %v5077 = vunpack.c.l.b16 %v4046
    %v5078 = vunpack.c.l.b16 %v4047
    %v5079 = vunpack.c.l.b16 %v4048
    %v5080 = vunpack.c.l.b16 %v4049
    %v5081 = vunpack.c.l.b16 %v4050
    %v5082 = vunpack.c.l.b16 %v4051
    %v5083 = vunpack.c.l.b16 %v4052
    %v5084 = vunpack.c.l.b16 %v4053
    %v5085 = vunpack.c.l.b16 %v4054
    %v5086 = vunpack.c.l.b16 %v4055
    %v5087 = vunpack.c.l.b16 %v4056
    %v5088 = vunpack.c.l.b16 %v4057
    %v5089 = vunpack.c.l.b16 %v4058
    %v5090 = vunpack.c.l.b16 %v4059
    %v5091 = vunpack.c.l.b16 %v4060
    %v5092 = vunpack.c.l.b16 %v4061
    %v5093 = vunpack.c.l.b16 %v4062
    %v5094 = vunpack.c.l.b16 %v4063
    %v5095 = vunpack.c.l.b16 %v4064
    %v5096 = vunpack.c.l.b16 %v4065
    %v5097 = vunpack.c.l.b16 %v4066
    %v5098 = vunpack.c.l.b16 %v4067
    %v5099 = vunpack.c.l.b16 %v4068
    %v5100 = vunpack.c.l.b16 %v4069
    %v5101 = vunpack.c.l.b16 %v4070
    %v5102 = vunpack.c.l.b16 %v4071
    %v5103 = vunpack.c.l.b16 %v4072
    %v5104 = vunpack.c.l.b16 %v4073
    %v5105 = vunpack.c.l.b16 %v4074
    %v5106 = vunpack.c.l.b16 %v4075
    %v5107 = vunpack.c.l.b16 %v4076
    %v5108 = vunpack.c.l.b16 %v4077
    %v5109 = vunpack.c.l.b16 %v4078
    %v5110 = vunpack.c.l.b16 %v4079
    %v5111 = vunpack.c.l.b16 %v4080
    %v5112 = vunpack.c.l.b16 %v4081
    %v5113 = vunpack.c.l.b16 %v4082
    %v5114 = vunpack.c.l.b16 %v4083
    %v5115 = vunpack.c.l.b16 %v4084
    %v5116 = vunpack.c.l.b16 %v4085
    %v5117 = vunpack.c.l.b16 %v4086
    %v5118 = vunpack.c.l.b16 %v4087
    %v5119 = vunpack.c.l.b16 %v4088
    %v5120 = vunpack.c.l.b16 %v4089
    %v5121 = vunpack.c.l.b16 %v4090
    %v5122 = vunpack.c.l.b16 %v4091
    %v5123 = vunpack.c.l.b16 %v4092
    %v5124 = vunpack.c.l.b16 %v4093
    %v5125 = vunpack.c.l.b16 %v4094
    %v5126 = vunpack.c.l.b16 %v4095
    %v5127 = vunpack.c.l.b16 %v4096
    %v5128 = vunpack.c.l.b16 %v4097
    %v5129 = vunpack.c.l.b16 %v4098
    %v5130 = vunpack.c.l.b16 %v4099
    %v5131 = vunpack.c.l.b16 %v4100
    %v5132 = vunpack.c.l.b16 %v4101
    %v5133 = vunpack.c.l.b16 %v4102
    %v5134 = vunpack.c.l.b16 %v4103
    %v5135 = vunpack.c.l.b16 %v4104
    %v5136 = vunpack.c.l.b16 %v4105
    %v5137 = vunpack.c.l.b16 %v4106
    %v5138 = vunpack.c.l.b16 %v4107
    %v5139 = vunpack.c.l.b16 %v4108
    %v5140 = vunpack.c.l.b16 %v4109
    %v5141 = vunpack.c.l.b16 %v4110
    %v5142 = vunpack.c.l.b16 %v4111
    %v5143 = vunpack.c.l.b16 %v4112
    %v5144 = vunpack.c.l.b16 %v4113
    %v5145 = vunpack.c.l.b16 %v4114
    %v5146 = vunpack.c.l.b16 %v4115
    %v5147 = vunpack.c.l.b16 %v4116
    %v5148 = vunpack.c.l.b16 %v4117
    %v5149 = vunpack.c.l.b16 %v4118
    %v5150 = vunpack.c.l.b16 %v4119
    %v5151 = vunpack.c.l.b16 %v4120
    %v5152 = vunpack.c.l.b16 %v4121
    %v5153 = vunpack.c.l.b16 %v4122
    %v5154 = vunpack.c.l.b16 %v4123
    %v5155 = vunpack.c.l.b16 %v4124
    %v5156 = vunpack.c.l.b16 %v4125
    %v5157 = vunpack.c.l.b16 %v4126
    %v5158 = vunpack.c.l.b16 %v4127
    %v5159 = vunpack.c.l.b16 %v4128
    %v5160 = vunpack.c.l.b16 %v4129
    %v5161 = vunpack.c.l.b16 %v4130
    %v5162 = vunpack.c.l.b16 %v4131
    %v5163 = vunpack.c.l.b16 %v4132
    %v5164 = vunpack.c.l.b16 %v4133
    %v5165 = vunpack.c.l.b16 %v4134
    %v5166 = vunpack.c.l.b16 %v4135
    %v5167 = vunpack.c.l.b16 %v4136
    %v5168 = vunpack.c.l.b16 %v4137
    %v5169 = vunpack.c.l.b16 %v4138
    %v5170 = vunpack.c.l.b16 %v4139
    %v5171 = vunpack.c.l.b16 %v4140
    %v5172 = vunpack.c.l.b16 %v4141
    %v5173 = vunpack.c.l.b16 %v4142
    %v5174 = vunpack.c.l.b16 %v4143
    %v5175 = vunpack.c.l.b16 %v4144
    %v5176 = vunpack.c.l.b16 %v4145
    %v5177 = vunpack.c.l.b16 %v4146
    %v5178 = vunpack.c.l.b16 %v4147
    %v5179 = vunpack.c.l.b16 %v4148
    %v5180 = vunpack.c.l.b16 %v4149
    %v5181 = vunpack.c.l.b16 %v4150
    %v5182 = vunpack.c.l.b16 %v4151
    %v5183 = vunpack.c.l.b16 %v4152
    %v5184 = vunpack.c.l.b16 %v4153
    %v5185 = vunpack.c.l.b16 %v4154
    %v5186 = vunpack.c.l.b16 %v4155
    %v5187 = vunpack.c.l.b16 %v4156
    %v5188 = vunpack.c.l.b16 %v4157
    %v5189 = vunpack.c.l.b16 %v4158
    %v5190 = vunpack.c.l.b16 %v4159
    %v5191 = vunpack.c.l.b16 %v4160
    %v5192 = vunpack.c.l.b16 %v4161
    %v5193 = vunpack.c.l.b16 %v4162
    %v5194 = vunpack.c.l.b16 %v4163
    %v5195 = vunpack.c.l.b16 %v4164
    %v5196 = vunpack.c.l.b16 %v4165
    %v5197 = vunpack.c.l.b16 %v4166
    %v5198 = vunpack.c.l.b16 %v4167
    %v5199 = vunpack.c.l.b16 %v4168
    %v5200 = vunpack.c.l.b16 %v4169
    %v5201 = vunpack.c.l.b16 %v4170
    %v5202 = vunpack.c.l.b16 %v4171
    %v5203 = vunpack.c.l.b16 %v4172
    %v5204 = vunpack.c.l.b16 %v4173
    %v5205 = vunpack.c.l.b16 %v4174
    %v5206 = vunpack.c.l.b16 %v4175
    %v5207 = vunpack.c.l.b16 %v4176
    %v5208 = vunpack.c.l.b16 %v4177
    %v5209 = vunpack.c.l.b16 %v4178
    %v5210 = vunpack.c.l.b16 %v4179
    %v5211 = vunpack.c.l.b16 %v4180
    %v5212 = vunpack.c.l.b16 %v4181
    %v5213 = vunpack.c.l.b16 %v4182
    %v5214 = vunpack.c.l.b16 %v4183
    %v5215 = vunpack.c.l.b16 %v4184
    %v5216 = vunpack.c.l.b16 %v4185
    %v5217 = vunpack.c.l.b16 %v4186
    %v5218 = vunpack.c.l.b16 %v4187
    %v5219 = vunpack.c.l.b16 %v4188
    %v5220 = vunpack.c.l.b16 %v4189
    %v5221 = vunpack.c.l.b16 %v4190
    %v5222 = vunpack.c.l.b16 %v4191
    %v5223 = vunpack.c.l.b16 %v4192
    %v5224 = vunpack.c.l.b16 %v4193
    %v5225 = vunpack.c.l.b16 %v4194
    %v5226 = vunpack.c.l.b16 %v4195
    %v5227 = vunpack.c.l.b16 %v4196
    %v5228 = vunpack.c.l.b16 %v4197
    %v5229 = vunpack.c.l.b16 %v4198
    %v5230 = vunpack.c.l.b16 %v4199
    %v5231 = vunpack.c.l.b16 %v4200
    %v5232 = vunpack.c.l.b16 %v4201
    %v5233 = vunpack.c.l.b16 %v4202
    %v5234 = vunpack.c.l.b16 %v4203
    %v5235 = vunpack.c.l.b16 %v4204
    %v5236 = vunpack.c.l.b16 %v4205
    %v5237 = vunpack.c.l.b16 %v4206
    %v5238 = vunpack.c.l.b16 %v4207
    %v5239 = vunpack.c.l.b16 %v4208
    %v5240 = vunpack.c.l.b16 %v4209
    %v5241 = vunpack.c.l.b16 %v4210
    %v5242 = vunpack.c.l.b16 %v4211
    %v5243 = vunpack.c.l.b16 %v4212
    %v5244 = vunpack.c.l.b16 %v4213
    %v5245 = vunpack.c.l.b16 %v4214
    %v5246 = vunpack.c.l.b16 %v4215
    %v5247 = vunpack.c.l.b16 %v4216
    %v5248 = vunpack.c.l.b16 %v4217
    %v5249 = vunpack.c.l.b16 %v4218
    %v5250 = vunpack.c.l.b16 %v4219
    %v5251 = vunpack.c.l.b16 %v4220
    %v5252 = vunpack.c.l.b16 %v4221
    %v5253 = vunpack.c.l.b16 %v4222
    %v5254 = vunpack.c.l.b16 %v4223
    %v5255 = vunpack.c.l.b16 %v4224
    %v5256 = vunpack.c.l.b16 %v4225
    %v5257 = vunpack.c.l.b16 %v4226
    %v5258 = vunpack.c.l.b16 %v4227
    %v5259 = vunpack.c.l.b16 %v4228
    %v5260 = vunpack.c.l.b16 %v4229
    %v5261 = vunpack.c.l.b16 %v4230
    %v5262 = vpack.c.b16 %v4751, %v4750
    %v5263 = vpack.c.b16 %v4753, %v4752
    %v5264 = vpack.c.b16 %v4755, %v4754
    %v5265 = vpack.c.b16 %v4757, %v4756
    %v5266 = vpack.c.b16 %v4759, %v4758
    %v5267 = vpack.c.b16 %v4761, %v4760
    %v5268 = vpack.c.b16 %v4763, %v4762
    %v5269 = vpack.c.b16 %v4765, %v4764
    %v5270 = vpack.c.b16 %v4767, %v4766
    %v5271 = vpack.c.b16 %v4769, %v4768
    %v5272 = vpack.c.b16 %v4771, %v4770
    %v5273 = vpack.c.b16 %v4773, %v4772
    %v5274 = vpack.c.b16 %v4775, %v4774
    %v5275 = vpack.c.b16 %v4777, %v4776
    %v5276 = vpack.c.b16 %v4779, %v4778
    %v5277 = vpack.c.b16 %v4781, %v4780
    %v5278 = vpack.c.b16 %v4783, %v4782
    %v5279 = vpack.c.b16 %v4785, %v4784
    %v5280 = vpack.c.b16 %v4787, %v4786
    %v5281 = vpack.c.b16 %v4789, %v4788
    %v5282 = vpack.c.b16 %v4791, %v4790
    %v5283 = vpack.c.b16 %v4793, %v4792
    %v5284 = vpack.c.b16 %v4795, %v4794
    %v5285 = vpack.c.b16 %v4797, %v4796
    %v5286 = vpack.c.b16 %v4799, %v4798
    %v5287 = vpack.c.b16 %v4801, %v4800
    %v5288 = vpack.c.b16 %v4803, %v4802
    %v5289 = vpack.c.b16 %v4805, %v4804
    %v5290 = vpack.c.b16 %v4807, %v4806
    %v5291 = vpack.c.b16 %v4809, %v4808
    %v5292 = vpack.c.b16 %v4811, %v4810
    %v5293 = vpack.c.b16 %v4813, %v4812
    %v5294 = vpack.c.b16 %v4815, %v4814
    %v5295 = vpack.c.b16 %v4817, %v4816
    %v5296 = vpack.c.b16 %v4819, %v4818
    %v5297 = vpack.c.b16 %v4821, %v4820
    %v5298 = vpack.c.b16 %v4823, %v4822
    %v5299 = vpack.c.b16 %v4825, %v4824
    %v5300 = vpack.c.b16 %v4827, %v4826
    %v5301 = vpack.c.b16 %v4829, %v4828
    %v5302 = vpack.c.b16 %v4831, %v4830
    %v5303 = vpack.c.b16 %v4833, %v4832
    %v5304 = vpack.c.b16 %v4835, %v4834
    %v5305 = vpack.c.b16 %v4837, %v4836
    %v5306 = vpack.c.b16 %v4839, %v4838
    %v5307 = vpack.c.b16 %v4841, %v4840
    %v5308 = vpack.c.b16 %v4843, %v4842
    %v5309 = vpack.c.b16 %v4845, %v4844
    %v5310 = vpack.c.b16 %v4847, %v4846
    %v5311 = vpack.c.b16 %v4849, %v4848
    %v5312 = vpack.c.b16 %v4851, %v4850
    %v5313 = vpack.c.b16 %v4853, %v4852
    %v5314 = vpack.c.b16 %v4855, %v4854
    %v5315 = vpack.c.b16 %v4857, %v4856
    %v5316 = vpack.c.b16 %v4859, %v4858
    %v5317 = vpack.c.b16 %v4861, %v4860
    %v5318 = vpack.c.b16 %v4863, %v4862
    %v5319 = vpack.c.b16 %v4865, %v4864
    %v5320 = vpack.c.b16 %v4867, %v4866
    %v5321 = vpack.c.b16 %v4869, %v4868
    %v5322 = vpack.c.b16 %v4871, %v4870
    %v5323 = vpack.c.b16 %v4873, %v4872
    %v5324 = vpack.c.b16 %v4875, %v4874
    %v5325 = vpack.c.b16 %v4877, %v4876
    %v5326 = vpack.c.b16 %v4879, %v4878
    %v5327 = vpack.c.b16 %v4881, %v4880
    %v5328 = vpack.c.b16 %v4883, %v4882
    %v5329 = vpack.c.b16 %v4885, %v4884
    %v5330 = vpack.c.b16 %v4887, %v4886
    %v5331 = vpack.c.b16 %v4889, %v4888
    %v5332 = vpack.c.b16 %v4891, %v4890
    %v5333 = vpack.c.b16 %v4893, %v4892
    %v5334 = vpack.c.b16 %v4895, %v4894
    %v5335 = vpack.c.b16 %v4897, %v4896
    %v5336 = vpack.c.b16 %v4899, %v4898
    %v5337 = vpack.c.b16 %v4901, %v4900
    %v5338 = vpack.c.b16 %v4903, %v4902
    %v5339 = vpack.c.b16 %v4905, %v4904
    %v5340 = vpack.c.b16 %v4907, %v4906
    %v5341 = vpack.c.b16 %v4909, %v4908
    %v5342 = vpack.c.b16 %v4911, %v4910
    %v5343 = vpack.c.b16 %v4913, %v4912
    %v5344 = vpack.c.b16 %v4915, %v4914
    %v5345 = vpack.c.b16 %v4917, %v4916
    %v5346 = vpack.c.b16 %v4919, %v4918
    %v5347 = vpack.c.b16 %v4921, %v4920
    %v5348 = vpack.c.b16 %v4923, %v4922
    %v5349 = vpack.c.b16 %v4925, %v4924
    %v5350 = vpack.c.b16 %v4927, %v4926
    %v5351 = vpack.c.b16 %v4929, %v4928
    %v5352 = vpack.c.b16 %v4931, %v4930
    %v5353 = vpack.c.b16 %v4933, %v4932
    %v5354 = vpack.c.b16 %v4935, %v4934
    %v5355 = vpack.c.b16 %v4937, %v4936
    %v5356 = vpack.c.b16 %v4939, %v4938
    %v5357 = vpack.c.b16 %v4941, %v4940
    %v5358 = vpack.c.b16 %v4943, %v4942
    %v5359 = vpack.c.b16 %v4945, %v4944
    %v5360 = vpack.c.b16 %v4947, %v4946
    %v5361 = vpack.c.b16 %v4949, %v4948
    %v5362 = vpack.c.b16 %v4951, %v4950
    %v5363 = vpack.c.b16 %v4953, %v4952
    %v5364 = vpack.c.b16 %v4955, %v4954
    %v5365 = vpack.c.b16 %v4957, %v4956
    %v5366 = vpack.c.b16 %v4959, %v4958
    %v5367 = vpack.c.b16 %v4961, %v4960
    %v5368 = vpack.c.b16 %v4963, %v4962
    %v5369 = vpack.c.b16 %v4965, %v4964
    %v5370 = vpack.c.b16 %v4967, %v4966
    %v5371 = vpack.c.b16 %v4969, %v4968
    %v5372 = vpack.c.b16 %v4971, %v4970
    %v5373 = vpack.c.b16 %v4973, %v4972
    %v5374 = vpack.c.b16 %v4975, %v4974
    %v5375 = vpack.c.b16 %v4977, %v4976
    %v5376 = vpack.c.b16 %v4979, %v4978
    %v5377 = vpack.c.b16 %v4981, %v4980
    %v5378 = vpack.c.b16 %v4983, %v4982
    %v5379 = vpack.c.b16 %v4985, %v4984
    %v5380 = vpack.c.b16 %v4987, %v4986
    %v5381 = vpack.c.b16 %v4989, %v4988
    %v5382 = vpack.c.b16 %v4991, %v4990
    %v5383 = vpack.c.b16 %v4993, %v4992
    %v5384 = vpack.c.b16 %v4995, %v4994
    %v5385 = vpack.c.b16 %v4997, %v4996
    %v5386 = vpack.c.b16 %v4999, %v4998
    %v5387 = vpack.c.b16 %v5001, %v5000
    %v5388 = vpack.c.b16 %v5003, %v5002
    %v5389 = vpack.c.b16 %v5005, %v5004
    %v5390 = vpack.c.b16 %v5007, %v5006
    %v5391 = vpack.c.b16 %v5009, %v5008
    %v5392 = vpack.c.b16 %v5011, %v5010
    %v5393 = vpack.c.b16 %v5013, %v5012
    %v5394 = vpack.c.b16 %v5015, %v5014
    %v5395 = vpack.c.b16 %v5017, %v5016
    %v5396 = vpack.c.b16 %v5019, %v5018
    %v5397 = vpack.c.b16 %v5021, %v5020
    %v5398 = vpack.c.b16 %v5023, %v5022
    %v5399 = vpack.c.b16 %v5025, %v5024
    %v5400 = vpack.c.b16 %v5027, %v5026
    %v5401 = vpack.c.b16 %v5029, %v5028
    %v5402 = vpack.c.b16 %v5031, %v5030
    %v5403 = vpack.c.b16 %v5033, %v5032
    %v5404 = vpack.c.b16 %v5035, %v5034
    %v5405 = vpack.c.b16 %v5037, %v5036
    %v5406 = vpack.c.b16 %v5039, %v5038
    %v5407 = vpack.c.b16 %v5041, %v5040
    %v5408 = vpack.c.b16 %v5043, %v5042
    %v5409 = vpack.c.b16 %v5045, %v5044
    %v5410 = vpack.c.b16 %v5047, %v5046
    %v5411 = vpack.c.b16 %v5049, %v5048
    %v5412 = vpack.c.b16 %v5051, %v5050
    %v5413 = vpack.c.b16 %v5053, %v5052
    %v5414 = vpack.c.b16 %v5055, %v5054
    %v5415 = vpack.c.b16 %v5057, %v5056
    %v5416 = vpack.c.b16 %v5059, %v5058
    %v5417 = vpack.c.b16 %v5061, %v5060
    %v5418 = vpack.c.b16 %v5063, %v5062
    %v5419 = vpack.c.b16 %v5065, %v5064
    %v5420 = vpack.c.b16 %v5067, %v5066
    %v5421 = vpack.c.b16 %v5069, %v5068
    %v5422 = vpack.c.b16 %v5071, %v5070
    %v5423 = vpack.c.b16 %v5073, %v5072
    %v5424 = vpack.c.b16 %v5075, %v5074
    %v5425 = vpack.c.b16 %v5077, %v5076
    %v5426 = vpack.c.b16 %v5079, %v5078
    %v5427 = vpack.c.b16 %v5081, %v5080
    %v5428 = vpack.c.b16 %v5083, %v5082
    %v5429 = vpack.c.b16 %v5085, %v5084
    %v5430 = vpack.c.b16 %v5087, %v5086
    %v5431 = vpack.c.b16 %v5089, %v5088
    %v5432 = vpack.c.b16 %v5091, %v5090
    %v5433 = vpack.c.b16 %v5093, %v5092
    %v5434 = vpack.c.b16 %v5095, %v5094
    %v5435 = vpack.c.b16 %v5097, %v5096
    %v5436 = vpack.c.b16 %v5099, %v5098
    %v5437 = vpack.c.b16 %v5101, %v5100
    %v5438 = vpack.c.b16 %v5103, %v5102
    %v5439 = vpack.c.b16 %v5105, %v5104
    %v5440 = vpack.c.b16 %v5107, %v5106
    %v5441 = vpack.c.b16 %v5109, %v5108
    %v5442 = vpack.c.b16 %v5111, %v5110
    %v5443 = vpack.c.b16 %v5113, %v5112
    %v5444 = vpack.c.b16 %v5115, %v5114
    %v5445 = vpack.c.b16 %v5117, %v5116
    %v5446 = vpack.c.b16 %v5119, %v5118
    %v5447 = vpack.c.b16 %v5121, %v5120
    %v5448 = vpack.c.b16 %v5123, %v5122
    %v5449 = vpack.c.b16 %v5125, %v5124
    %v5450 = vpack.c.b16 %v5127, %v5126
    %v5451 = vpack.c.b16 %v5129, %v5128
    %v5452 = vpack.c.b16 %v5131, %v5130
    %v5453 = vpack.c.b16 %v5133, %v5132
    %v5454 = vpack.c.b16 %v5135, %v5134
    %v5455 = vpack.c.b16 %v5137, %v5136
    %v5456 = vpack.c.b16 %v5139, %v5138
    %v5457 = vpack.c.b16 %v5141, %v5140
    %v5458 = vpack.c.b16 %v5143, %v5142
    %v5459 = vpack.c.b16 %v5145, %v5144
    %v5460 = vpack.c.b16 %v5147, %v5146
    %v5461 = vpack.c.b16 %v5149, %v5148
    %v5462 = vpack.c.b16 %v5151, %v5150
    %v5463 = vpack.c.b16 %v5153, %v5152
    %v5464 = vpack.c.b16 %v5155, %v5154
    %v5465 = vpack.c.b16 %v5157, %v5156
    %v5466 = vpack.c.b16 %v5159, %v5158
    %v5467 = vpack.c.b16 %v5161, %v5160
    %v5468 = vpack.c.b16 %v5163, %v5162
    %v5469 = vpack.c.b16 %v5165, %v5164
    %v5470 = vpack.c.b16 %v5167, %v5166
    %v5471 = vpack.c.b16 %v5169, %v5168
    %v5472 = vpack.c.b16 %v5171, %v5170
    %v5473 = vpack.c.b16 %v5173, %v5172
    %v5474 = vpack.c.b16 %v5175, %v5174
    %v5475 = vpack.c.b16 %v5177, %v5176
    %v5476 = vpack.c.b16 %v5179, %v5178
    %v5477 = vpack.c.b16 %v5181, %v5180
    %v5478 = vpack.c.b16 %v5183, %v5182
    %v5479 = vpack.c.b16 %v5185, %v5184
    %v5480 = vpack.c.b16 %v5187, %v5186
    %v5481 = vpack.c.b16 %v5189, %v5188
    %v5482 = vpack.c.b16 %v5191, %v5190
    %v5483 = vpack.c.b16 %v5193, %v5192
    %v5484 = vpack.c.b16 %v5195, %v5194
    %v5485 = vpack.c.b16 %v5197, %v5196
    %v5486 = vpack.c.b16 %v5199, %v5198
    %v5487 = vpack.c.b16 %v5201, %v5200
    %v5488 = vpack.c.b16 %v5203, %v5202
    %v5489 = vpack.c.b16 %v5205, %v5204
    %v5490 = vpack.c.b16 %v5207, %v5206
    %v5491 = vpack.c.b16 %v5209, %v5208
    %v5492 = vpack.c.b16 %v5211, %v5210
    %v5493 = vpack.c.b16 %v5213, %v5212
    %v5494 = vpack.c.b16 %v5215, %v5214
    %v5495 = vpack.c.b16 %v5217, %v5216
    %v5496 = vpack.c.b16 %v5219, %v5218
    %v5497 = vpack.c.b16 %v5221, %v5220
    %v5498 = vpack.c.b16 %v5223, %v5222
    %v5499 = vpack.c.b16 %v5225, %v5224
    %v5500 = vpack.c.b16 %v5227, %v5226
    %v5501 = vpack.c.b16 %v5229, %v5228
    %v5502 = vpack.c.b16 %v5231, %v5230
    %v5503 = vpack.c.b16 %v5233, %v5232
    %v5504 = vpack.c.b16 %v5235, %v5234
    %v5505 = vpack.c.b16 %v5237, %v5236
    %v5506 = vpack.c.b16 %v5239, %v5238
    %v5507 = vpack.c.b16 %v5241, %v5240
    %v5508 = vpack.c.b16 %v5243, %v5242
    %v5509 = vpack.c.b16 %v5245, %v5244
    %v5510 = vpack.c.b16 %v5247, %v5246
    %v5511 = vpack.c.b16 %v5249, %v5248
    %v5512 = vpack.c.b16 %v5251, %v5250
    %v5513 = vpack.c.b16 %v5253, %v5252
    %v5514 = vpack.c.b16 %v5255, %v5254
    %v5515 = vpack.c.b16 %v5257, %v5256
    %v5516 = vpack.c.b16 %v5259, %v5258
    %v5517 = vpack.c.b16 %v5261, %v5260
    %5774 = vmatprep.subr.bf16.mxu0 0
    %5775 = vmatpush1.bf16.msra.mxu0 %v5269
    %5776 = vmatprep.subr.bf16.mxu0 0
    %5777 = vmatpush1.bf16.msra.mxu0 %v5268
    %5778 = vmatprep.subr.bf16.mxu0 0
    %5779 = vmatpush1.bf16.msra.mxu0 %v5267
    %5780 = vmatprep.subr.bf16.mxu0 0
    %5781 = vmatpush1.bf16.msra.mxu0 %v5266
    %5782 = vmatprep.subr.bf16.mxu0 0
    %5783 = vmatpush1.bf16.msra.mxu0 %v5265
    %5784 = vmatprep.subr.bf16.mxu0 0
    %5785 = vmatpush1.bf16.msra.mxu0 %v5264
    %5786 = vmatprep.subr.bf16.mxu0 0
    %5787 = vmatpush1.bf16.msra.mxu0 %v5263
    %5788 = vmatprep.subr.bf16.mxu0 0
    %5789 = vmatpush1.bf16.msra.mxu0 %v5262
    %5790 = vmatprep.subr.bf16.mxu0 0
    %5791 = vmatpush2.bf16.msra.mxu0 %v5277
    %5792 = vmatprep.subr.bf16.mxu0 0
    %5793 = vmatpush2.bf16.msra.mxu0 %v5276
    %5794 = vmatprep.subr.bf16.mxu0 0
    %5795 = vmatpush2.bf16.msra.mxu0 %v5275
    %5796 = vmatprep.subr.bf16.mxu0 0
    %5797 = vmatpush2.bf16.msra.mxu0 %v5274
    %5798 = vmatprep.subr.bf16.mxu0 0
    %5799 = vmatpush2.bf16.msra.mxu0 %v5273
    %5800 = vmatprep.subr.bf16.mxu0 0
    %5801 = vmatpush2.bf16.msra.mxu0 %v5272
    %5802 = vmatprep.subr.bf16.mxu0 0
    %5803 = vmatpush2.bf16.msra.mxu0 %v5271
    %5804 = vmatprep.subr.bf16.mxu0 0
    %5805 = vmatpush2.bf16.msra.mxu0 %v5270
    %5806 = vmatprep.mubr.bf16.mxu0 %v3559
    %5807 = vmatmul.mubr.bf16.gmra.mxu0 %v3534
    %v5808 = vpop.f32.mrf.mxu0
    %v5809 = vadd.f32 %v4236, %v5808
    %v5810 = vpop.f32.mrf.mxu0
    %v5811 = vpop.f32.mrf.mxu0
    %v5812 = vpop.f32.mrf.mxu0
    %5813 = vdwg.mxu0
    %5814 = vmatprep.subr.bf16.mxu0 0
    %5815 = vmatpush1.bf16.msra.mxu0 %v5285
    %5816 = vmatprep.subr.bf16.mxu0 0
    %5817 = vmatpush1.bf16.msra.mxu0 %v5284
    %5818 = vmatprep.subr.bf16.mxu0 0
    %5819 = vmatpush1.bf16.msra.mxu0 %v5283
    %5820 = vmatprep.subr.bf16.mxu0 0
    %5821 = vmatpush1.bf16.msra.mxu0 %v5282
    %5822 = vmatprep.subr.bf16.mxu0 0
    %5823 = vmatpush1.bf16.msra.mxu0 %v5281
    %5824 = vmatprep.subr.bf16.mxu0 0
    %5825 = vmatpush1.bf16.msra.mxu0 %v5280
    %5826 = vmatprep.subr.bf16.mxu0 0
    %5827 = vmatpush1.bf16.msra.mxu0 %v5279
    %5828 = vmatprep.subr.bf16.mxu0 0
    %5829 = vmatpush1.bf16.msra.mxu0 %v5278
    %5830 = vmatprep.subr.bf16.mxu0 0
    %5831 = vmatpush2.bf16.msra.mxu0 %v5293
    %5832 = vmatprep.subr.bf16.mxu0 0
    %5833 = vmatpush2.bf16.msra.mxu0 %v5292
    %5834 = vmatprep.subr.bf16.mxu0 0
    %5835 = vmatpush2.bf16.msra.mxu0 %v5291
    %5836 = vmatprep.subr.bf16.mxu0 0
    %5837 = vmatpush2.bf16.msra.mxu0 %v5290
    %5838 = vmatprep.subr.bf16.mxu0 0
    %5839 = vmatpush2.bf16.msra.mxu0 %v5289
    %5840 = vmatprep.subr.bf16.mxu0 0
    %5841 = vmatpush2.bf16.msra.mxu0 %v5288
    %5842 = vmatprep.subr.bf16.mxu0 0
    %5843 = vmatpush2.bf16.msra.mxu0 %v5287
    %5844 = vmatprep.subr.bf16.mxu0 0
    %5845 = vmatpush2.bf16.msra.mxu0 %v5286
    %5846 = vmatprep.mubr.bf16.mxu0 %v3567
    %5847 = vmatmul.mubr.bf16.gmra.mxu0 %v3542
    %v5848 = vpop.f32.mrf.mxu0
    %v5849 = vadd.f32 %v5809, %v5848
    %v5850 = vpop.f32.mrf.mxu0
    %v5851 = vpop.f32.mrf.mxu0
    %v5852 = vpop.f32.mrf.mxu0
    %5853 = vdwg.mxu0
    %5854 = vmatprep.subr.bf16.mxu0 0
    %5855 = vmatpush1.bf16.msra.mxu0 %v5301
    %5856 = vmatprep.subr.bf16.mxu0 0
    %5857 = vmatpush1.bf16.msra.mxu0 %v5300
    %5858 = vmatprep.subr.bf16.mxu0 0
    %5859 = vmatpush1.bf16.msra.mxu0 %v5299
    %5860 = vmatprep.subr.bf16.mxu0 0
    %5861 = vmatpush1.bf16.msra.mxu0 %v5298
    %5862 = vmatprep.subr.bf16.mxu0 0
    %5863 = vmatpush1.bf16.msra.mxu0 %v5297
    %5864 = vmatprep.subr.bf16.mxu0 0
    %5865 = vmatpush1.bf16.msra.mxu0 %v5296
    %5866 = vmatprep.subr.bf16.mxu0 0
    %5867 = vmatpush1.bf16.msra.mxu0 %v5295
    %5868 = vmatprep.subr.bf16.mxu0 0
    %5869 = vmatpush1.bf16.msra.mxu0 %v5294
    %5870 = vmatprep.subr.bf16.mxu0 0
    %5871 = vmatpush2.bf16.msra.mxu0 %v5309
    %5872 = vmatprep.subr.bf16.mxu0 0
    %5873 = vmatpush2.bf16.msra.mxu0 %v5308
    %5874 = vmatprep.subr.bf16.mxu0 0
    %5875 = vmatpush2.bf16.msra.mxu0 %v5307
    %5876 = vmatprep.subr.bf16.mxu0 0
    %5877 = vmatpush2.bf16.msra.mxu0 %v5306
    %5878 = vmatprep.subr.bf16.mxu0 0
    %5879 = vmatpush2.bf16.msra.mxu0 %v5305
    %5880 = vmatprep.subr.bf16.mxu0 0
    %5881 = vmatpush2.bf16.msra.mxu0 %v5304
    %5882 = vmatprep.subr.bf16.mxu0 0
    %5883 = vmatpush2.bf16.msra.mxu0 %v5303
    %5884 = vmatprep.subr.bf16.mxu0 0
    %5885 = vmatpush2.bf16.msra.mxu0 %v5302
    %5886 = vmatprep.mubr.bf16.mxu0 %v3566
    %5887 = vmatmul.mubr.bf16.gmra.mxu0 %v3541
    %v5888 = vpop.f32.mrf.mxu0
    %v5889 = vadd.f32 %v5849, %v5888
    %v5890 = vpop.f32.mrf.mxu0
    %v5891 = vpop.f32.mrf.mxu0
    %v5892 = vpop.f32.mrf.mxu0
    %5893 = vdwg.mxu0
    %5894 = vmatprep.subr.bf16.mxu0 0
    %5895 = vmatpush1.bf16.msra.mxu0 %v5317
    %5896 = vmatprep.subr.bf16.mxu0 0
    %5897 = vmatpush1.bf16.msra.mxu0 %v5316
    %5898 = vmatprep.subr.bf16.mxu0 0
    %5899 = vmatpush1.bf16.msra.mxu0 %v5315
    %5900 = vmatprep.subr.bf16.mxu0 0
    %5901 = vmatpush1.bf16.msra.mxu0 %v5314
    %5902 = vmatprep.subr.bf16.mxu0 0
    %5903 = vmatpush1.bf16.msra.mxu0 %v5313
    %5904 = vmatprep.subr.bf16.mxu0 0
    %5905 = vmatpush1.bf16.msra.mxu0 %v5312
    %5906 = vmatprep.subr.bf16.mxu0 0
    %5907 = vmatpush1.bf16.msra.mxu0 %v5311
    %5908 = vmatprep.subr.bf16.mxu0 0
    %5909 = vmatpush1.bf16.msra.mxu0 %v5310
    %5910 = vmatprep.subr.bf16.mxu0 0
    %5911 = vmatpush2.bf16.msra.mxu0 %v5325
    %5912 = vmatprep.subr.bf16.mxu0 0
    %5913 = vmatpush2.bf16.msra.mxu0 %v5324
    %5914 = vmatprep.subr.bf16.mxu0 0
    %5915 = vmatpush2.bf16.msra.mxu0 %v5323
    %5916 = vmatprep.subr.bf16.mxu0 0
    %5917 = vmatpush2.bf16.msra.mxu0 %v5322
    %5918 = vmatprep.subr.bf16.mxu0 0
    %5919 = vmatpush2.bf16.msra.mxu0 %v5321
    %5920 = vmatprep.subr.bf16.mxu0 0
    %5921 = vmatpush2.bf16.msra.mxu0 %v5320
    %5922 = vmatprep.subr.bf16.mxu0 0
    %5923 = vmatpush2.bf16.msra.mxu0 %v5319
    %5924 = vmatprep.subr.bf16.mxu0 0
    %5925 = vmatpush2.bf16.msra.mxu0 %v5318
    %5926 = vmatprep.mubr.bf16.mxu0 %v3568
    %5927 = vmatmul.mubr.bf16.gmra.mxu0 %v3543
    %v5928 = vpop.f32.mrf.mxu0
    %v5929 = vadd.f32 %v5889, %v5928
    %v5930 = vpop.f32.mrf.mxu0
    %v5931 = vpop.f32.mrf.mxu0
    %v5932 = vpop.f32.mrf.mxu0
    %5933 = vdwg.mxu0
    %5934 = vmatprep.subr.bf16.mxu0 0
    %5935 = vmatpush1.bf16.msra.mxu0 %v5333
    %5936 = vmatprep.subr.bf16.mxu0 0
    %5937 = vmatpush1.bf16.msra.mxu0 %v5332
    %5938 = vmatprep.subr.bf16.mxu0 0
    %5939 = vmatpush1.bf16.msra.mxu0 %v5331
    %5940 = vmatprep.subr.bf16.mxu0 0
    %5941 = vmatpush1.bf16.msra.mxu0 %v5330
    %5942 = vmatprep.subr.bf16.mxu0 0
    %5943 = vmatpush1.bf16.msra.mxu0 %v5329
    %5944 = vmatprep.subr.bf16.mxu0 0
    %5945 = vmatpush1.bf16.msra.mxu0 %v5328
    %5946 = vmatprep.subr.bf16.mxu0 0
    %5947 = vmatpush1.bf16.msra.mxu0 %v5327
    %5948 = vmatprep.subr.bf16.mxu0 0
    %5949 = vmatpush1.bf16.msra.mxu0 %v5326
    %5950 = vmatprep.subr.bf16.mxu0 0
    %5951 = vmatpush2.bf16.msra.mxu0 %v5341
    %5952 = vmatprep.subr.bf16.mxu0 0
    %5953 = vmatpush2.bf16.msra.mxu0 %v5340
    %5954 = vmatprep.subr.bf16.mxu0 0
    %5955 = vmatpush2.bf16.msra.mxu0 %v5339
    %5956 = vmatprep.subr.bf16.mxu0 0
    %5957 = vmatpush2.bf16.msra.mxu0 %v5338
    %5958 = vmatprep.subr.bf16.mxu0 0
    %5959 = vmatpush2.bf16.msra.mxu0 %v5337
    %5960 = vmatprep.subr.bf16.mxu0 0
    %5961 = vmatpush2.bf16.msra.mxu0 %v5336
    %5962 = vmatprep.subr.bf16.mxu0 0
    %5963 = vmatpush2.bf16.msra.mxu0 %v5335
    %5964 = vmatprep.subr.bf16.mxu0 0
    %5965 = vmatpush2.bf16.msra.mxu0 %v5334
    %5966 = vmatprep.mubr.bf16.mxu0 %v3609
    %5967 = vmatmul.mubr.bf16.gmra.mxu0 %v3584
    %v5968 = vpop.f32.mrf.mxu0
    %v5969 = vadd.f32 %v5929, %v5968
    %v5970 = vpop.f32.mrf.mxu0
    %v5971 = vpop.f32.mrf.mxu0
    %v5972 = vpop.f32.mrf.mxu0
    %5973 = vdwg.mxu0
    %5974 = vmatprep.subr.bf16.mxu0 0
    %5975 = vmatpush1.bf16.msra.mxu0 %v5349
    %5976 = vmatprep.subr.bf16.mxu0 0
    %5977 = vmatpush1.bf16.msra.mxu0 %v5348
    %5978 = vmatprep.subr.bf16.mxu0 0
    %5979 = vmatpush1.bf16.msra.mxu0 %v5347
    %5980 = vmatprep.subr.bf16.mxu0 0
    %5981 = vmatpush1.bf16.msra.mxu0 %v5346
    %5982 = vmatprep.subr.bf16.mxu0 0
    %5983 = vmatpush1.bf16.msra.mxu0 %v5345
    %5984 = vmatprep.subr.bf16.mxu0 0
    %5985 = vmatpush1.bf16.msra.mxu0 %v5344
    %5986 = vmatprep.subr.bf16.mxu0 0
    %5987 = vmatpush1.bf16.msra.mxu0 %v5343
    %5988 = vmatprep.subr.bf16.mxu0 0
    %5989 = vmatpush1.bf16.msra.mxu0 %v5342
    %5990 = vmatprep.subr.bf16.mxu0 0
    %5991 = vmatpush2.bf16.msra.mxu0 %v5357
    %5992 = vmatprep.subr.bf16.mxu0 0
    %5993 = vmatpush2.bf16.msra.mxu0 %v5356
    %5994 = vmatprep.subr.bf16.mxu0 0
    %5995 = vmatpush2.bf16.msra.mxu0 %v5355
    %5996 = vmatprep.subr.bf16.mxu0 0
    %5997 = vmatpush2.bf16.msra.mxu0 %v5354
    %5998 = vmatprep.subr.bf16.mxu0 0
    %5999 = vmatpush2.bf16.msra.mxu0 %v5353
    %6000 = vmatprep.subr.bf16.mxu0 0
    %6001 = vmatpush2.bf16.msra.mxu0 %v5352
    %6002 = vmatprep.subr.bf16.mxu0 0
    %6003 = vmatpush2.bf16.msra.mxu0 %v5351
    %6004 = vmatprep.subr.bf16.mxu0 0
    %6005 = vmatpush2.bf16.msra.mxu0 %v5350
    %6006 = vmatprep.mubr.bf16.mxu0 %v3617
    %6007 = vmatmul.mubr.bf16.gmra.mxu0 %v3592
    %v6008 = vpop.f32.mrf.mxu0
    %v6009 = vadd.f32 %v5969, %v6008
    %v6010 = vpop.f32.mrf.mxu0
    %v6011 = vpop.f32.mrf.mxu0
    %v6012 = vpop.f32.mrf.mxu0
    %6013 = vdwg.mxu0
    %6014 = vmatprep.subr.bf16.mxu0 0
    %6015 = vmatpush1.bf16.msra.mxu0 %v5365
    %6016 = vmatprep.subr.bf16.mxu0 0
    %6017 = vmatpush1.bf16.msra.mxu0 %v5364
    %6018 = vmatprep.subr.bf16.mxu0 0
    %6019 = vmatpush1.bf16.msra.mxu0 %v5363
    %6020 = vmatprep.subr.bf16.mxu0 0
    %6021 = vmatpush1.bf16.msra.mxu0 %v5362
    %6022 = vmatprep.subr.bf16.mxu0 0
    %6023 = vmatpush1.bf16.msra.mxu0 %v5361
    %6024 = vmatprep.subr.bf16.mxu0 0
    %6025 = vmatpush1.bf16.msra.mxu0 %v5360
    %6026 = vmatprep.subr.bf16.mxu0 0
    %6027 = vmatpush1.bf16.msra.mxu0 %v5359
    %6028 = vmatprep.subr.bf16.mxu0 0
    %6029 = vmatpush1.bf16.msra.mxu0 %v5358
    %6030 = vmatprep.subr.bf16.mxu0 0
    %6031 = vmatpush2.bf16.msra.mxu0 %v5373
    %6032 = vmatprep.subr.bf16.mxu0 0
    %6033 = vmatpush2.bf16.msra.mxu0 %v5372
    %6034 = vmatprep.subr.bf16.mxu0 0
    %6035 = vmatpush2.bf16.msra.mxu0 %v5371
    %6036 = vmatprep.subr.bf16.mxu0 0
    %6037 = vmatpush2.bf16.msra.mxu0 %v5370
    %6038 = vmatprep.subr.bf16.mxu0 0
    %6039 = vmatpush2.bf16.msra.mxu0 %v5369
    %6040 = vmatprep.subr.bf16.mxu0 0
    %6041 = vmatpush2.bf16.msra.mxu0 %v5368
    %6042 = vmatprep.subr.bf16.mxu0 0
    %6043 = vmatpush2.bf16.msra.mxu0 %v5367
    %6044 = vmatprep.subr.bf16.mxu0 0
    %6045 = vmatpush2.bf16.msra.mxu0 %v5366
    %6046 = vmatprep.mubr.bf16.mxu0 %v3616
    %6047 = vmatmul.mubr.bf16.gmra.mxu0 %v3591
    %v6048 = vpop.f32.mrf.mxu0
    %v6049 = vadd.f32 %v6009, %v6048
    %v6050 = vpop.f32.mrf.mxu0
    %v6051 = vpop.f32.mrf.mxu0
    %v6052 = vpop.f32.mrf.mxu0
    %6053 = vdwg.mxu0
    %6054 = vmatprep.subr.bf16.mxu0 0
    %6055 = vmatpush1.bf16.msra.mxu0 %v5381
    %6056 = vmatprep.subr.bf16.mxu0 0
    %6057 = vmatpush1.bf16.msra.mxu0 %v5380
    %6058 = vmatprep.subr.bf16.mxu0 0
    %6059 = vmatpush1.bf16.msra.mxu0 %v5379
    %6060 = vmatprep.subr.bf16.mxu0 0
    %6061 = vmatpush1.bf16.msra.mxu0 %v5378
    %6062 = vmatprep.subr.bf16.mxu0 0
    %6063 = vmatpush1.bf16.msra.mxu0 %v5377
    %6064 = vmatprep.subr.bf16.mxu0 0
    %6065 = vmatpush1.bf16.msra.mxu0 %v5376
    %6066 = vmatprep.subr.bf16.mxu0 0
    %6067 = vmatpush1.bf16.msra.mxu0 %v5375
    %6068 = vmatprep.subr.bf16.mxu0 0
    %6069 = vmatpush1.bf16.msra.mxu0 %v5374
    %6070 = vmatprep.subr.bf16.mxu0 0
    %6071 = vmatpush2.bf16.msra.mxu0 %v5389
    %6072 = vmatprep.subr.bf16.mxu0 0
    %6073 = vmatpush2.bf16.msra.mxu0 %v5388
    %6074 = vmatprep.subr.bf16.mxu0 0
    %6075 = vmatpush2.bf16.msra.mxu0 %v5387
    %6076 = vmatprep.subr.bf16.mxu0 0
    %6077 = vmatpush2.bf16.msra.mxu0 %v5386
    %6078 = vmatprep.subr.bf16.mxu0 0
    %6079 = vmatpush2.bf16.msra.mxu0 %v5385
    %6080 = vmatprep.subr.bf16.mxu0 0
    %6081 = vmatpush2.bf16.msra.mxu0 %v5384
    %6082 = vmatprep.subr.bf16.mxu0 0
    %6083 = vmatpush2.bf16.msra.mxu0 %v5383
    %6084 = vmatprep.subr.bf16.mxu0 0
    %6085 = vmatpush2.bf16.msra.mxu0 %v5382
    %6086 = vmatprep.mubr.bf16.mxu0 %v3618
    %6087 = vmatmul.mubr.bf16.gmra.mxu0 %v3593
    %v6088 = vpop.f32.mrf.mxu0
    %v6089 = vadd.f32 %v6049, %v6088
    %v6090 = vpop.f32.mrf.mxu0
    %v6091 = vpop.f32.mrf.mxu0
    %v6092 = vpop.f32.mrf.mxu0
    %6093 = vdwg.mxu0
    %6094 = vmatprep.subr.bf16.mxu0 0
    %6095 = vmatpush1.bf16.msra.mxu0 %v5397
    %6096 = vmatprep.subr.bf16.mxu0 0
    %6097 = vmatpush1.bf16.msra.mxu0 %v5396
    %6098 = vmatprep.subr.bf16.mxu0 0
    %6099 = vmatpush1.bf16.msra.mxu0 %v5395
    %6100 = vmatprep.subr.bf16.mxu0 0
    %6101 = vmatpush1.bf16.msra.mxu0 %v5394
    %6102 = vmatprep.subr.bf16.mxu0 0
    %6103 = vmatpush1.bf16.msra.mxu0 %v5393
    %6104 = vmatprep.subr.bf16.mxu0 0
    %6105 = vmatpush1.bf16.msra.mxu0 %v5392
    %6106 = vmatprep.subr.bf16.mxu0 0
    %6107 = vmatpush1.bf16.msra.mxu0 %v5391
    %6108 = vmatprep.subr.bf16.mxu0 0
    %6109 = vmatpush1.bf16.msra.mxu0 %v5390
    %6110 = vmatprep.subr.bf16.mxu0 0
    %6111 = vmatpush2.bf16.msra.mxu0 %v5405
    %6112 = vmatprep.subr.bf16.mxu0 0
    %6113 = vmatpush2.bf16.msra.mxu0 %v5404
    %6114 = vmatprep.subr.bf16.mxu0 0
    %6115 = vmatpush2.bf16.msra.mxu0 %v5403
    %6116 = vmatprep.subr.bf16.mxu0 0
    %6117 = vmatpush2.bf16.msra.mxu0 %v5402
    %6118 = vmatprep.subr.bf16.mxu0 0
    %6119 = vmatpush2.bf16.msra.mxu0 %v5401
    %6120 = vmatprep.subr.bf16.mxu0 0
    %6121 = vmatpush2.bf16.msra.mxu0 %v5400
    %6122 = vmatprep.subr.bf16.mxu0 0
    %6123 = vmatpush2.bf16.msra.mxu0 %v5399
    %6124 = vmatprep.subr.bf16.mxu0 0
    %6125 = vmatpush2.bf16.msra.mxu0 %v5398
    %6126 = vmatprep.mubr.bf16.mxu0 %v3659
    %6127 = vmatmul.mubr.bf16.gmra.mxu0 %v3634
    %v6128 = vpop.f32.mrf.mxu0
    %v6129 = vadd.f32 %v6089, %v6128
    %v6130 = vpop.f32.mrf.mxu0
    %v6131 = vpop.f32.mrf.mxu0
    %v6132 = vpop.f32.mrf.mxu0
    %6133 = vdwg.mxu0
    %6134 = vmatprep.subr.bf16.mxu0 0
    %6135 = vmatpush1.bf16.msra.mxu0 %v5413
    %6136 = vmatprep.subr.bf16.mxu0 0
    %6137 = vmatpush1.bf16.msra.mxu0 %v5412
    %6138 = vmatprep.subr.bf16.mxu0 0
    %6139 = vmatpush1.bf16.msra.mxu0 %v5411
    %6140 = vmatprep.subr.bf16.mxu0 0
    %6141 = vmatpush1.bf16.msra.mxu0 %v5410
    %6142 = vmatprep.subr.bf16.mxu0 0
    %6143 = vmatpush1.bf16.msra.mxu0 %v5409
    %6144 = vmatprep.subr.bf16.mxu0 0
    %6145 = vmatpush1.bf16.msra.mxu0 %v5408
    %6146 = vmatprep.subr.bf16.mxu0 0
    %6147 = vmatpush1.bf16.msra.mxu0 %v5407
    %6148 = vmatprep.subr.bf16.mxu0 0
    %6149 = vmatpush1.bf16.msra.mxu0 %v5406
    %6150 = vmatprep.subr.bf16.mxu0 0
    %6151 = vmatpush2.bf16.msra.mxu0 %v5421
    %6152 = vmatprep.subr.bf16.mxu0 0
    %6153 = vmatpush2.bf16.msra.mxu0 %v5420
    %6154 = vmatprep.subr.bf16.mxu0 0
    %6155 = vmatpush2.bf16.msra.mxu0 %v5419
    %6156 = vmatprep.subr.bf16.mxu0 0
    %6157 = vmatpush2.bf16.msra.mxu0 %v5418
    %6158 = vmatprep.subr.bf16.mxu0 0
    %6159 = vmatpush2.bf16.msra.mxu0 %v5417
    %6160 = vmatprep.subr.bf16.mxu0 0
    %6161 = vmatpush2.bf16.msra.mxu0 %v5416
    %6162 = vmatprep.subr.bf16.mxu0 0
    %6163 = vmatpush2.bf16.msra.mxu0 %v5415
    %6164 = vmatprep.subr.bf16.mxu0 0
    %6165 = vmatpush2.bf16.msra.mxu0 %v5414
    %6166 = vmatprep.mubr.bf16.mxu0 %v3667
    %6167 = vmatmul.mubr.bf16.gmra.mxu0 %v3642
    %v6168 = vpop.f32.mrf.mxu0
    %v6169 = vadd.f32 %v6129, %v6168
    %v6170 = vpop.f32.mrf.mxu0
    %v6171 = vpop.f32.mrf.mxu0
    %v6172 = vpop.f32.mrf.mxu0
    %6173 = vdwg.mxu0
    %6174 = vmatprep.subr.bf16.mxu0 0
    %6175 = vmatpush1.bf16.msra.mxu0 %v5429
    %6176 = vmatprep.subr.bf16.mxu0 0
    %6177 = vmatpush1.bf16.msra.mxu0 %v5428
    %6178 = vmatprep.subr.bf16.mxu0 0
    %6179 = vmatpush1.bf16.msra.mxu0 %v5427
    %6180 = vmatprep.subr.bf16.mxu0 0
    %6181 = vmatpush1.bf16.msra.mxu0 %v5426
    %6182 = vmatprep.subr.bf16.mxu0 0
    %6183 = vmatpush1.bf16.msra.mxu0 %v5425
    %6184 = vmatprep.subr.bf16.mxu0 0
    %6185 = vmatpush1.bf16.msra.mxu0 %v5424
    %6186 = vmatprep.subr.bf16.mxu0 0
    %6187 = vmatpush1.bf16.msra.mxu0 %v5423
    %6188 = vmatprep.subr.bf16.mxu0 0
    %6189 = vmatpush1.bf16.msra.mxu0 %v5422
    %6190 = vmatprep.subr.bf16.mxu0 0
    %6191 = vmatpush2.bf16.msra.mxu0 %v5437
    %6192 = vmatprep.subr.bf16.mxu0 0
    %6193 = vmatpush2.bf16.msra.mxu0 %v5436
    %6194 = vmatprep.subr.bf16.mxu0 0
    %6195 = vmatpush2.bf16.msra.mxu0 %v5435
    %6196 = vmatprep.subr.bf16.mxu0 0
    %6197 = vmatpush2.bf16.msra.mxu0 %v5434
    %6198 = vmatprep.subr.bf16.mxu0 0
    %6199 = vmatpush2.bf16.msra.mxu0 %v5433
    %6200 = vmatprep.subr.bf16.mxu0 0
    %6201 = vmatpush2.bf16.msra.mxu0 %v5432
    %6202 = vmatprep.subr.bf16.mxu0 0
    %6203 = vmatpush2.bf16.msra.mxu0 %v5431
    %6204 = vmatprep.subr.bf16.mxu0 0
    %6205 = vmatpush2.bf16.msra.mxu0 %v5430
    %6206 = vmatprep.mubr.bf16.mxu0 %v3666
    %6207 = vmatmul.mubr.bf16.gmra.mxu0 %v3641
    %v6208 = vpop.f32.mrf.mxu0
    %v6209 = vadd.f32 %v6169, %v6208
    %v6210 = vpop.f32.mrf.mxu0
    %v6211 = vpop.f32.mrf.mxu0
    %v6212 = vpop.f32.mrf.mxu0
    %6213 = vdwg.mxu0
    %6214 = vmatprep.subr.bf16.mxu0 0
    %6215 = vmatpush1.bf16.msra.mxu0 %v5445
    %6216 = vmatprep.subr.bf16.mxu0 0
    %6217 = vmatpush1.bf16.msra.mxu0 %v5444
    %6218 = vmatprep.subr.bf16.mxu0 0
    %6219 = vmatpush1.bf16.msra.mxu0 %v5443
    %6220 = vmatprep.subr.bf16.mxu0 0
    %6221 = vmatpush1.bf16.msra.mxu0 %v5442
    %6222 = vmatprep.subr.bf16.mxu0 0
    %6223 = vmatpush1.bf16.msra.mxu0 %v5441
    %6224 = vmatprep.subr.bf16.mxu0 0
    %6225 = vmatpush1.bf16.msra.mxu0 %v5440
    %6226 = vmatprep.subr.bf16.mxu0 0
    %6227 = vmatpush1.bf16.msra.mxu0 %v5439
    %6228 = vmatprep.subr.bf16.mxu0 0
    %6229 = vmatpush1.bf16.msra.mxu0 %v5438
    %6230 = vmatprep.subr.bf16.mxu0 0
    %6231 = vmatpush2.bf16.msra.mxu0 %v5453
    %6232 = vmatprep.subr.bf16.mxu0 0
    %6233 = vmatpush2.bf16.msra.mxu0 %v5452
    %6234 = vmatprep.subr.bf16.mxu0 0
    %6235 = vmatpush2.bf16.msra.mxu0 %v5451
    %6236 = vmatprep.subr.bf16.mxu0 0
    %6237 = vmatpush2.bf16.msra.mxu0 %v5450
    %6238 = vmatprep.subr.bf16.mxu0 0
    %6239 = vmatpush2.bf16.msra.mxu0 %v5449
    %6240 = vmatprep.subr.bf16.mxu0 0
    %6241 = vmatpush2.bf16.msra.mxu0 %v5448
    %6242 = vmatprep.subr.bf16.mxu0 0
    %6243 = vmatpush2.bf16.msra.mxu0 %v5447
    %6244 = vmatprep.subr.bf16.mxu0 0
    %6245 = vmatpush2.bf16.msra.mxu0 %v5446
    %6246 = vmatprep.mubr.bf16.mxu0 %v3668
    %6247 = vmatmul.mubr.bf16.gmra.mxu0 %v3643
    %v6248 = vpop.f32.mrf.mxu0
    %v6249 = vadd.f32 %v6209, %v6248
    %v6250 = vpop.f32.mrf.mxu0
    %v6251 = vpop.f32.mrf.mxu0
    %v6252 = vpop.f32.mrf.mxu0
    %6253 = vdwg.mxu0
    %6254 = vmatprep.subr.bf16.mxu0 0
    %6255 = vmatpush1.bf16.msra.mxu0 %v5461
    %6256 = vmatprep.subr.bf16.mxu0 0
    %6257 = vmatpush1.bf16.msra.mxu0 %v5460
    %6258 = vmatprep.subr.bf16.mxu0 0
    %6259 = vmatpush1.bf16.msra.mxu0 %v5459
    %6260 = vmatprep.subr.bf16.mxu0 0
    %6261 = vmatpush1.bf16.msra.mxu0 %v5458
    %6262 = vmatprep.subr.bf16.mxu0 0
    %6263 = vmatpush1.bf16.msra.mxu0 %v5457
    %6264 = vmatprep.subr.bf16.mxu0 0
    %6265 = vmatpush1.bf16.msra.mxu0 %v5456
    %6266 = vmatprep.subr.bf16.mxu0 0
    %6267 = vmatpush1.bf16.msra.mxu0 %v5455
    %6268 = vmatprep.subr.bf16.mxu0 0
    %6269 = vmatpush1.bf16.msra.mxu0 %v5454
    %6270 = vmatprep.subr.bf16.mxu0 0
    %6271 = vmatpush2.bf16.msra.mxu0 %v5469
    %6272 = vmatprep.subr.bf16.mxu0 0
    %6273 = vmatpush2.bf16.msra.mxu0 %v5468
    %6274 = vmatprep.subr.bf16.mxu0 0
    %6275 = vmatpush2.bf16.msra.mxu0 %v5467
    %6276 = vmatprep.subr.bf16.mxu0 0
    %6277 = vmatpush2.bf16.msra.mxu0 %v5466
    %6278 = vmatprep.subr.bf16.mxu0 0
    %6279 = vmatpush2.bf16.msra.mxu0 %v5465
    %6280 = vmatprep.subr.bf16.mxu0 0
    %6281 = vmatpush2.bf16.msra.mxu0 %v5464
    %6282 = vmatprep.subr.bf16.mxu0 0
    %6283 = vmatpush2.bf16.msra.mxu0 %v5463
    %6284 = vmatprep.subr.bf16.mxu0 0
    %6285 = vmatpush2.bf16.msra.mxu0 %v5462
    %6286 = vmatprep.mubr.bf16.mxu0 %v3709
    %6287 = vmatmul.mubr.bf16.gmra.mxu0 %v3684
    %v6288 = vpop.f32.mrf.mxu0
    %v6289 = vadd.f32 %v6249, %v6288
    %v6290 = vpop.f32.mrf.mxu0
    %v6291 = vpop.f32.mrf.mxu0
    %v6292 = vpop.f32.mrf.mxu0
    %6293 = vdwg.mxu0
    %6294 = vmatprep.subr.bf16.mxu0 0
    %6295 = vmatpush1.bf16.msra.mxu0 %v5477
    %6296 = vmatprep.subr.bf16.mxu0 0
    %6297 = vmatpush1.bf16.msra.mxu0 %v5476
    %6298 = vmatprep.subr.bf16.mxu0 0
    %6299 = vmatpush1.bf16.msra.mxu0 %v5475
    %6300 = vmatprep.subr.bf16.mxu0 0
    %6301 = vmatpush1.bf16.msra.mxu0 %v5474
    %6302 = vmatprep.subr.bf16.mxu0 0
    %6303 = vmatpush1.bf16.msra.mxu0 %v5473
    %6304 = vmatprep.subr.bf16.mxu0 0
    %6305 = vmatpush1.bf16.msra.mxu0 %v5472
    %6306 = vmatprep.subr.bf16.mxu0 0
    %6307 = vmatpush1.bf16.msra.mxu0 %v5471
    %6308 = vmatprep.subr.bf16.mxu0 0
    %6309 = vmatpush1.bf16.msra.mxu0 %v5470
    %6310 = vmatprep.subr.bf16.mxu0 0
    %6311 = vmatpush2.bf16.msra.mxu0 %v5485
    %6312 = vmatprep.subr.bf16.mxu0 0
    %6313 = vmatpush2.bf16.msra.mxu0 %v5484
    %6314 = vmatprep.subr.bf16.mxu0 0
    %6315 = vmatpush2.bf16.msra.mxu0 %v5483
    %6316 = vmatprep.subr.bf16.mxu0 0
    %6317 = vmatpush2.bf16.msra.mxu0 %v5482
    %6318 = vmatprep.subr.bf16.mxu0 0
    %6319 = vmatpush2.bf16.msra.mxu0 %v5481
    %6320 = vmatprep.subr.bf16.mxu0 0
    %6321 = vmatpush2.bf16.msra.mxu0 %v5480
    %6322 = vmatprep.subr.bf16.mxu0 0
    %6323 = vmatpush2.bf16.msra.mxu0 %v5479
    %6324 = vmatprep.subr.bf16.mxu0 0
    %6325 = vmatpush2.bf16.msra.mxu0 %v5478
    %6326 = vmatprep.mubr.bf16.mxu0 %v3717
    %6327 = vmatmul.mubr.bf16.gmra.mxu0 %v3692
    %v6328 = vpop.f32.mrf.mxu0
    %v6329 = vadd.f32 %v6289, %v6328
    %v6330 = vpop.f32.mrf.mxu0
    %v6331 = vpop.f32.mrf.mxu0
    %v6332 = vpop.f32.mrf.mxu0
    %6333 = vdwg.mxu0
    %6334 = vmatprep.subr.bf16.mxu0 0
    %6335 = vmatpush1.bf16.msra.mxu0 %v5493
    %6336 = vmatprep.subr.bf16.mxu0 0
    %6337 = vmatpush1.bf16.msra.mxu0 %v5492
    %6338 = vmatprep.subr.bf16.mxu0 0
    %6339 = vmatpush1.bf16.msra.mxu0 %v5491
    %6340 = vmatprep.subr.bf16.mxu0 0
    %6341 = vmatpush1.bf16.msra.mxu0 %v5490
    %6342 = vmatprep.subr.bf16.mxu0 0
    %6343 = vmatpush1.bf16.msra.mxu0 %v5489
    %6344 = vmatprep.subr.bf16.mxu0 0
    %6345 = vmatpush1.bf16.msra.mxu0 %v5488
    %6346 = vmatprep.subr.bf16.mxu0 0
    %6347 = vmatpush1.bf16.msra.mxu0 %v5487
    %6348 = vmatprep.subr.bf16.mxu0 0
    %6349 = vmatpush1.bf16.msra.mxu0 %v5486
    %6350 = vmatprep.subr.bf16.mxu0 0
    %6351 = vmatpush2.bf16.msra.mxu0 %v5501
    %6352 = vmatprep.subr.bf16.mxu0 0
    %6353 = vmatpush2.bf16.msra.mxu0 %v5500
    %6354 = vmatprep.subr.bf16.mxu0 0
    %6355 = vmatpush2.bf16.msra.mxu0 %v5499
    %6356 = vmatprep.subr.bf16.mxu0 0
    %6357 = vmatpush2.bf16.msra.mxu0 %v5498
    %6358 = vmatprep.subr.bf16.mxu0 0
    %6359 = vmatpush2.bf16.msra.mxu0 %v5497
    %6360 = vmatprep.subr.bf16.mxu0 0
    %6361 = vmatpush2.bf16.msra.mxu0 %v5496
    %6362 = vmatprep.subr.bf16.mxu0 0
    %6363 = vmatpush2.bf16.msra.mxu0 %v5495
    %6364 = vmatprep.subr.bf16.mxu0 0
    %6365 = vmatpush2.bf16.msra.mxu0 %v5494
    %6366 = vmatprep.mubr.bf16.mxu0 %v3716
    %6367 = vmatmul.mubr.bf16.gmra.mxu0 %v3691
    %v6368 = vpop.f32.mrf.mxu0
    %v6369 = vadd.f32 %v6329, %v6368
    %v6370 = vpop.f32.mrf.mxu0
    %v6371 = vpop.f32.mrf.mxu0
    %v6372 = vpop.f32.mrf.mxu0
    %6373 = vdwg.mxu0
    %6374 = vmatprep.subr.bf16.mxu0 0
    %6375 = vmatpush1.bf16.msra.mxu0 %v5509
    %6376 = vmatprep.subr.bf16.mxu0 0
    %6377 = vmatpush1.bf16.msra.mxu0 %v5508
    %6378 = vmatprep.subr.bf16.mxu0 0
    %6379 = vmatpush1.bf16.msra.mxu0 %v5507
    %6380 = vmatprep.subr.bf16.mxu0 0
    %6381 = vmatpush1.bf16.msra.mxu0 %v5506
    %6382 = vmatprep.subr.bf16.mxu0 0
    %6383 = vmatpush1.bf16.msra.mxu0 %v5505
    %6384 = vmatprep.subr.bf16.mxu0 0
    %6385 = vmatpush1.bf16.msra.mxu0 %v5504
    %6386 = vmatprep.subr.bf16.mxu0 0
    %6387 = vmatpush1.bf16.msra.mxu0 %v5503
    %6388 = vmatprep.subr.bf16.mxu0 0
    %6389 = vmatpush1.bf16.msra.mxu0 %v5502
    %6390 = vmatprep.subr.bf16.mxu0 0
    %6391 = vmatpush2.bf16.msra.mxu0 %v5517
    %6392 = vmatprep.subr.bf16.mxu0 0
    %6393 = vmatpush2.bf16.msra.mxu0 %v5516
    %6394 = vmatprep.subr.bf16.mxu0 0
    %6395 = vmatpush2.bf16.msra.mxu0 %v5515
    %6396 = vmatprep.subr.bf16.mxu0 0
    %6397 = vmatpush2.bf16.msra.mxu0 %v5514
    %6398 = vmatprep.subr.bf16.mxu0 0
    %6399 = vmatpush2.bf16.msra.mxu0 %v5513
    %6400 = vmatprep.subr.bf16.mxu0 0
    %6401 = vmatpush2.bf16.msra.mxu0 %v5512
    %6402 = vmatprep.subr.bf16.mxu0 0
    %6403 = vmatpush2.bf16.msra.mxu0 %v5511
    %6404 = vmatprep.subr.bf16.mxu0 0
    %6405 = vmatpush2.bf16.msra.mxu0 %v5510
    %6406 = vmatprep.mubr.bf16.mxu0 %v3718
    %6407 = vmatmul.mubr.bf16.gmra.mxu0 %v3693
    %v6408 = vpop.f32.mrf.mxu0
    %v6409 = vadd.f32 %v6369, %v6408
    %v6410 = vpop.f32.mrf.mxu0
    %v6411 = vpop.f32.mrf.mxu0
    %v6412 = vpop.f32.mrf.mxu0
    %6413 = vdwg.mxu0
    %v6414 = vmax.f32 %v6409, 0.0
    %v6415 = vpack.c.bf16 %v6414, %v6414
    %v6416 = vld [vmem:[%s10] sm:$0xf]
    %v6417 = vld [vmem:[%s10 + $0x4] sm:$0xf]
    %v6418 = vld [vmem:[%s10 + $0x8] sm:$0xf]
    %v6419 = vld [vmem:[%s10 + $0xc] sm:$0xf]
    %v6420 = vld [vmem:[%s10 + $0x10] sm:$0xf]
    %v6421 = vld [vmem:[%s10 + $0x14] sm:$0xf]
    %v6422 = vld [vmem:[%s10 + $0x18] sm:$0xf]
    %v6423 = vld [vmem:[%s10 + $0x1c] sm:$0xf]
    %v6424 = vld [vmem:[%s11] sm:$0x1]
    %v6426 = vlaneseq
    %v6427 = vshrl.u32 %v6426, 7
    %v6428 = vsub.s32 0, %v6427
    %v6429 = vrot.slane %v6424, %v6428
    %v6439 = vunpack.c.l.b16 %v6416
    %v6440 = vunpack.c.l.b16 %v6417
    %v6441 = vunpack.c.l.b16 %v6418
    %v6442 = vunpack.c.l.b16 %v6419
    %v6443 = vunpack.c.l.b16 %v6420
    %v6444 = vunpack.c.l.b16 %v6421
    %v6445 = vunpack.c.l.b16 %v6422
    %v6446 = vunpack.c.l.b16 %v6423
    %v6447 = vpack.c.b16 %v6440, %v6439
    %v6448 = vpack.c.b16 %v6442, %v6441
    %v6449 = vpack.c.b16 %v6444, %v6443
    %v6450 = vpack.c.b16 %v6446, %v6445
    %vm6455 = vcmask 523264
    %v6457 = vsel %vm6455, %v6415, 0
    %6459 = vmatprep.subr.bf16.mxu0 0
    %6460 = vmatpush1.bf16.msra.mxu0 0
    %6461 = vmatprep.subr.bf16.mxu0 0
    %6462 = vmatpush1.bf16.msra.mxu0 0
    %6463 = vmatprep.subr.bf16.mxu0 0
    %6464 = vmatpush1.bf16.msra.mxu0 0
    %6465 = vmatprep.subr.bf16.mxu0 0
    %6466 = vmatpush1.bf16.msra.mxu0 0
    %6467 = vmatprep.subr.bf16.mxu0 0
    %6468 = vmatpush1.bf16.msra.mxu0 %v6450
    %6469 = vmatprep.subr.bf16.mxu0 0
    %6470 = vmatpush1.bf16.msra.mxu0 %v6449
    %6471 = vmatprep.subr.bf16.mxu0 0
    %6472 = vmatpush1.bf16.msra.mxu0 %v6448
    %6473 = vmatprep.subr.bf16.mxu0 0
    %6474 = vmatpush1.bf16.msra.mxu0 %v6447
    %6475 = vmatprep.subr.bf16.mxu0 0
    %6476 = vmatpush2.bf16.msra.mxu0 0
    %6477 = vmatprep.subr.bf16.mxu0 0
    %6478 = vmatpush2.bf16.msra.mxu0 0
    %6479 = vmatprep.subr.bf16.mxu0 0
    %6480 = vmatpush2.bf16.msra.mxu0 0
    %6481 = vmatprep.subr.bf16.mxu0 0
    %6482 = vmatpush2.bf16.msra.mxu0 0
    %6483 = vmatprep.subr.bf16.mxu0 0
    %6484 = vmatpush2.bf16.msra.mxu0 0
    %6485 = vmatprep.subr.bf16.mxu0 0
    %6486 = vmatpush2.bf16.msra.mxu0 0
    %6487 = vmatprep.subr.bf16.mxu0 0
    %6488 = vmatpush2.bf16.msra.mxu0 0
    %6489 = vmatprep.subr.bf16.mxu0 0
    %6490 = vmatpush2.bf16.msra.mxu0 0
    %6491 = vmatprep.mubr.bf16.mxu0 0
    %6492 = vmatmul.mubr.bf16.gmra.mxu0 %v6457
    %v6493 = vpop.f32.mrf.mxu0
    %v6494 = vadd.f32 %v6429, %v6493
    %v6495 = vpop.f32.mrf.mxu0
    %v6496 = vpop.f32.mrf.mxu0
    %v6497 = vpop.f32.mrf.mxu0
    %6498 = vdwg.mxu0
    %vm6499 = vcmask 9216
    %v6500 = vsel %vm6499, %v6494, -inf
    %6501 = vmax.xlane.f32.xlu0 %v6500
    %v6502 = vpop.xlane.xlu0 %6501
    %v6503 = vsub.f32 %v6494, %v6502
    %v6504 = vmul.f32 %v6503, 1.442695
    %v6505 = vpow.pop %v6504
    %v6506 = vsel %vm6499, %v6505, 0.0
    %6507 = vadd.xlane.f32.xlu0 %v6506
    %v6508 = vpop.xlane.xlu0 %6507
    %v6509 = vlog2.pop %v6508
    %v6510 = vmul.f32 %v6509, 0.6931472
    %v6511 = vsub.f32 %v6503, %v6510
    %6512 = vst.msk [vmem:[#allocation3] sm:$0x3] %vm6499, %v6511
    // Predicated region
    $region57: #{switchnet_forward.1} parent=1 // pred_check
      _
    $region58: #{switchnet_forward.1} parent=1 // pred_check_branch
      %6514 = sbr.rel (0) target = $region60
    $region59: #{switchnet_forward.1} parent=1 // pred_region
      %s6516 = ssub.s32 32, 32
      %6517 = vsyncadd [#allocation4], %s6516
      %s6519 = sshll.u32 [#allocation3], 4
      %s6520 = int_to_ptr.vmem [resolvable:$true] %s6519
      %6522 = dma.vmem_to_hbm [thread:$0]  %s6520, 32, %s12, [#allocation4]
    $region60: #{switchnet_forward.1} parent=1 // pred_fallthru
      _
    // Predicated region
    $region61: #{switchnet_forward.1} parent=1 // pred_check
      _
    $region62: #{switchnet_forward.1} parent=1 // pred_check_branch
      %6524 = sbr.rel (0) target = $region64
    $region63: #{switchnet_forward.1} parent=1 // pred_region
      %6525 = dma.done [#allocation4], 32
    $region64: #{switchnet_forward.1} parent=1 // pred_fallthru
      _
    %6526 = vsyncpa [#allocation4], 1

</llo_original>
